<compile_context>
chip_gen: v7x
topology: tpu7x:2x2x1
jax: 0.10.0
libtpu: 0.0.40
codegen_flags: <defaults>
</compile_context>

<pallas_src>
import functools
import jax
import jax.numpy as jnp
from jax.experimental import pallas as pl
from jax.experimental.pallas import tpu as pltpu


# ----------------------------- fused Pallas kernel ---------------------------

def _prelu(x, a):
    return jnp.maximum(x, 0.0) + a * jnp.minimum(x, 0.0)


def _build_fused_kernel(N, n_h, num_layers):
    """Builds the fused per-batch-element kernel (static N / n_h / num_layers)."""
    L = num_layers

    def kernel(*refs):
        it = iter(refs)
        alphas_ref = next(it)                 # SMEM (2L+6,) f32
        feat_ref = next(it)                   # (1, N, n_in)
        adj_ref = next(it)                    # (1, N, N)
        diff_ref = next(it)                   # (1, N, N)
        gnn1 = [(next(it), next(it)) for _ in range(L)]   # (w, b) per layer
        gnn2 = [(next(it), next(it)) for _ in range(L)]
        mlp1 = [next(it) for _ in range(8)]   # w1,b1,w2,b2,w3,b3,ws,bs
        mlp2 = [next(it) for _ in range(8)]
        lv1_ref = next(it)                    # (1, N, n_h)
        gv1_ref = next(it)                    # (1, 1, n_h)
        lv2_ref = next(it)                    # (1, N, n_h)
        gv2_ref = next(it)                    # (1, 1, n_h)

        feat = feat_ref[0]                    # (N, n_in)
        adj = adj_ref[0]                      # (N, N)
        diff = diff_ref[0]                    # (N, N)
        ones_row = jnp.ones((1, N), jnp.float32)   # readout via MXU, not XLU

        def gcn_tower(A, layers, alpha_base):
            h = feat
            sums = []
            for li, (w_ref, b_ref) in enumerate(layers):
                w = w_ref[...]                # (fin, fout)
                b = b_ref[...]                # (1, fout)
                a = alphas_ref[alpha_base + li]
                fin, fout = w.shape
                if fin < fout:
                    # (A @ h) @ W is cheaper when fin < fout (layer 0: 8 < 32)
                    o = jnp.dot(jnp.dot(A, h, preferred_element_type=jnp.float32),
                                w, preferred_element_type=jnp.float32)
                else:
                    o = jnp.dot(A, jnp.dot(h, w, preferred_element_type=jnp.float32),
                                preferred_element_type=jnp.float32)
                h = _prelu(o + b, a)
                sums.append(jnp.dot(ones_row, h,
                                    preferred_element_type=jnp.float32))  # (1, fout)
            return h, jnp.concatenate(sums, axis=-1)    # (N, n_h), (1, L*n_h)

        def mlp(x, prefs, alpha_base):
            w1, b1, w2, b2, w3, b3, ws, bs = prefs
            h = _prelu(jnp.dot(x, w1[...], preferred_element_type=jnp.float32)
                       + b1[...], alphas_ref[alpha_base + 0])
            h = _prelu(jnp.dot(h, w2[...], preferred_element_type=jnp.float32)
                       + b2[...], alphas_ref[alpha_base + 1])
            h = _prelu(jnp.dot(h, w3[...], preferred_element_type=jnp.float32)
                       + b3[...], alphas_ref[alpha_base + 2])
            return h + jnp.dot(x, ws[...], preferred_element_type=jnp.float32) + bs[...]

        h1, g1 = gcn_tower(adj, gnn1, 0)       # tower 1 (adj)
        h2, g2 = gcn_tower(diff, gnn2, L)      # tower 2 (diff)

        # Batch the two towers through the shared MLPs (mlp1 / mlp2 run once).
        lv = mlp(jnp.concatenate([h1, h2], axis=0), mlp1, 2 * L)       # (2N, n_h)
        gv = mlp(jnp.concatenate([g1, g2], axis=0), mlp2, 2 * L + 3)   # (2,  n_h)

        lv1_ref[0] = lv[:N]
        lv2_ref[0] = lv[N:]
        gv1_ref[0] = gv[0:1]
        gv2_ref[0] = gv[1:2]

    return kernel


# ----------------------------- model forward (one pallas_call) ---------------

def model_forward(params, adj, diff, feat, mask):
    del mask  # accepted but unused, mirroring the PyTorch reference
    B, N, n_in = feat.shape
    gnn1, gnn2 = params["gnn1"], params["gnn2"]
    L = len(gnn1)
    n_h = gnn1[0][0].shape[1]

    # Pack every PReLU alpha into one SMEM scalar array:
    #   [gnn1 layers | gnn2 layers | mlp1 a1..a3 | mlp2 a1..a3]
    alphas = jnp.concatenate(
        [a.reshape(1) for (_, _, a) in gnn1]
        + [a.reshape(1) for (_, _, a) in gnn2]
        + [params["mlp1"][k].reshape(1) for k in ("a1", "a2", "a3")]
        + [params["mlp2"][k].reshape(1) for k in ("a1", "a2", "a3")])

    args = [alphas, feat, adj, diff]
    in_specs = [
        pl.BlockSpec(memory_space=pltpu.MemorySpace.SMEM),      # alphas -> scalar path
        pl.BlockSpec((1, N, n_in), lambda i: (i, 0, 0)),
        pl.BlockSpec((1, N, N), lambda i: (i, 0, 0)),
        pl.BlockSpec((1, N, N), lambda i: (i, 0, 0)),
    ]

    def _add_weight(w):
        args.append(w)
        nd = w.ndim
        in_specs.append(pl.BlockSpec(w.shape, lambda i, _nd=nd: (0,) * _nd))

    for (w, b, _) in gnn1:
        _add_weight(w); _add_weight(b)
    for (w, b, _) in gnn2:
        _add_weight(w); _add_weight(b)
    for key in ("w1", "b1", "w2", "b2", "w3", "b3", "ws", "bs"):
        _add_weight(params["mlp1"][key])
    for key in ("w1", "b1", "w2", "b2", "w3", "b3", "ws", "bs"):
        _add_weight(params["mlp2"][key])

    out_shape = (
        jax.ShapeDtypeStruct((B, N, n_h), jnp.float32),   # lv1
        jax.ShapeDtypeStruct((B, 1, n_h), jnp.float32),   # gv1
        jax.ShapeDtypeStruct((B, N, n_h), jnp.float32),   # lv2
        jax.ShapeDtypeStruct((B, 1, n_h), jnp.float32),   # gv2
    )
    out_specs = (
        pl.BlockSpec((1, N, n_h), lambda i: (i, 0, 0)),
        pl.BlockSpec((1, 1, n_h), lambda i: (i, 0, 0)),
        pl.BlockSpec((1, N, n_h), lambda i: (i, 0, 0)),
        pl.BlockSpec((1, 1, n_h), lambda i: (i, 0, 0)),
    )

    lv1, gv1, lv2, gv2 = pl.pallas_call(
        _build_fused_kernel(N, n_h, L),
        out_shape=out_shape,
        grid=(B,),
        in_specs=in_specs,
        out_specs=out_specs,
        compiler_params=pltpu.CompilerParams(
            dimension_semantics=("parallel",)),
    )(*args)

    return lv1, gv1[:, 0, :], lv2, gv2[:, 0, :]


# ----------------------------- parameter init --------------------------------

def xavier_uniform(key, fan_in, fan_out):
    limit = (6.0 / (fan_in + fan_out)) ** 0.5
    return jax.random.uniform(key, (fan_in, fan_out), jnp.float32, -limit, limit)


def init_gcn_params(key, n_in, n_h, num_layers):
    layers = []
    dims = [n_in] + [n_h] * num_layers
    for i in range(num_layers):
        key, k = jax.random.split(key)
        w = xavier_uniform(k, dims[i], dims[i + 1])
        b = jnp.zeros((1, dims[i + 1]), jnp.float32)          # bias.data.fill_(0.0)
        alpha = jnp.full((1, 1), 0.25, jnp.float32)           # nn.PReLU() default
        layers.append((w, b, alpha))
    return layers, key


def init_mlp_params(key, in_ft, out_ft):
    p = {}
    key, k1, k2, k3, k4 = jax.random.split(key, 5)
    p["w1"] = xavier_uniform(k1, in_ft, out_ft)
    p["b1"] = jnp.zeros((1, out_ft), jnp.float32)
    p["a1"] = jnp.full((1, 1), 0.25, jnp.float32)
    p["w2"] = xavier_uniform(k2, out_ft, out_ft)
    p["b2"] = jnp.zeros((1, out_ft), jnp.float32)
    p["a2"] = jnp.full((1, 1), 0.25, jnp.float32)
    p["w3"] = xavier_uniform(k3, out_ft, out_ft)
    p["b3"] = jnp.zeros((1, out_ft), jnp.float32)
    p["a3"] = jnp.full((1, 1), 0.25, jnp.float32)
    p["ws"] = xavier_uniform(k4, in_ft, out_ft)
    p["bs"] = jnp.zeros((1, out_ft), jnp.float32)
    return p, key


def init_model_params(key, n_in, n_h, num_layers):
    params = {}
    params["mlp1"], key = init_mlp_params(key, 1 * n_h, n_h)
    params["mlp2"], key = init_mlp_params(key, num_layers * n_h, n_h)
    params["gnn1"], key = init_gcn_params(key, n_in, n_h, num_layers)
    params["gnn2"], key = init_gcn_params(key, n_in, n_h, num_layers)
    return params


# ----------------------------------- main -------------------------------------

if __name__ == "__main__":
    B, N, n_in, n_h, num_layers = 2, 16, 8, 32, 2

    key = jax.random.PRNGKey(0)
    kp, ka, kd, kf = jax.random.split(key, 4)

    params = init_model_params(kp, n_in, n_h, num_layers)
    adj = jax.random.uniform(ka, (B, N, N), jnp.float32)
    diff = jax.random.uniform(kd, (B, N, N), jnp.float32)
    feat = jax.random.normal(kf, (B, N, n_in), jnp.float32)
    mask = jnp.ones((B, N), jnp.float32)     # unused, mirrors PyTorch signature

    fwd = jax.jit(functools.partial(model_forward, params))
    lv1, gv1, lv2, gv2 = fwd(adj, diff, feat, mask)
    jax.block_until_ready((lv1, gv1, lv2, gv2))

    assert lv1.shape == (B, N, n_h)
    assert lv2.shape == (B, N, n_h)
    assert gv1.shape == (B, n_h)
    assert gv2.shape == (B, n_h)
    print("KERNEL_OK")
</pallas_src>

<mosaic_0001>
module attributes {stable_mosaic.version = 11 : i64} {
  func.func @kernel(%arg0: i32, %arg1: memref<10xf32, #tpu.memory_space<smem>>, %arg2: memref<1x16x8xf32, #tpu.memory_space<vmem>>, %arg3: memref<1x16x16xf32, #tpu.memory_space<vmem>>, %arg4: memref<1x16x16xf32, #tpu.memory_space<vmem>>, %arg5: memref<8x32xf32, #tpu.memory_space<vmem>>, %arg6: memref<1x32xf32, #tpu.memory_space<vmem>>, %arg7: memref<32x32xf32, #tpu.memory_space<vmem>>, %arg8: memref<1x32xf32, #tpu.memory_space<vmem>>, %arg9: memref<8x32xf32, #tpu.memory_space<vmem>>, %arg10: memref<1x32xf32, #tpu.memory_space<vmem>>, %arg11: memref<32x32xf32, #tpu.memory_space<vmem>>, %arg12: memref<1x32xf32, #tpu.memory_space<vmem>>, %arg13: memref<32x32xf32, #tpu.memory_space<vmem>>, %arg14: memref<1x32xf32, #tpu.memory_space<vmem>>, %arg15: memref<32x32xf32, #tpu.memory_space<vmem>>, %arg16: memref<1x32xf32, #tpu.memory_space<vmem>>, %arg17: memref<32x32xf32, #tpu.memory_space<vmem>>, %arg18: memref<1x32xf32, #tpu.memory_space<vmem>>, %arg19: memref<32x32xf32, #tpu.memory_space<vmem>>, %arg20: memref<1x32xf32, #tpu.memory_space<vmem>>, %arg21: memref<64x32xf32, #tpu.memory_space<vmem>>, %arg22: memref<1x32xf32, #tpu.memory_space<vmem>>, %arg23: memref<32x32xf32, #tpu.memory_space<vmem>>, %arg24: memref<1x32xf32, #tpu.memory_space<vmem>>, %arg25: memref<32x32xf32, #tpu.memory_space<vmem>>, %arg26: memref<1x32xf32, #tpu.memory_space<vmem>>, %arg27: memref<64x32xf32, #tpu.memory_space<vmem>>, %arg28: memref<1x32xf32, #tpu.memory_space<vmem>>, %arg29: memref<1x16x32xf32, #tpu.memory_space<vmem>>, %arg30: memref<1x1x32xf32, #tpu.memory_space<vmem>>, %arg31: memref<1x16x32xf32, #tpu.memory_space<vmem>>, %arg32: memref<1x1x32xf32, #tpu.memory_space<vmem>>) attributes {dimension_semantics = [#tpu.dimension_semantics<parallel>], iteration_bounds = array<i64: 2>, scalar_prefetch = 0 : i64, scratch_operands = 0 : i64, tpu.core_type = #tpu.core_type<tc>, window_params = [{transform_indices = @transform_0, window_bounds = array<i64: 10>}, {transform_indices = @transform_1, window_bounds = array<i64: 1, 16, 8>}, {transform_indices = @transform_2, window_bounds = array<i64: 1, 16, 16>}, {transform_indices = @transform_3, window_bounds = array<i64: 1, 16, 16>}, {pipeline_mode = #tpu.pipeline_mode<synchronous>, transform_indices = @transform_4, window_bounds = array<i64: 8, 32>}, {pipeline_mode = #tpu.pipeline_mode<synchronous>, transform_indices = @transform_5, window_bounds = array<i64: 1, 32>}, {pipeline_mode = #tpu.pipeline_mode<synchronous>, transform_indices = @transform_6, window_bounds = array<i64: 32, 32>}, {pipeline_mode = #tpu.pipeline_mode<synchronous>, transform_indices = @transform_7, window_bounds = array<i64: 1, 32>}, {pipeline_mode = #tpu.pipeline_mode<synchronous>, transform_indices = @transform_8, window_bounds = array<i64: 8, 32>}, {pipeline_mode = #tpu.pipeline_mode<synchronous>, transform_indices = @transform_9, window_bounds = array<i64: 1, 32>}, {pipeline_mode = #tpu.pipeline_mode<synchronous>, transform_indices = @transform_10, window_bounds = array<i64: 32, 32>}, {pipeline_mode = #tpu.pipeline_mode<synchronous>, transform_indices = @transform_11, window_bounds = array<i64: 1, 32>}, {pipeline_mode = #tpu.pipeline_mode<synchronous>, transform_indices = @transform_12, window_bounds = array<i64: 32, 32>}, {pipeline_mode = #tpu.pipeline_mode<synchronous>, transform_indices = @transform_13, window_bounds = array<i64: 1, 32>}, {pipeline_mode = #tpu.pipeline_mode<synchronous>, transform_indices = @transform_14, window_bounds = array<i64: 32, 32>}, {pipeline_mode = #tpu.pipeline_mode<synchronous>, transform_indices = @transform_15, window_bounds = array<i64: 1, 32>}, {pipeline_mode = #tpu.pipeline_mode<synchronous>, transform_indices = @transform_16, window_bounds = array<i64: 32, 32>}, {pipeline_mode = #tpu.pipeline_mode<synchronous>, transform_indices = @transform_17, window_bounds = array<i64: 1, 32>}, {pipeline_mode = #tpu.pipeline_mode<synchronous>, transform_indices = @transform_18, window_bounds = array<i64: 32, 32>}, {pipeline_mode = #tpu.pipeline_mode<synchronous>, transform_indices = @transform_19, window_bounds = array<i64: 1, 32>}, {pipeline_mode = #tpu.pipeline_mode<synchronous>, transform_indices = @transform_20, window_bounds = array<i64: 64, 32>}, {pipeline_mode = #tpu.pipeline_mode<synchronous>, transform_indices = @transform_21, window_bounds = array<i64: 1, 32>}, {pipeline_mode = #tpu.pipeline_mode<synchronous>, transform_indices = @transform_22, window_bounds = array<i64: 32, 32>}, {pipeline_mode = #tpu.pipeline_mode<synchronous>, transform_indices = @transform_23, window_bounds = array<i64: 1, 32>}, {pipeline_mode = #tpu.pipeline_mode<synchronous>, transform_indices = @transform_24, window_bounds = array<i64: 32, 32>}, {pipeline_mode = #tpu.pipeline_mode<synchronous>, transform_indices = @transform_25, window_bounds = array<i64: 1, 32>}, {pipeline_mode = #tpu.pipeline_mode<synchronous>, transform_indices = @transform_26, window_bounds = array<i64: 64, 32>}, {pipeline_mode = #tpu.pipeline_mode<synchronous>, transform_indices = @transform_27, window_bounds = array<i64: 1, 32>}, {transform_indices = @transform_28, window_bounds = array<i64: 1, 16, 32>}, {transform_indices = @transform_29, window_bounds = array<i64: 1, 1, 32>}, {transform_indices = @transform_30, window_bounds = array<i64: 1, 16, 32>}, {transform_indices = @transform_31, window_bounds = array<i64: 1, 1, 32>}]} {
    %c0 = arith.constant 0 : index
    %c0_0 = arith.constant 0 : index
    %c0_1 = arith.constant 0 : index
    %0 = vector.load %arg2[%c0, %c0_0, %c0_1] : memref<1x16x8xf32, #tpu.memory_space<vmem>>, vector<1x16x8xf32>
    %1 = vector.shape_cast %0 : vector<1x16x8xf32> to vector<16x8xf32>
    %c0_2 = arith.constant 0 : index
    %c0_3 = arith.constant 0 : index
    %c0_4 = arith.constant 0 : index
    %2 = vector.load %arg3[%c0_2, %c0_3, %c0_4] : memref<1x16x16xf32, #tpu.memory_space<vmem>>, vector<1x16x16xf32>
    %3 = vector.shape_cast %2 : vector<1x16x16xf32> to vector<16x16xf32>
    %c0_5 = arith.constant 0 : index
    %c0_6 = arith.constant 0 : index
    %c0_7 = arith.constant 0 : index
    %4 = vector.load %arg4[%c0_5, %c0_6, %c0_7] : memref<1x16x16xf32, #tpu.memory_space<vmem>>, vector<1x16x16xf32>
    %5 = vector.shape_cast %4 : vector<1x16x16xf32> to vector<16x16xf32>
    %cst = arith.constant 1.000000e+00 : f32
    %6 = vector.broadcast %cst : f32 to vector<1x16xf32>
    %c0_8 = arith.constant 0 : index
    %c0_9 = arith.constant 0 : index
    %7 = vector.load %arg5[%c0_8, %c0_9] : memref<8x32xf32, #tpu.memory_space<vmem>>, vector<8x32xf32>
    %c0_10 = arith.constant 0 : index
    %c0_11 = arith.constant 0 : index
    %8 = vector.load %arg6[%c0_10, %c0_11] : memref<1x32xf32, #tpu.memory_space<vmem>>, vector<1x32xf32>
    %c0_12 = arith.constant 0 : index
    %9 = memref.load %arg1[%c0_12] : memref<10xf32, #tpu.memory_space<smem>>
    %cst_13 = arith.constant dense<0.000000e+00> : vector<16x8xf32>
    %10 = tpu.matmul %3, %1, %cst_13 {dimension_numbers = #tpu.dot_dimension_numbers<[1], [0], [0], [1], [0, 0, 1, 1], [], []>} : vector<16x16xf32>, vector<16x8xf32>, vector<16x8xf32> -> vector<16x8xf32>
    %cst_14 = arith.constant dense<0.000000e+00> : vector<16x32xf32>
    %11 = tpu.matmul %10, %7, %cst_14 {dimension_numbers = #tpu.dot_dimension_numbers<[1], [0], [0], [1], [0, 0, 1, 1], [], []>} : vector<16x8xf32>, vector<8x32xf32>, vector<16x32xf32> -> vector<16x32xf32>
    %12 = vector.broadcast %8 : vector<1x32xf32> to vector<16x32xf32>
    %13 = arith.addf %11, %12 : vector<16x32xf32>
    %cst_15 = arith.constant 0.000000e+00 : f32
    %14 = vector.broadcast %cst_15 : f32 to vector<16x32xf32>
    %15 = arith.maximumf %13, %14 : vector<16x32xf32>
    %cst_16 = arith.constant 0.000000e+00 : f32
    %16 = vector.broadcast %cst_16 : f32 to vector<16x32xf32>
    %17 = arith.minimumf %13, %16 : vector<16x32xf32>
    %18 = vector.broadcast %9 : f32 to vector<16x32xf32>
    %19 = arith.mulf %18, %17 : vector<16x32xf32>
    %20 = arith.addf %15, %19 : vector<16x32xf32>
    %cst_17 = arith.constant dense<0.000000e+00> : vector<1x32xf32>
    %21 = tpu.matmul %6, %20, %cst_17 {dimension_numbers = #tpu.dot_dimension_numbers<[1], [0], [0], [1], [0, 0, 1, 1], [], []>} : vector<1x16xf32>, vector<16x32xf32>, vector<1x32xf32> -> vector<1x32xf32>
    %c0_18 = arith.constant 0 : index
    %c0_19 = arith.constant 0 : index
    %22 = vector.load %arg7[%c0_18, %c0_19] : memref<32x32xf32, #tpu.memory_space<vmem>>, vector<32x32xf32>
    %c0_20 = arith.constant 0 : index
    %c0_21 = arith.constant 0 : index
    %23 = vector.load %arg8[%c0_20, %c0_21] : memref<1x32xf32, #tpu.memory_space<vmem>>, vector<1x32xf32>
    %c1 = arith.constant 1 : index
    %24 = memref.load %arg1[%c1] : memref<10xf32, #tpu.memory_space<smem>>
    %cst_22 = arith.constant dense<0.000000e+00> : vector<16x32xf32>
    %25 = tpu.matmul %20, %22, %cst_22 {dimension_numbers = #tpu.dot_dimension_numbers<[1], [0], [0], [1], [0, 0, 1, 1], [], []>} : vector<16x32xf32>, vector<32x32xf32>, vector<16x32xf32> -> vector<16x32xf32>
    %cst_23 = arith.constant dense<0.000000e+00> : vector<16x32xf32>
    %26 = tpu.matmul %3, %25, %cst_23 {dimension_numbers = #tpu.dot_dimension_numbers<[1], [0], [0], [1], [0, 0, 1, 1], [], []>} : vector<16x16xf32>, vector<16x32xf32>, vector<16x32xf32> -> vector<16x32xf32>
    %27 = vector.broadcast %23 : vector<1x32xf32> to vector<16x32xf32>
    %28 = arith.addf %26, %27 : vector<16x32xf32>
    %cst_24 = arith.constant 0.000000e+00 : f32
    %29 = vector.broadcast %cst_24 : f32 to vector<16x32xf32>
    %30 = arith.maximumf %28, %29 : vector<16x32xf32>
    %cst_25 = arith.constant 0.000000e+00 : f32
    %31 = vector.broadcast %cst_25 : f32 to vector<16x32xf32>
    %32 = arith.minimumf %28, %31 : vector<16x32xf32>
    %33 = vector.broadcast %24 : f32 to vector<16x32xf32>
    %34 = arith.mulf %33, %32 : vector<16x32xf32>
    %35 = arith.addf %30, %34 : vector<16x32xf32>
    %cst_26 = arith.constant dense<0.000000e+00> : vector<1x32xf32>
    %36 = tpu.matmul %6, %35, %cst_26 {dimension_numbers = #tpu.dot_dimension_numbers<[1], [0], [0], [1], [0, 0, 1, 1], [], []>} : vector<1x16xf32>, vector<16x32xf32>, vector<1x32xf32> -> vector<1x32xf32>
    %37 = tpu.concatenate %21, %36 in 1 : vector<1x32xf32>, vector<1x32xf32> -> vector<1x64xf32>
    %c0_27 = arith.constant 0 : index
    %c0_28 = arith.constant 0 : index
    %38 = vector.load %arg9[%c0_27, %c0_28] : memref<8x32xf32, #tpu.memory_space<vmem>>, vector<8x32xf32>
    %c0_29 = arith.constant 0 : index
    %c0_30 = arith.constant 0 : index
    %39 = vector.load %arg10[%c0_29, %c0_30] : memref<1x32xf32, #tpu.memory_space<vmem>>, vector<1x32xf32>
    %c2 = arith.constant 2 : index
    %40 = memref.load %arg1[%c2] : memref<10xf32, #tpu.memory_space<smem>>
    %cst_31 = arith.constant dense<0.000000e+00> : vector<16x8xf32>
    %41 = tpu.matmul %5, %1, %cst_31 {dimension_numbers = #tpu.dot_dimension_numbers<[1], [0], [0], [1], [0, 0, 1, 1], [], []>} : vector<16x16xf32>, vector<16x8xf32>, vector<16x8xf32> -> vector<16x8xf32>
    %cst_32 = arith.constant dense<0.000000e+00> : vector<16x32xf32>
    %42 = tpu.matmul %41, %38, %cst_32 {dimension_numbers = #tpu.dot_dimension_numbers<[1], [0], [0], [1], [0, 0, 1, 1], [], []>} : vector<16x8xf32>, vector<8x32xf32>, vector<16x32xf32> -> vector<16x32xf32>
    %43 = vector.broadcast %39 : vector<1x32xf32> to vector<16x32xf32>
    %44 = arith.addf %42, %43 : vector<16x32xf32>
    %cst_33 = arith.constant 0.000000e+00 : f32
    %45 = vector.broadcast %cst_33 : f32 to vector<16x32xf32>
    %46 = arith.maximumf %44, %45 : vector<16x32xf32>
    %cst_34 = arith.constant 0.000000e+00 : f32
    %47 = vector.broadcast %cst_34 : f32 to vector<16x32xf32>
    %48 = arith.minimumf %44, %47 : vector<16x32xf32>
    %49 = vector.broadcast %40 : f32 to vector<16x32xf32>
    %50 = arith.mulf %49, %48 : vector<16x32xf32>
    %51 = arith.addf %46, %50 : vector<16x32xf32>
    %cst_35 = arith.constant dense<0.000000e+00> : vector<1x32xf32>
    %52 = tpu.matmul %6, %51, %cst_35 {dimension_numbers = #tpu.dot_dimension_numbers<[1], [0], [0], [1], [0, 0, 1, 1], [], []>} : vector<1x16xf32>, vector<16x32xf32>, vector<1x32xf32> -> vector<1x32xf32>
    %c0_36 = arith.constant 0 : index
    %c0_37 = arith.constant 0 : index
    %53 = vector.load %arg11[%c0_36, %c0_37] : memref<32x32xf32, #tpu.memory_space<vmem>>, vector<32x32xf32>
    %c0_38 = arith.constant 0 : index
    %c0_39 = arith.constant 0 : index
    %54 = vector.load %arg12[%c0_38, %c0_39] : memref<1x32xf32, #tpu.memory_space<vmem>>, vector<1x32xf32>
    %c3 = arith.constant 3 : index
    %55 = memref.load %arg1[%c3] : memref<10xf32, #tpu.memory_space<smem>>
    %cst_40 = arith.constant dense<0.000000e+00> : vector<16x32xf32>
    %56 = tpu.matmul %51, %53, %cst_40 {dimension_numbers = #tpu.dot_dimension_numbers<[1], [0], [0], [1], [0, 0, 1, 1], [], []>} : vector<16x32xf32>, vector<32x32xf32>, vector<16x32xf32> -> vector<16x32xf32>
    %cst_41 = arith.constant dense<0.000000e+00> : vector<16x32xf32>
    %57 = tpu.matmul %5, %56, %cst_41 {dimension_numbers = #tpu.dot_dimension_numbers<[1], [0], [0], [1], [0, 0, 1, 1], [], []>} : vector<16x16xf32>, vector<16x32xf32>, vector<16x32xf32> -> vector<16x32xf32>
    %58 = vector.broadcast %54 : vector<1x32xf32> to vector<16x32xf32>
    %59 = arith.addf %57, %58 : vector<16x32xf32>
    %cst_42 = arith.constant 0.000000e+00 : f32
    %60 = vector.broadcast %cst_42 : f32 to vector<16x32xf32>
    %61 = arith.maximumf %59, %60 : vector<16x32xf32>
    %cst_43 = arith.constant 0.000000e+00 : f32
    %62 = vector.broadcast %cst_43 : f32 to vector<16x32xf32>
    %63 = arith.minimumf %59, %62 : vector<16x32xf32>
    %64 = vector.broadcast %55 : f32 to vector<16x32xf32>
    %65 = arith.mulf %64, %63 : vector<16x32xf32>
    %66 = arith.addf %61, %65 : vector<16x32xf32>
    %cst_44 = arith.constant dense<0.000000e+00> : vector<1x32xf32>
    %67 = tpu.matmul %6, %66, %cst_44 {dimension_numbers = #tpu.dot_dimension_numbers<[1], [0], [0], [1], [0, 0, 1, 1], [], []>} : vector<1x16xf32>, vector<16x32xf32>, vector<1x32xf32> -> vector<1x32xf32>
    %68 = tpu.concatenate %52, %67 in 1 : vector<1x32xf32>, vector<1x32xf32> -> vector<1x64xf32>
    %69 = tpu.concatenate %35, %66 in 0 : vector<16x32xf32>, vector<16x32xf32> -> vector<32x32xf32>
    %c0_45 = arith.constant 0 : index
    %c0_46 = arith.constant 0 : index
    %70 = vector.load %arg13[%c0_45, %c0_46] : memref<32x32xf32, #tpu.memory_space<vmem>>, vector<32x32xf32>
    %cst_47 = arith.constant dense<0.000000e+00> : vector<32x32xf32>
    %71 = tpu.matmul %69, %70, %cst_47 {dimension_numbers = #tpu.dot_dimension_numbers<[1], [0], [0], [1], [0, 0, 1, 1], [], []>} : vector<32x32xf32>, vector<32x32xf32>, vector<32x32xf32> -> vector<32x32xf32>
    %c0_48 = arith.constant 0 : index
    %c0_49 = arith.constant 0 : index
    %72 = vector.load %arg14[%c0_48, %c0_49] : memref<1x32xf32, #tpu.memory_space<vmem>>, vector<1x32xf32>
    %73 = vector.broadcast %72 : vector<1x32xf32> to vector<32x32xf32>
    %74 = arith.addf %71, %73 : vector<32x32xf32>
    %c4 = arith.constant 4 : index
    %75 = memref.load %arg1[%c4] : memref<10xf32, #tpu.memory_space<smem>>
    %cst_50 = arith.constant 0.000000e+00 : f32
    %76 = vector.broadcast %cst_50 : f32 to vector<32x32xf32>
    %77 = arith.maximumf %74, %76 : vector<32x32xf32>
    %cst_51 = arith.constant 0.000000e+00 : f32
    %78 = vector.broadcast %cst_51 : f32 to vector<32x32xf32>
    %79 = arith.minimumf %74, %78 : vector<32x32xf32>
    %80 = vector.broadcast %75 : f32 to vector<32x32xf32>
    %81 = arith.mulf %80, %79 : vector<32x32xf32>
    %82 = arith.addf %77, %81 : vector<32x32xf32>
    %c0_52 = arith.constant 0 : index
    %c0_53 = arith.constant 0 : index
    %83 = vector.load %arg15[%c0_52, %c0_53] : memref<32x32xf32, #tpu.memory_space<vmem>>, vector<32x32xf32>
    %cst_54 = arith.constant dense<0.000000e+00> : vector<32x32xf32>
    %84 = tpu.matmul %82, %83, %cst_54 {dimension_numbers = #tpu.dot_dimension_numbers<[1], [0], [0], [1], [0, 0, 1, 1], [], []>} : vector<32x32xf32>, vector<32x32xf32>, vector<32x32xf32> -> vector<32x32xf32>
    %c0_55 = arith.constant 0 : index
    %c0_56 = arith.constant 0 : index
    %85 = vector.load %arg16[%c0_55, %c0_56] : memref<1x32xf32, #tpu.memory_space<vmem>>, vector<1x32xf32>
    %86 = vector.broadcast %85 : vector<1x32xf32> to vector<32x32xf32>
    %87 = arith.addf %84, %86 : vector<32x32xf32>
    %c5 = arith.constant 5 : index
    %88 = memref.load %arg1[%c5] : memref<10xf32, #tpu.memory_space<smem>>
    %cst_57 = arith.constant 0.000000e+00 : f32
    %89 = vector.broadcast %cst_57 : f32 to vector<32x32xf32>
    %90 = arith.maximumf %87, %89 : vector<32x32xf32>
    %cst_58 = arith.constant 0.000000e+00 : f32
    %91 = vector.broadcast %cst_58 : f32 to vector<32x32xf32>
    %92 = arith.minimumf %87, %91 : vector<32x32xf32>
    %93 = vector.broadcast %88 : f32 to vector<32x32xf32>
    %94 = arith.mulf %93, %92 : vector<32x32xf32>
    %95 = arith.addf %90, %94 : vector<32x32xf32>
    %c0_59 = arith.constant 0 : index
    %c0_60 = arith.constant 0 : index
    %96 = vector.load %arg17[%c0_59, %c0_60] : memref<32x32xf32, #tpu.memory_space<vmem>>, vector<32x32xf32>
    %cst_61 = arith.constant dense<0.000000e+00> : vector<32x32xf32>
    %97 = tpu.matmul %95, %96, %cst_61 {dimension_numbers = #tpu.dot_dimension_numbers<[1], [0], [0], [1], [0, 0, 1, 1], [], []>} : vector<32x32xf32>, vector<32x32xf32>, vector<32x32xf32> -> vector<32x32xf32>
    %c0_62 = arith.constant 0 : index
    %c0_63 = arith.constant 0 : index
    %98 = vector.load %arg18[%c0_62, %c0_63] : memref<1x32xf32, #tpu.memory_space<vmem>>, vector<1x32xf32>
    %99 = vector.broadcast %98 : vector<1x32xf32> to vector<32x32xf32>
    %100 = arith.addf %97, %99 : vector<32x32xf32>
    %c6 = arith.constant 6 : index
    %101 = memref.load %arg1[%c6] : memref<10xf32, #tpu.memory_space<smem>>
    %cst_64 = arith.constant 0.000000e+00 : f32
    %102 = vector.broadcast %cst_64 : f32 to vector<32x32xf32>
    %103 = arith.maximumf %100, %102 : vector<32x32xf32>
    %cst_65 = arith.constant 0.000000e+00 : f32
    %104 = vector.broadcast %cst_65 : f32 to vector<32x32xf32>
    %105 = arith.minimumf %100, %104 : vector<32x32xf32>
    %106 = vector.broadcast %101 : f32 to vector<32x32xf32>
    %107 = arith.mulf %106, %105 : vector<32x32xf32>
    %108 = arith.addf %103, %107 : vector<32x32xf32>
    %c0_66 = arith.constant 0 : index
    %c0_67 = arith.constant 0 : index
    %109 = vector.load %arg19[%c0_66, %c0_67] : memref<32x32xf32, #tpu.memory_space<vmem>>, vector<32x32xf32>
    %cst_68 = arith.constant dense<0.000000e+00> : vector<32x32xf32>
    %110 = tpu.matmul %69, %109, %cst_68 {dimension_numbers = #tpu.dot_dimension_numbers<[1], [0], [0], [1], [0, 0, 1, 1], [], []>} : vector<32x32xf32>, vector<32x32xf32>, vector<32x32xf32> -> vector<32x32xf32>
    %111 = arith.addf %108, %110 : vector<32x32xf32>
    %c0_69 = arith.constant 0 : index
    %c0_70 = arith.constant 0 : index
    %112 = vector.load %arg20[%c0_69, %c0_70] : memref<1x32xf32, #tpu.memory_space<vmem>>, vector<1x32xf32>
    %113 = vector.broadcast %112 : vector<1x32xf32> to vector<32x32xf32>
    %114 = arith.addf %111, %113 : vector<32x32xf32>
    %115 = tpu.concatenate %37, %68 in 0 : vector<1x64xf32>, vector<1x64xf32> -> vector<2x64xf32>
    %c0_71 = arith.constant 0 : index
    %c0_72 = arith.constant 0 : index
    %116 = vector.load %arg21[%c0_71, %c0_72] : memref<64x32xf32, #tpu.memory_space<vmem>>, vector<64x32xf32>
    %cst_73 = arith.constant dense<0.000000e+00> : vector<2x32xf32>
    %117 = tpu.matmul %115, %116, %cst_73 {dimension_numbers = #tpu.dot_dimension_numbers<[1], [0], [0], [1], [0, 0, 1, 1], [], []>} : vector<2x64xf32>, vector<64x32xf32>, vector<2x32xf32> -> vector<2x32xf32>
    %c0_74 = arith.constant 0 : index
    %c0_75 = arith.constant 0 : index
    %118 = vector.load %arg22[%c0_74, %c0_75] : memref<1x32xf32, #tpu.memory_space<vmem>>, vector<1x32xf32>
    %119 = vector.broadcast %118 : vector<1x32xf32> to vector<2x32xf32>
    %120 = arith.addf %117, %119 : vector<2x32xf32>
    %c7 = arith.constant 7 : index
    %121 = memref.load %arg1[%c7] : memref<10xf32, #tpu.memory_space<smem>>
    %cst_76 = arith.constant 0.000000e+00 : f32
    %122 = vector.broadcast %cst_76 : f32 to vector<2x32xf32>
    %123 = arith.maximumf %120, %122 : vector<2x32xf32>
    %cst_77 = arith.constant 0.000000e+00 : f32
    %124 = vector.broadcast %cst_77 : f32 to vector<2x32xf32>
    %125 = arith.minimumf %120, %124 : vector<2x32xf32>
    %126 = vector.broadcast %121 : f32 to vector<2x32xf32>
    %127 = arith.mulf %126, %125 : vector<2x32xf32>
    %128 = arith.addf %123, %127 : vector<2x32xf32>
    %c0_78 = arith.constant 0 : index
    %c0_79 = arith.constant 0 : index
    %129 = vector.load %arg23[%c0_78, %c0_79] : memref<32x32xf32, #tpu.memory_space<vmem>>, vector<32x32xf32>
    %cst_80 = arith.constant dense<0.000000e+00> : vector<2x32xf32>
    %130 = tpu.matmul %128, %129, %cst_80 {dimension_numbers = #tpu.dot_dimension_numbers<[1], [0], [0], [1], [0, 0, 1, 1], [], []>} : vector<2x32xf32>, vector<32x32xf32>, vector<2x32xf32> -> vector<2x32xf32>
    %c0_81 = arith.constant 0 : index
    %c0_82 = arith.constant 0 : index
    %131 = vector.load %arg24[%c0_81, %c0_82] : memref<1x32xf32, #tpu.memory_space<vmem>>, vector<1x32xf32>
    %132 = vector.broadcast %131 : vector<1x32xf32> to vector<2x32xf32>
    %133 = arith.addf %130, %132 : vector<2x32xf32>
    %c8 = arith.constant 8 : index
    %134 = memref.load %arg1[%c8] : memref<10xf32, #tpu.memory_space<smem>>
    %cst_83 = arith.constant 0.000000e+00 : f32
    %135 = vector.broadcast %cst_83 : f32 to vector<2x32xf32>
    %136 = arith.maximumf %133, %135 : vector<2x32xf32>
    %cst_84 = arith.constant 0.000000e+00 : f32
    %137 = vector.broadcast %cst_84 : f32 to vector<2x32xf32>
    %138 = arith.minimumf %133, %137 : vector<2x32xf32>
    %139 = vector.broadcast %134 : f32 to vector<2x32xf32>
    %140 = arith.mulf %139, %138 : vector<2x32xf32>
    %141 = arith.addf %136, %140 : vector<2x32xf32>
    %c0_85 = arith.constant 0 : index
    %c0_86 = arith.constant 0 : index
    %142 = vector.load %arg25[%c0_85, %c0_86] : memref<32x32xf32, #tpu.memory_space<vmem>>, vector<32x32xf32>
    %cst_87 = arith.constant dense<0.000000e+00> : vector<2x32xf32>
    %143 = tpu.matmul %141, %142, %cst_87 {dimension_numbers = #tpu.dot_dimension_numbers<[1], [0], [0], [1], [0, 0, 1, 1], [], []>} : vector<2x32xf32>, vector<32x32xf32>, vector<2x32xf32> -> vector<2x32xf32>
    %c0_88 = arith.constant 0 : index
    %c0_89 = arith.constant 0 : index
    %144 = vector.load %arg26[%c0_88, %c0_89] : memref<1x32xf32, #tpu.memory_space<vmem>>, vector<1x32xf32>
    %145 = vector.broadcast %144 : vector<1x32xf32> to vector<2x32xf32>
    %146 = arith.addf %143, %145 : vector<2x32xf32>
    %c9 = arith.constant 9 : index
    %147 = memref.load %arg1[%c9] : memref<10xf32, #tpu.memory_space<smem>>
    %cst_90 = arith.constant 0.000000e+00 : f32
    %148 = vector.broadcast %cst_90 : f32 to vector<2x32xf32>
    %149 = arith.maximumf %146, %148 : vector<2x32xf32>
    %cst_91 = arith.constant 0.000000e+00 : f32
    %150 = vector.broadcast %cst_91 : f32 to vector<2x32xf32>
    %151 = arith.minimumf %146, %150 : vector<2x32xf32>
    %152 = vector.broadcast %147 : f32 to vector<2x32xf32>
    %153 = arith.mulf %152, %151 : vector<2x32xf32>
    %154 = arith.addf %149, %153 : vector<2x32xf32>
    %c0_92 = arith.constant 0 : index
    %c0_93 = arith.constant 0 : index
    %155 = vector.load %arg27[%c0_92, %c0_93] : memref<64x32xf32, #tpu.memory_space<vmem>>, vector<64x32xf32>
    %cst_94 = arith.constant dense<0.000000e+00> : vector<2x32xf32>
    %156 = tpu.matmul %115, %155, %cst_94 {dimension_numbers = #tpu.dot_dimension_numbers<[1], [0], [0], [1], [0, 0, 1, 1], [], []>} : vector<2x64xf32>, vector<64x32xf32>, vector<2x32xf32> -> vector<2x32xf32>
    %157 = arith.addf %154, %156 : vector<2x32xf32>
    %c0_95 = arith.constant 0 : index
    %c0_96 = arith.constant 0 : index
    %158 = vector.load %arg28[%c0_95, %c0_96] : memref<1x32xf32, #tpu.memory_space<vmem>>, vector<1x32xf32>
    %159 = vector.broadcast %158 : vector<1x32xf32> to vector<2x32xf32>
    %160 = arith.addf %157, %159 : vector<2x32xf32>
    %161 = vector.extract_strided_slice %114 {offsets = [0, 0], sizes = [16, 32], strides = [1, 1]} : vector<32x32xf32> to vector<16x32xf32>
    %c0_97 = arith.constant 0 : index
    %c0_98 = arith.constant 0 : index
    %c0_99 = arith.constant 0 : index
    %162 = vector.load %arg29[%c0_97, %c0_98, %c0_99] : memref<1x16x32xf32, #tpu.memory_space<vmem>>, vector<1x16x32xf32>
    %163 = vector.shape_cast %162 : vector<1x16x32xf32> to vector<16x32xf32>
    %164 = vector.shape_cast %161 : vector<16x32xf32> to vector<1x16x32xf32>
    tpu.vector_store %arg29[%c0_97, %c0_98, %c0_99], %164 {strides = array<i32>} : memref<1x16x32xf32, #tpu.memory_space<vmem>>, vector<1x16x32xf32>,
    %165 = vector.extract_strided_slice %114 {offsets = [16, 0], sizes = [16, 32], strides = [1, 1]} : vector<32x32xf32> to vector<16x32xf32>
    %c0_100 = arith.constant 0 : index
    %c0_101 = arith.constant 0 : index
    %c0_102 = arith.constant 0 : index
    %166 = vector.load %arg31[%c0_100, %c0_101, %c0_102] : memref<1x16x32xf32, #tpu.memory_space<vmem>>, vector<1x16x32xf32>
    %167 = vector.shape_cast %166 : vector<1x16x32xf32> to vector<16x32xf32>
    %168 = vector.shape_cast %165 : vector<16x32xf32> to vector<1x16x32xf32>
    tpu.vector_store %arg31[%c0_100, %c0_101, %c0_102], %168 {strides = array<i32>} : memref<1x16x32xf32, #tpu.memory_space<vmem>>, vector<1x16x32xf32>,
    %169 = vector.extract_strided_slice %160 {offsets = [0, 0], sizes = [1, 32], strides = [1, 1]} : vector<2x32xf32> to vector<1x32xf32>
    %c0_103 = arith.constant 0 : index
    %c0_104 = arith.constant 0 : index
    %c0_105 = arith.constant 0 : index
    %170 = vector.load %arg30[%c0_103, %c0_104, %c0_105] : memref<1x1x32xf32, #tpu.memory_space<vmem>>, vector<1x1x32xf32>
    %171 = vector.shape_cast %170 : vector<1x1x32xf32> to vector<1x32xf32>
    %172 = vector.shape_cast %169 : vector<1x32xf32> to vector<1x1x32xf32>
    tpu.vector_store %arg30[%c0_103, %c0_104, %c0_105], %172 {strides = array<i32>} : memref<1x1x32xf32, #tpu.memory_space<vmem>>, vector<1x1x32xf32>,
    %173 = vector.extract_strided_slice %160 {offsets = [1, 0], sizes = [1, 32], strides = [1, 1]} : vector<2x32xf32> to vector<1x32xf32>
    %c0_106 = arith.constant 0 : index
    %c0_107 = arith.constant 0 : index
    %c0_108 = arith.constant 0 : index
    %174 = vector.load %arg32[%c0_106, %c0_107, %c0_108] : memref<1x1x32xf32, #tpu.memory_space<vmem>>, vector<1x1x32xf32>
    %175 = vector.shape_cast %174 : vector<1x1x32xf32> to vector<1x32xf32>
    %176 = vector.shape_cast %173 : vector<1x32xf32> to vector<1x1x32xf32>
    tpu.vector_store %arg32[%c0_106, %c0_107, %c0_108], %176 {strides = array<i32>} : memref<1x1x32xf32, #tpu.memory_space<vmem>>, vector<1x1x32xf32>,
    return
  }
  func.func @transform_0(%arg0: i32) -> i32 {
    %c0_i32 = arith.constant 0 : i32
    %c0_i32_0 = arith.constant 0 : i32
    return %c0_i32 : i32
  }
  func.func @transform_1(%arg0: i32) -> (i32, i32, i32) {
    %c0_i32 = arith.constant 0 : i32
    %c0_i32_0 = arith.constant 0 : i32
    %c0_i32_1 = arith.constant 0 : i32
    return %arg0, %c0_i32, %c0_i32_0 : i32, i32, i32
  }
  func.func @transform_2(%arg0: i32) -> (i32, i32, i32) {
    %c0_i32 = arith.constant 0 : i32
    %c0_i32_0 = arith.constant 0 : i32
    %c0_i32_1 = arith.constant 0 : i32
    return %arg0, %c0_i32, %c0_i32_0 : i32, i32, i32
  }
  func.func @transform_3(%arg0: i32) -> (i32, i32, i32) {
    %c0_i32 = arith.constant 0 : i32
    %c0_i32_0 = arith.constant 0 : i32
    %c0_i32_1 = arith.constant 0 : i32
    return %arg0, %c0_i32, %c0_i32_0 : i32, i32, i32
  }
  func.func @transform_4(%arg0: i32) -> (i32, i32) {
    %c0_i32 = arith.constant 0 : i32
    %c0_i32_0 = arith.constant 0 : i32
    %c0_i32_1 = arith.constant 0 : i32
    return %c0_i32, %c0_i32_0 : i32, i32
  }
  func.func @transform_5(%arg0: i32) -> (i32, i32) {
    %c0_i32 = arith.constant 0 : i32
    %c0_i32_0 = arith.constant 0 : i32
    %c0_i32_1 = arith.constant 0 : i32
    return %c0_i32, %c0_i32_0 : i32, i32
  }
  func.func @transform_6(%arg0: i32) -> (i32, i32) {
    %c0_i32 = arith.constant 0 : i32
    %c0_i32_0 = arith.constant 0 : i32
    %c0_i32_1 = arith.constant 0 : i32
    return %c0_i32, %c0_i32_0 : i32, i32
  }
  func.func @transform_7(%arg0: i32) -> (i32, i32) {
    %c0_i32 = arith.constant 0 : i32
    %c0_i32_0 = arith.constant 0 : i32
    %c0_i32_1 = arith.constant 0 : i32
    return %c0_i32, %c0_i32_0 : i32, i32
  }
  func.func @transform_8(%arg0: i32) -> (i32, i32) {
    %c0_i32 = arith.constant 0 : i32
    %c0_i32_0 = arith.constant 0 : i32
    %c0_i32_1 = arith.constant 0 : i32
    return %c0_i32, %c0_i32_0 : i32, i32
  }
  func.func @transform_9(%arg0: i32) -> (i32, i32) {
    %c0_i32 = arith.constant 0 : i32
    %c0_i32_0 = arith.constant 0 : i32
    %c0_i32_1 = arith.constant 0 : i32
    return %c0_i32, %c0_i32_0 : i32, i32
  }
  func.func @transform_10(%arg0: i32) -> (i32, i32) {
    %c0_i32 = arith.constant 0 : i32
    %c0_i32_0 = arith.constant 0 : i32
    %c0_i32_1 = arith.constant 0 : i32
    return %c0_i32, %c0_i32_0 : i32, i32
  }
  func.func @transform_11(%arg0: i32) -> (i32, i32) {
    %c0_i32 = arith.constant 0 : i32
    %c0_i32_0 = arith.constant 0 : i32
    %c0_i32_1 = arith.constant 0 : i32
    return %c0_i32, %c0_i32_0 : i32, i32
  }
  func.func @transform_12(%arg0: i32) -> (i32, i32) {
    %c0_i32 = arith.constant 0 : i32
    %c0_i32_0 = arith.constant 0 : i32
    %c0_i32_1 = arith.constant 0 : i32
    return %c0_i32, %c0_i32_0 : i32, i32
  }
  func.func @transform_13(%arg0: i32) -> (i32, i32) {
    %c0_i32 = arith.constant 0 : i32
    %c0_i32_0 = arith.constant 0 : i32
    %c0_i32_1 = arith.constant 0 : i32
    return %c0_i32, %c0_i32_0 : i32, i32
  }
  func.func @transform_14(%arg0: i32) -> (i32, i32) {
    %c0_i32 = arith.constant 0 : i32
    %c0_i32_0 = arith.constant 0 : i32
    %c0_i32_1 = arith.constant 0 : i32
    return %c0_i32, %c0_i32_0 : i32, i32
  }
  func.func @transform_15(%arg0: i32) -> (i32, i32) {
    %c0_i32 = arith.constant 0 : i32
    %c0_i32_0 = arith.constant 0 : i32
    %c0_i32_1 = arith.constant 0 : i32
    return %c0_i32, %c0_i32_0 : i32, i32
  }
  func.func @transform_16(%arg0: i32) -> (i32, i32) {
    %c0_i32 = arith.constant 0 : i32
    %c0_i32_0 = arith.constant 0 : i32
    %c0_i32_1 = arith.constant 0 : i32
    return %c0_i32, %c0_i32_0 : i32, i32
  }
  func.func @transform_17(%arg0: i32) -> (i32, i32) {
    %c0_i32 = arith.constant 0 : i32
    %c0_i32_0 = arith.constant 0 : i32
    %c0_i32_1 = arith.constant 0 : i32
    return %c0_i32, %c0_i32_0 : i32, i32
  }
  func.func @transform_18(%arg0: i32) -> (i32, i32) {
    %c0_i32 = arith.constant 0 : i32
    %c0_i32_0 = arith.constant 0 : i32
    %c0_i32_1 = arith.constant 0 : i32
    return %c0_i32, %c0_i32_0 : i32, i32
  }
  func.func @transform_19(%arg0: i32) -> (i32, i32) {
    %c0_i32 = arith.constant 0 : i32
    %c0_i32_0 = arith.constant 0 : i32
    %c0_i32_1 = arith.constant 0 : i32
    return %c0_i32, %c0_i32_0 : i32, i32
  }
  func.func @transform_20(%arg0: i32) -> (i32, i32) {
    %c0_i32 = arith.constant 0 : i32
    %c0_i32_0 = arith.constant 0 : i32
    %c0_i32_1 = arith.constant 0 : i32
    return %c0_i32, %c0_i32_0 : i32, i32
  }
  func.func @transform_21(%arg0: i32) -> (i32, i32) {
    %c0_i32 = arith.constant 0 : i32
    %c0_i32_0 = arith.constant 0 : i32
    %c0_i32_1 = arith.constant 0 : i32
    return %c0_i32, %c0_i32_0 : i32, i32
  }
  func.func @transform_22(%arg0: i32) -> (i32, i32) {
    %c0_i32 = arith.constant 0 : i32
    %c0_i32_0 = arith.constant 0 : i32
    %c0_i32_1 = arith.constant 0 : i32
    return %c0_i32, %c0_i32_0 : i32, i32
  }
  func.func @transform_23(%arg0: i32) -> (i32, i32) {
    %c0_i32 = arith.constant 0 : i32
    %c0_i32_0 = arith.constant 0 : i32
    %c0_i32_1 = arith.constant 0 : i32
    return %c0_i32, %c0_i32_0 : i32, i32
  }
  func.func @transform_24(%arg0: i32) -> (i32, i32) {
    %c0_i32 = arith.constant 0 : i32
    %c0_i32_0 = arith.constant 0 : i32
    %c0_i32_1 = arith.constant 0 : i32
    return %c0_i32, %c0_i32_0 : i32, i32
  }
  func.func @transform_25(%arg0: i32) -> (i32, i32) {
    %c0_i32 = arith.constant 0 : i32
    %c0_i32_0 = arith.constant 0 : i32
    %c0_i32_1 = arith.constant 0 : i32
    return %c0_i32, %c0_i32_0 : i32, i32
  }
  func.func @transform_26(%arg0: i32) -> (i32, i32) {
    %c0_i32 = arith.constant 0 : i32
    %c0_i32_0 = arith.constant 0 : i32
    %c0_i32_1 = arith.constant 0 : i32
    return %c0_i32, %c0_i32_0 : i32, i32
  }
  func.func @transform_27(%arg0: i32) -> (i32, i32) {
    %c0_i32 = arith.constant 0 : i32
    %c0_i32_0 = arith.constant 0 : i32
    %c0_i32_1 = arith.constant 0 : i32
    return %c0_i32, %c0_i32_0 : i32, i32
  }
  func.func @transform_28(%arg0: i32) -> (i32, i32, i32) {
    %c0_i32 = arith.constant 0 : i32
    %c0_i32_0 = arith.constant 0 : i32
    %c0_i32_1 = arith.constant 0 : i32
    return %arg0, %c0_i32, %c0_i32_0 : i32, i32, i32
  }
  func.func @transform_29(%arg0: i32) -> (i32, i32, i32) {
    %c0_i32 = arith.constant 0 : i32
    %c0_i32_0 = arith.constant 0 : i32
    %c0_i32_1 = arith.constant 0 : i32
    return %arg0, %c0_i32, %c0_i32_0 : i32, i32, i32
  }
  func.func @transform_30(%arg0: i32) -> (i32, i32, i32) {
    %c0_i32 = arith.constant 0 : i32
    %c0_i32_0 = arith.constant 0 : i32
    %c0_i32_1 = arith.constant 0 : i32
    return %arg0, %c0_i32, %c0_i32_0 : i32, i32, i32
  }
  func.func @transform_31(%arg0: i32) -> (i32, i32, i32) {
    %c0_i32 = arith.constant 0 : i32
    %c0_i32_0 = arith.constant 0 : i32
    %c0_i32_1 = arith.constant 0 : i32
    return %arg0, %c0_i32, %c0_i32_0 : i32, i32, i32
  }
}

</mosaic_0001>

<llo_original>
// kernel: model_forward.1
$region0: #{model_forward.1}
  #allocation0 [shape = 'u32[]', space=smem, size = 0x4, offset = 0x4, fixed_abs, tag = 'smem constant byte address 0x4 - core index']
  #allocation1 [shape = 'u32[144,128]{1,0:T(1,128)}', space=vmem, size = 0x12000, scoped, tag = 'internal scratch']
  %s0 = inlined_call_operand.smem [shape: u32[32], index: -1, kind: input, shape index: {}]
  %s1 = sld [smem:[%s0]]
  %s2 = scalar_lea.smem %s0, 1
  %s3 = sld [smem:[%s2]]
  %s4 = scalar_lea.smem %s0, 2
  %s5 = sld [smem:[%s4]]
  %s6 = scalar_lea.smem %s0, 3
  %s7 = sld [smem:[%s6]]
  %s8 = scalar_lea.smem %s0, 4
  %s9 = sld [smem:[%s8]]
  %s10 = scalar_lea.smem %s0, 5
  %s11 = sld [smem:[%s10]]
  %s12 = scalar_lea.smem %s0, 6
  %s13 = sld [smem:[%s12]]
  %s14 = scalar_lea.smem %s0, 7
  %s15 = sld [smem:[%s14]]
  %s16 = scalar_lea.smem %s0, 8
  %s17 = sld [smem:[%s16]]
  %s18 = scalar_lea.smem %s0, 9
  %s19 = sld [smem:[%s18]]
  %s20 = scalar_lea.smem %s0, 10
  %s21 = sld [smem:[%s20]]
  %s22 = scalar_lea.smem %s0, 11
  %s23 = sld [smem:[%s22]]
  %s24 = scalar_lea.smem %s0, 12
  %s25 = sld [smem:[%s24]]
  %s26 = scalar_lea.smem %s0, 13
  %s27 = sld [smem:[%s26]]
  %s28 = scalar_lea.smem %s0, 14
  %s29 = sld [smem:[%s28]]
  %s30 = scalar_lea.smem %s0, 15
  %s31 = sld [smem:[%s30]]
  %s32 = scalar_lea.smem %s0, 16
  %s33 = sld [smem:[%s32]]
  %s34 = scalar_lea.smem %s0, 17
  %s35 = sld [smem:[%s34]]
  %s36 = scalar_lea.smem %s0, 18
  %s37 = sld [smem:[%s36]]
  %s38 = scalar_lea.smem %s0, 19
  %s39 = sld [smem:[%s38]]
  %s40 = scalar_lea.smem %s0, 20
  %s41 = sld [smem:[%s40]]
  %s42 = scalar_lea.smem %s0, 21
  %s43 = sld [smem:[%s42]]
  %s44 = scalar_lea.smem %s0, 22
  %s45 = sld [smem:[%s44]]
  %s46 = scalar_lea.smem %s0, 23
  %s47 = sld [smem:[%s46]]
  %s48 = scalar_lea.smem %s0, 24
  %s49 = sld [smem:[%s48]]
  %s50 = scalar_lea.smem %s0, 25
  %s51 = sld [smem:[%s50]]
  %s52 = scalar_lea.smem %s0, 26
  %s53 = sld [smem:[%s52]]
  %s54 = scalar_lea.smem %s0, 27
  %s55 = sld [smem:[%s54]]
  %s56 = scalar_lea.smem %s0, 28
  %s57 = sld [smem:[%s56]]
  %s58 = scalar_lea.smem %s0, 29
  %s59 = sld [smem:[%s58]]
  %s60 = scalar_lea.smem %s0, 30
  %s61 = sld [smem:[%s60]]
  %s62 = scalar_lea.smem %s0, 31
  %s63 = sld [smem:[%s62]]
  %64 = xla_tuple %s57, %s59, %s61, %s63
  %s65 = sld [smem:[#allocation0]]
  $region213: #{model_forward.1} parent=0
    _
  %s67 = ssub.s32 1, %s65
  %s68 = scalar_select 0, %s67, %s65
  $region1: #{model_forward.1} parent=0
    #allocation2 [shape = 'u8[512]{0}', space=smem, size = 0x200, scoped, tag = 'input window, operand 0, single buffered']
    #allocation3 [shape = 's32[2]{0}', space=sflag, size = 0x8, scoped, tag = 'scoped memory for model_forward.1']
    #allocation4 [shape = 's32[2]{0}', space=sflag, size = 0x8, scoped, tag = 'scoped memory for model_forward.1']
    #allocation5 [shape = 's32[2]{0}', space=sflag, size = 0x8, scoped, tag = 'scoped memory for model_forward.1']
    #allocation6 [shape = 'u8[16384]{0}', space=vmem, size = 0x4000, scoped, tag = 'input window, operand 3']
    #allocation7 [shape = 'u8[16384]{0}', space=vmem, size = 0x4000, scoped, tag = 'input window, operand 6, single buffered']
    #allocation8 [shape = 's32[1]{0}', space=sflag, size = 0x4, scoped, tag = 'scoped memory for model_forward.1']
    #allocation9 [shape = 'u8[16384]{0}', space=vmem, size = 0x4000, scoped, tag = 'input window, operand 10, single buffered']
    #allocation10 [shape = 'u8[16384]{0}', space=vmem, size = 0x4000, scoped, tag = 'input window, operand 12, single buffered']
    #allocation11 [shape = 's32[1]{0}', space=sflag, size = 0x4, scoped, tag = 'scoped memory for model_forward.1']
    #allocation12 [shape = 'u8[16384]{0}', space=vmem, size = 0x4000, scoped, tag = 'input window, operand 14, single buffered']
    #allocation13 [shape = 'u8[16384]{0}', space=vmem, size = 0x4000, scoped, tag = 'input window, operand 16, single buffered']
    #allocation14 [shape = 's32[1]{0}', space=sflag, size = 0x4, scoped, tag = 'scoped memory for model_forward.1']
    #allocation15 [shape = 'u8[16384]{0}', space=vmem, size = 0x4000, scoped, tag = 'input window, operand 18, single buffered']
    #allocation16 [shape = 'u8[32768]{0}', space=vmem, size = 0x8000, scoped, tag = 'input window, operand 20, single buffered']
    #allocation17 [shape = 's32[1]{0}', space=sflag, size = 0x4, scoped, tag = 'scoped memory for model_forward.1']
    #allocation18 [shape = 'u8[16384]{0}', space=vmem, size = 0x4000, scoped, tag = 'input window, operand 22, single buffered']
    #allocation19 [shape = 'u8[16384]{0}', space=vmem, size = 0x4000, scoped, tag = 'input window, operand 24, single buffered']
    #allocation20 [shape = 's32[1]{0}', space=sflag, size = 0x4, scoped, tag = 'scoped memory for model_forward.1']
    #allocation21 [shape = 'u8[16384]{0}', space=vmem, size = 0x4000, scoped, tag = 'output window, operand 0']
    #allocation22 [shape = 'u8[1024]{0}', space=vmem, size = 0x400, scoped, tag = 'output window, operand 1']
    #allocation23 [shape = 's32[2]{0}', space=sflag, size = 0x8, scoped, tag = 'scoped memory for model_forward.1']
    #allocation24 [shape = 'u8[16384]{0}', space=vmem, size = 0x4000, scoped, tag = 'output window, operand 2']
    #allocation25 [shape = 'u8[1024]{0}', space=vmem, size = 0x400, scoped, tag = 'output window, operand 3']
    #allocation26 [shape = 's32[2]{0}', space=sflag, size = 0x8, scoped, tag = 'scoped memory for model_forward.1']
    %69 = vsyncpa [#allocation5], 0
    %70 = vsyncpa [#allocation3], 0
    %s71 = scalar_lea.sflag [#allocation3], 1
    %72 = vsyncpa %s71, 0
    %73 = vsyncpa [#allocation8], 0
    %74 = vsyncpa [#allocation11], 0
    %75 = vsyncpa [#allocation14], 0
    %76 = vsyncpa [#allocation17], 0
    %77 = vsyncpa [#allocation20], 0
    %78 = vsyncpa [#allocation4], 0
    %s79 = scalar_lea.sflag [#allocation4], 1
    %80 = vsyncpa %s79, 0
    %81 = vsyncpa [#allocation23], 0
    %s82 = scalar_lea.sflag [#allocation23], 1
    %83 = vsyncpa %s82, 0
    %84 = vsyncpa [#allocation26], 0
    %s85 = scalar_lea.sflag [#allocation26], 1
    %86 = vsyncpa %s85, 0
    loop: start=0, step=1, limit=4
    $region2: #{model_forward.1} parent=1 // loop_pre_header
      _
    $region3: #{model_forward.1} parent=1 // loop_header
      %s88 = sphi 0, %s92
      %p89 = scmp.ge.s32.totalorder %s88, 4
      %s96 = sphi 0, %s96
      %s98 = sphi 0, %s96
      %s99 = sphi 0, %s98
      %s113 = sphi 0, %s99
      %s119 = sphi 0, %s121
      %s122 = sphi 0, %s119
      %s123 = sphi 0, %s122
      %s139 = sphi 0, %s123
      %s145 = sphi 0, %s147
      %s148 = sphi 0, %s145
      %s149 = sphi 0, %s148
      %s165 = sphi 0, %s149
      %s171 = sphi 0, %s173
      %s174 = sphi 0, %s171
      %s175 = sphi 0, %s174
      %s191 = sphi 0, %s175
      %s195 = sphi 0, %s195
      %s197 = sphi 0, %s195
      %s198 = sphi 0, %s197
      %s212 = sphi 0, %s198
      %s216 = sphi 0, %s216
      %s218 = sphi 0, %s216
      %s219 = sphi 0, %s218
      %s233 = sphi 0, %s219
      %s237 = sphi 0, %s237
      %s239 = sphi 0, %s237
      %s240 = sphi 0, %s239
      %s254 = sphi 0, %s240
      %s258 = sphi 0, %s258
      %s260 = sphi 0, %s258
      %s261 = sphi 0, %s260
      %s275 = sphi 0, %s261
      %s279 = sphi 0, %s279
      %s281 = sphi 0, %s279
      %s282 = sphi 0, %s281
      %s296 = sphi 0, %s282
      %s300 = sphi 0, %s300
      %s302 = sphi 0, %s300
      %s303 = sphi 0, %s302
      %s317 = sphi 0, %s303
      %s321 = sphi 0, %s321
      %s323 = sphi 0, %s321
      %s324 = sphi 0, %s323
      %s338 = sphi 0, %s324
      %s342 = sphi 0, %s342
      %s344 = sphi 0, %s342
      %s345 = sphi 0, %s344
      %s359 = sphi 0, %s345
      %s363 = sphi 0, %s363
      %s365 = sphi 0, %s363
      %s366 = sphi 0, %s365
      %s380 = sphi 0, %s366
      %s384 = sphi 0, %s384
      %s386 = sphi 0, %s384
      %s387 = sphi 0, %s386
      %s401 = sphi 0, %s387
      %s405 = sphi 0, %s405
      %s407 = sphi 0, %s405
      %s408 = sphi 0, %s407
      %s422 = sphi 0, %s408
      %s426 = sphi 0, %s426
      %s428 = sphi 0, %s426
      %s429 = sphi 0, %s428
      %s443 = sphi 0, %s429
      %s447 = sphi 0, %s447
      %s449 = sphi 0, %s447
      %s450 = sphi 0, %s449
      %s464 = sphi 0, %s450
      %s468 = sphi 0, %s468
      %s470 = sphi 0, %s468
      %s471 = sphi 0, %s470
      %s485 = sphi 0, %s471
      %s489 = sphi 0, %s489
      %s491 = sphi 0, %s489
      %s492 = sphi 0, %s491
      %s506 = sphi 0, %s492
      %s510 = sphi 0, %s510
      %s512 = sphi 0, %s510
      %s513 = sphi 0, %s512
      %s527 = sphi 0, %s513
      %s531 = sphi 0, %s531
      %s533 = sphi 0, %s531
      %s534 = sphi 0, %s533
      %s548 = sphi 0, %s534
      %s552 = sphi 0, %s552
      %s554 = sphi 0, %s552
      %s555 = sphi 0, %s554
      %s569 = sphi 0, %s555
      %s573 = sphi 0, %s573
      %s575 = sphi 0, %s573
      %s576 = sphi 0, %s575
      %s590 = sphi 0, %s576
      %s594 = sphi 0, %s594
      %s596 = sphi 0, %s594
      %s597 = sphi 0, %s596
      %s611 = sphi 0, %s597
      %s615 = sphi 0, %s615
      %s617 = sphi 0, %s615
      %s618 = sphi 0, %s617
      %s632 = sphi 0, %s618
      %s636 = sphi 0, %s636
      %s638 = sphi 0, %s636
      %s639 = sphi 0, %s638
      %s653 = sphi 0, %s639
      %s657 = sphi 0, %s657
      %s659 = sphi 0, %s657
      %s660 = sphi 0, %s659
      %s674 = sphi 0, %s660
      %s678 = sphi 0, %s678
      %s680 = sphi 0, %s678
      %s681 = sphi 0, %s680
      %s695 = sphi 0, %s681
      %s701 = sphi 0, %s703
      %s704 = sphi 0, %s701
      %s705 = sphi 0, %s704
      %s721 = sphi 0, %s705
      %s727 = sphi 0, %s729
      %s730 = sphi 0, %s727
      %s731 = sphi 0, %s730
      %s747 = sphi 0, %s731
      %s753 = sphi 0, %s755
      %s756 = sphi 0, %s753
      %s757 = sphi 0, %s756
      %s773 = sphi 0, %s757
      %s779 = sphi 0, %s781
      %s782 = sphi 0, %s779
      %s783 = sphi 0, %s782
      %s799 = sphi 0, %s783
    $region4: #{model_forward.1} parent=1 // loop_header_branch
      %91 = sbr.rel (%p89) target = $region8
    $region5: #{model_forward.1} parent=1 // loop_body
      %s93 = ssub.s32 %s88, 1
      %s94 = ssub.s32 %s88, 2
      %s95 = sadd.s32 %s88, 1
      %s97 = sadd.s32 %s96, 1
      %p100 = scmp.eq.s32.totalorder %s88, 1
      %p101 = scmp.ne.s32.totalorder %s96, %s98
      %p102 = scmp.eq.s32.totalorder %s88, 0
      %p103 = por %p101, %p102
      %p104 = scmp.ne.s32.totalorder %s96, %s98
      %p105 = scmp.eq.s32.totalorder %s93, 1
      %p106 = por %p104, %p105
      %p107 = scmp.ne.s32.totalorder %s98, %s99
      %p108 = scmp.eq.s32.totalorder %s93, 0
      %p109 = por %p107, %p108
      %p110 = scmp.ne.s32.totalorder %s98, %s99
      %p111 = scmp.eq.s32.totalorder %s94, 1
      %p112 = por %p110, %p111
      %p114 = scmp.ne.s32.totalorder %s99, %s113
      %p115 = scmp.eq.s32.totalorder %s94, 0
      %p116 = por %p114, %p115
      %s117 = ssub.s32 %s88, %s95
      %p118 = scmp.eq.s32.totalorder %s117, 0
      %s120 = sadd.s32 %s119, 1
      %s121 = scalar_select %p118, %s119, %s120
      %p124 = pneg %p118
      %p125 = scmp.eq.s32.totalorder %s88, 1
      %p126 = por %p124, %p125
      %p127 = scmp.ne.s32.totalorder %s119, %s122
      %p128 = scmp.eq.s32.totalorder %s88, 0
      %p129 = por %p127, %p128
      %p130 = scmp.ne.s32.totalorder %s119, %s122
      %p131 = scmp.eq.s32.totalorder %s93, 1
      %p132 = por %p130, %p131
      %p133 = scmp.ne.s32.totalorder %s122, %s123
      %p134 = scmp.eq.s32.totalorder %s93, 0
      %p135 = por %p133, %p134
      %p136 = scmp.ne.s32.totalorder %s122, %s123
      %p137 = scmp.eq.s32.totalorder %s94, 1
      %p138 = por %p136, %p137
      %p140 = scmp.ne.s32.totalorder %s123, %s139
      %p141 = scmp.eq.s32.totalorder %s94, 0
      %p142 = por %p140, %p141
      %s143 = ssub.s32 %s88, %s95
      %p144 = scmp.eq.s32.totalorder %s143, 0
      %s146 = sadd.s32 %s145, 1
      %s147 = scalar_select %p144, %s145, %s146
      %p150 = pneg %p144
      %p151 = scmp.eq.s32.totalorder %s88, 1
      %p152 = por %p150, %p151
      %p153 = scmp.ne.s32.totalorder %s145, %s148
      %p154 = scmp.eq.s32.totalorder %s88, 0
      %p155 = por %p153, %p154
      %p156 = scmp.ne.s32.totalorder %s145, %s148
      %p157 = scmp.eq.s32.totalorder %s93, 1
      %p158 = por %p156, %p157
      %p159 = scmp.ne.s32.totalorder %s148, %s149
      %p160 = scmp.eq.s32.totalorder %s93, 0
      %p161 = por %p159, %p160
      %p162 = scmp.ne.s32.totalorder %s148, %s149
      %p163 = scmp.eq.s32.totalorder %s94, 1
      %p164 = por %p162, %p163
      %p166 = scmp.ne.s32.totalorder %s149, %s165
      %p167 = scmp.eq.s32.totalorder %s94, 0
      %p168 = por %p166, %p167
      %s169 = ssub.s32 %s88, %s95
      %p170 = scmp.eq.s32.totalorder %s169, 0
      %s172 = sadd.s32 %s171, 1
      %s173 = scalar_select %p170, %s171, %s172
      %p176 = pneg %p170
      %p177 = scmp.eq.s32.totalorder %s88, 1
      %p178 = por %p176, %p177
      %p179 = scmp.ne.s32.totalorder %s171, %s174
      %p180 = scmp.eq.s32.totalorder %s88, 0
      %p181 = por %p179, %p180
      %p182 = scmp.ne.s32.totalorder %s171, %s174
      %p183 = scmp.eq.s32.totalorder %s93, 1
      %p184 = por %p182, %p183
      %p185 = scmp.ne.s32.totalorder %s174, %s175
      %p186 = scmp.eq.s32.totalorder %s93, 0
      %p187 = por %p185, %p186
      %p188 = scmp.ne.s32.totalorder %s174, %s175
      %p189 = scmp.eq.s32.totalorder %s94, 1
      %p190 = por %p188, %p189
      %p192 = scmp.ne.s32.totalorder %s175, %s191
      %p193 = scmp.eq.s32.totalorder %s94, 0
      %p194 = por %p192, %p193
      %s196 = sadd.s32 %s195, 1
      %p199 = scmp.eq.s32.totalorder %s88, 1
      %p200 = scmp.ne.s32.totalorder %s195, %s197
      %p201 = scmp.eq.s32.totalorder %s88, 0
      %p202 = por %p200, %p201
      %p203 = scmp.ne.s32.totalorder %s195, %s197
      %p204 = scmp.eq.s32.totalorder %s93, 1
      %p205 = por %p203, %p204
      %p206 = scmp.ne.s32.totalorder %s197, %s198
      %p207 = scmp.eq.s32.totalorder %s93, 0
      %p208 = por %p206, %p207
      %p209 = scmp.ne.s32.totalorder %s197, %s198
      %p210 = scmp.eq.s32.totalorder %s94, 1
      %p211 = por %p209, %p210
      %p213 = scmp.ne.s32.totalorder %s198, %s212
      %p214 = scmp.eq.s32.totalorder %s94, 0
      %p215 = por %p213, %p214
      %s217 = sadd.s32 %s216, 1
      %p220 = scmp.eq.s32.totalorder %s88, 1
      %p221 = scmp.ne.s32.totalorder %s216, %s218
      %p222 = scmp.eq.s32.totalorder %s88, 0
      %p223 = por %p221, %p222
      %p224 = scmp.ne.s32.totalorder %s216, %s218
      %p225 = scmp.eq.s32.totalorder %s93, 1
      %p226 = por %p224, %p225
      %p227 = scmp.ne.s32.totalorder %s218, %s219
      %p228 = scmp.eq.s32.totalorder %s93, 0
      %p229 = por %p227, %p228
      %p230 = scmp.ne.s32.totalorder %s218, %s219
      %p231 = scmp.eq.s32.totalorder %s94, 1
      %p232 = por %p230, %p231
      %p234 = scmp.ne.s32.totalorder %s219, %s233
      %p235 = scmp.eq.s32.totalorder %s94, 0
      %p236 = por %p234, %p235
      %s238 = sadd.s32 %s237, 1
      %p241 = scmp.eq.s32.totalorder %s88, 1
      %p242 = scmp.ne.s32.totalorder %s237, %s239
      %p243 = scmp.eq.s32.totalorder %s88, 0
      %p244 = por %p242, %p243
      %p245 = scmp.ne.s32.totalorder %s237, %s239
      %p246 = scmp.eq.s32.totalorder %s93, 1
      %p247 = por %p245, %p246
      %p248 = scmp.ne.s32.totalorder %s239, %s240
      %p249 = scmp.eq.s32.totalorder %s93, 0
      %p250 = por %p248, %p249
      %p251 = scmp.ne.s32.totalorder %s239, %s240
      %p252 = scmp.eq.s32.totalorder %s94, 1
      %p253 = por %p251, %p252
      %p255 = scmp.ne.s32.totalorder %s240, %s254
      %p256 = scmp.eq.s32.totalorder %s94, 0
      %p257 = por %p255, %p256
      %s259 = sadd.s32 %s258, 1
      %p262 = scmp.eq.s32.totalorder %s88, 1
      %p263 = scmp.ne.s32.totalorder %s258, %s260
      %p264 = scmp.eq.s32.totalorder %s88, 0
      %p265 = por %p263, %p264
      %p266 = scmp.ne.s32.totalorder %s258, %s260
      %p267 = scmp.eq.s32.totalorder %s93, 1
      %p268 = por %p266, %p267
      %p269 = scmp.ne.s32.totalorder %s260, %s261
      %p270 = scmp.eq.s32.totalorder %s93, 0
      %p271 = por %p269, %p270
      %p272 = scmp.ne.s32.totalorder %s260, %s261
      %p273 = scmp.eq.s32.totalorder %s94, 1
      %p274 = por %p272, %p273
      %p276 = scmp.ne.s32.totalorder %s261, %s275
      %p277 = scmp.eq.s32.totalorder %s94, 0
      %p278 = por %p276, %p277
      %s280 = sadd.s32 %s279, 1
      %p283 = scmp.eq.s32.totalorder %s88, 1
      %p284 = scmp.ne.s32.totalorder %s279, %s281
      %p285 = scmp.eq.s32.totalorder %s88, 0
      %p286 = por %p284, %p285
      %p287 = scmp.ne.s32.totalorder %s279, %s281
      %p288 = scmp.eq.s32.totalorder %s93, 1
      %p289 = por %p287, %p288
      %p290 = scmp.ne.s32.totalorder %s281, %s282
      %p291 = scmp.eq.s32.totalorder %s93, 0
      %p292 = por %p290, %p291
      %p293 = scmp.ne.s32.totalorder %s281, %s282
      %p294 = scmp.eq.s32.totalorder %s94, 1
      %p295 = por %p293, %p294
      %p297 = scmp.ne.s32.totalorder %s282, %s296
      %p298 = scmp.eq.s32.totalorder %s94, 0
      %p299 = por %p297, %p298
      %s301 = sadd.s32 %s300, 1
      %p304 = scmp.eq.s32.totalorder %s88, 1
      %p305 = scmp.ne.s32.totalorder %s300, %s302
      %p306 = scmp.eq.s32.totalorder %s88, 0
      %p307 = por %p305, %p306
      %p308 = scmp.ne.s32.totalorder %s300, %s302
      %p309 = scmp.eq.s32.totalorder %s93, 1
      %p310 = por %p308, %p309
      %p311 = scmp.ne.s32.totalorder %s302, %s303
      %p312 = scmp.eq.s32.totalorder %s93, 0
      %p313 = por %p311, %p312
      %p314 = scmp.ne.s32.totalorder %s302, %s303
      %p315 = scmp.eq.s32.totalorder %s94, 1
      %p316 = por %p314, %p315
      %p318 = scmp.ne.s32.totalorder %s303, %s317
      %p319 = scmp.eq.s32.totalorder %s94, 0
      %p320 = por %p318, %p319
      %s322 = sadd.s32 %s321, 1
      %p325 = scmp.eq.s32.totalorder %s88, 1
      %p326 = scmp.ne.s32.totalorder %s321, %s323
      %p327 = scmp.eq.s32.totalorder %s88, 0
      %p328 = por %p326, %p327
      %p329 = scmp.ne.s32.totalorder %s321, %s323
      %p330 = scmp.eq.s32.totalorder %s93, 1
      %p331 = por %p329, %p330
      %p332 = scmp.ne.s32.totalorder %s323, %s324
      %p333 = scmp.eq.s32.totalorder %s93, 0
      %p334 = por %p332, %p333
      %p335 = scmp.ne.s32.totalorder %s323, %s324
      %p336 = scmp.eq.s32.totalorder %s94, 1
      %p337 = por %p335, %p336
      %p339 = scmp.ne.s32.totalorder %s324, %s338
      %p340 = scmp.eq.s32.totalorder %s94, 0
      %p341 = por %p339, %p340
      %s343 = sadd.s32 %s342, 1
      %p346 = scmp.eq.s32.totalorder %s88, 1
      %p347 = scmp.ne.s32.totalorder %s342, %s344
      %p348 = scmp.eq.s32.totalorder %s88, 0
      %p349 = por %p347, %p348
      %p350 = scmp.ne.s32.totalorder %s342, %s344
      %p351 = scmp.eq.s32.totalorder %s93, 1
      %p352 = por %p350, %p351
      %p353 = scmp.ne.s32.totalorder %s344, %s345
      %p354 = scmp.eq.s32.totalorder %s93, 0
      %p355 = por %p353, %p354
      %p356 = scmp.ne.s32.totalorder %s344, %s345
      %p357 = scmp.eq.s32.totalorder %s94, 1
      %p358 = por %p356, %p357
      %p360 = scmp.ne.s32.totalorder %s345, %s359
      %p361 = scmp.eq.s32.totalorder %s94, 0
      %p362 = por %p360, %p361
      %s364 = sadd.s32 %s363, 1
      %p367 = scmp.eq.s32.totalorder %s88, 1
      %p368 = scmp.ne.s32.totalorder %s363, %s365
      %p369 = scmp.eq.s32.totalorder %s88, 0
      %p370 = por %p368, %p369
      %p371 = scmp.ne.s32.totalorder %s363, %s365
      %p372 = scmp.eq.s32.totalorder %s93, 1
      %p373 = por %p371, %p372
      %p374 = scmp.ne.s32.totalorder %s365, %s366
      %p375 = scmp.eq.s32.totalorder %s93, 0
      %p376 = por %p374, %p375
      %p377 = scmp.ne.s32.totalorder %s365, %s366
      %p378 = scmp.eq.s32.totalorder %s94, 1
      %p379 = por %p377, %p378
      %p381 = scmp.ne.s32.totalorder %s366, %s380
      %p382 = scmp.eq.s32.totalorder %s94, 0
      %p383 = por %p381, %p382
      %s385 = sadd.s32 %s384, 1
      %p388 = scmp.eq.s32.totalorder %s88, 1
      %p389 = scmp.ne.s32.totalorder %s384, %s386
      %p390 = scmp.eq.s32.totalorder %s88, 0
      %p391 = por %p389, %p390
      %p392 = scmp.ne.s32.totalorder %s384, %s386
      %p393 = scmp.eq.s32.totalorder %s93, 1
      %p394 = por %p392, %p393
      %p395 = scmp.ne.s32.totalorder %s386, %s387
      %p396 = scmp.eq.s32.totalorder %s93, 0
      %p397 = por %p395, %p396
      %p398 = scmp.ne.s32.totalorder %s386, %s387
      %p399 = scmp.eq.s32.totalorder %s94, 1
      %p400 = por %p398, %p399
      %p402 = scmp.ne.s32.totalorder %s387, %s401
      %p403 = scmp.eq.s32.totalorder %s94, 0
      %p404 = por %p402, %p403
      %s406 = sadd.s32 %s405, 1
      %p409 = scmp.eq.s32.totalorder %s88, 1
      %p410 = scmp.ne.s32.totalorder %s405, %s407
      %p411 = scmp.eq.s32.totalorder %s88, 0
      %p412 = por %p410, %p411
      %p413 = scmp.ne.s32.totalorder %s405, %s407
      %p414 = scmp.eq.s32.totalorder %s93, 1
      %p415 = por %p413, %p414
      %p416 = scmp.ne.s32.totalorder %s407, %s408
      %p417 = scmp.eq.s32.totalorder %s93, 0
      %p418 = por %p416, %p417
      %p419 = scmp.ne.s32.totalorder %s407, %s408
      %p420 = scmp.eq.s32.totalorder %s94, 1
      %p421 = por %p419, %p420
      %p423 = scmp.ne.s32.totalorder %s408, %s422
      %p424 = scmp.eq.s32.totalorder %s94, 0
      %p425 = por %p423, %p424
      %s427 = sadd.s32 %s426, 1
      %p430 = scmp.eq.s32.totalorder %s88, 1
      %p431 = scmp.ne.s32.totalorder %s426, %s428
      %p432 = scmp.eq.s32.totalorder %s88, 0
      %p433 = por %p431, %p432
      %p434 = scmp.ne.s32.totalorder %s426, %s428
      %p435 = scmp.eq.s32.totalorder %s93, 1
      %p436 = por %p434, %p435
      %p437 = scmp.ne.s32.totalorder %s428, %s429
      %p438 = scmp.eq.s32.totalorder %s93, 0
      %p439 = por %p437, %p438
      %p440 = scmp.ne.s32.totalorder %s428, %s429
      %p441 = scmp.eq.s32.totalorder %s94, 1
      %p442 = por %p440, %p441
      %p444 = scmp.ne.s32.totalorder %s429, %s443
      %p445 = scmp.eq.s32.totalorder %s94, 0
      %p446 = por %p444, %p445
      %s448 = sadd.s32 %s447, 1
      %p451 = scmp.eq.s32.totalorder %s88, 1
      %p452 = scmp.ne.s32.totalorder %s447, %s449
      %p453 = scmp.eq.s32.totalorder %s88, 0
      %p454 = por %p452, %p453
      %p455 = scmp.ne.s32.totalorder %s447, %s449
      %p456 = scmp.eq.s32.totalorder %s93, 1
      %p457 = por %p455, %p456
      %p458 = scmp.ne.s32.totalorder %s449, %s450
      %p459 = scmp.eq.s32.totalorder %s93, 0
      %p460 = por %p458, %p459
      %p461 = scmp.ne.s32.totalorder %s449, %s450
      %p462 = scmp.eq.s32.totalorder %s94, 1
      %p463 = por %p461, %p462
      %p465 = scmp.ne.s32.totalorder %s450, %s464
      %p466 = scmp.eq.s32.totalorder %s94, 0
      %p467 = por %p465, %p466
      %s469 = sadd.s32 %s468, 1
      %p472 = scmp.eq.s32.totalorder %s88, 1
      %p473 = scmp.ne.s32.totalorder %s468, %s470
      %p474 = scmp.eq.s32.totalorder %s88, 0
      %p475 = por %p473, %p474
      %p476 = scmp.ne.s32.totalorder %s468, %s470
      %p477 = scmp.eq.s32.totalorder %s93, 1
      %p478 = por %p476, %p477
      %p479 = scmp.ne.s32.totalorder %s470, %s471
      %p480 = scmp.eq.s32.totalorder %s93, 0
      %p481 = por %p479, %p480
      %p482 = scmp.ne.s32.totalorder %s470, %s471
      %p483 = scmp.eq.s32.totalorder %s94, 1
      %p484 = por %p482, %p483
      %p486 = scmp.ne.s32.totalorder %s471, %s485
      %p487 = scmp.eq.s32.totalorder %s94, 0
      %p488 = por %p486, %p487
      %s490 = sadd.s32 %s489, 1
      %p493 = scmp.eq.s32.totalorder %s88, 1
      %p494 = scmp.ne.s32.totalorder %s489, %s491
      %p495 = scmp.eq.s32.totalorder %s88, 0
      %p496 = por %p494, %p495
      %p497 = scmp.ne.s32.totalorder %s489, %s491
      %p498 = scmp.eq.s32.totalorder %s93, 1
      %p499 = por %p497, %p498
      %p500 = scmp.ne.s32.totalorder %s491, %s492
      %p501 = scmp.eq.s32.totalorder %s93, 0
      %p502 = por %p500, %p501
      %p503 = scmp.ne.s32.totalorder %s491, %s492
      %p504 = scmp.eq.s32.totalorder %s94, 1
      %p505 = por %p503, %p504
      %p507 = scmp.ne.s32.totalorder %s492, %s506
      %p508 = scmp.eq.s32.totalorder %s94, 0
      %p509 = por %p507, %p508
      %s511 = sadd.s32 %s510, 1
      %p514 = scmp.eq.s32.totalorder %s88, 1
      %p515 = scmp.ne.s32.totalorder %s510, %s512
      %p516 = scmp.eq.s32.totalorder %s88, 0
      %p517 = por %p515, %p516
      %p518 = scmp.ne.s32.totalorder %s510, %s512
      %p519 = scmp.eq.s32.totalorder %s93, 1
      %p520 = por %p518, %p519
      %p521 = scmp.ne.s32.totalorder %s512, %s513
      %p522 = scmp.eq.s32.totalorder %s93, 0
      %p523 = por %p521, %p522
      %p524 = scmp.ne.s32.totalorder %s512, %s513
      %p525 = scmp.eq.s32.totalorder %s94, 1
      %p526 = por %p524, %p525
      %p528 = scmp.ne.s32.totalorder %s513, %s527
      %p529 = scmp.eq.s32.totalorder %s94, 0
      %p530 = por %p528, %p529
      %s532 = sadd.s32 %s531, 1
      %p535 = scmp.eq.s32.totalorder %s88, 1
      %p536 = scmp.ne.s32.totalorder %s531, %s533
      %p537 = scmp.eq.s32.totalorder %s88, 0
      %p538 = por %p536, %p537
      %p539 = scmp.ne.s32.totalorder %s531, %s533
      %p540 = scmp.eq.s32.totalorder %s93, 1
      %p541 = por %p539, %p540
      %p542 = scmp.ne.s32.totalorder %s533, %s534
      %p543 = scmp.eq.s32.totalorder %s93, 0
      %p544 = por %p542, %p543
      %p545 = scmp.ne.s32.totalorder %s533, %s534
      %p546 = scmp.eq.s32.totalorder %s94, 1
      %p547 = por %p545, %p546
      %p549 = scmp.ne.s32.totalorder %s534, %s548
      %p550 = scmp.eq.s32.totalorder %s94, 0
      %p551 = por %p549, %p550
      %s553 = sadd.s32 %s552, 1
      %p556 = scmp.eq.s32.totalorder %s88, 1
      %p557 = scmp.ne.s32.totalorder %s552, %s554
      %p558 = scmp.eq.s32.totalorder %s88, 0
      %p559 = por %p557, %p558
      %p560 = scmp.ne.s32.totalorder %s552, %s554
      %p561 = scmp.eq.s32.totalorder %s93, 1
      %p562 = por %p560, %p561
      %p563 = scmp.ne.s32.totalorder %s554, %s555
      %p564 = scmp.eq.s32.totalorder %s93, 0
      %p565 = por %p563, %p564
      %p566 = scmp.ne.s32.totalorder %s554, %s555
      %p567 = scmp.eq.s32.totalorder %s94, 1
      %p568 = por %p566, %p567
      %p570 = scmp.ne.s32.totalorder %s555, %s569
      %p571 = scmp.eq.s32.totalorder %s94, 0
      %p572 = por %p570, %p571
      %s574 = sadd.s32 %s573, 1
      %p577 = scmp.eq.s32.totalorder %s88, 1
      %p578 = scmp.ne.s32.totalorder %s573, %s575
      %p579 = scmp.eq.s32.totalorder %s88, 0
      %p580 = por %p578, %p579
      %p581 = scmp.ne.s32.totalorder %s573, %s575
      %p582 = scmp.eq.s32.totalorder %s93, 1
      %p583 = por %p581, %p582
      %p584 = scmp.ne.s32.totalorder %s575, %s576
      %p585 = scmp.eq.s32.totalorder %s93, 0
      %p586 = por %p584, %p585
      %p587 = scmp.ne.s32.totalorder %s575, %s576
      %p588 = scmp.eq.s32.totalorder %s94, 1
      %p589 = por %p587, %p588
      %p591 = scmp.ne.s32.totalorder %s576, %s590
      %p592 = scmp.eq.s32.totalorder %s94, 0
      %p593 = por %p591, %p592
      %s595 = sadd.s32 %s594, 1
      %p598 = scmp.eq.s32.totalorder %s88, 1
      %p599 = scmp.ne.s32.totalorder %s594, %s596
      %p600 = scmp.eq.s32.totalorder %s88, 0
      %p601 = por %p599, %p600
      %p602 = scmp.ne.s32.totalorder %s594, %s596
      %p603 = scmp.eq.s32.totalorder %s93, 1
      %p604 = por %p602, %p603
      %p605 = scmp.ne.s32.totalorder %s596, %s597
      %p606 = scmp.eq.s32.totalorder %s93, 0
      %p607 = por %p605, %p606
      %p608 = scmp.ne.s32.totalorder %s596, %s597
      %p609 = scmp.eq.s32.totalorder %s94, 1
      %p610 = por %p608, %p609
      %p612 = scmp.ne.s32.totalorder %s597, %s611
      %p613 = scmp.eq.s32.totalorder %s94, 0
      %p614 = por %p612, %p613
      %s616 = sadd.s32 %s615, 1
      %p619 = scmp.eq.s32.totalorder %s88, 1
      %p620 = scmp.ne.s32.totalorder %s615, %s617
      %p621 = scmp.eq.s32.totalorder %s88, 0
      %p622 = por %p620, %p621
      %p623 = scmp.ne.s32.totalorder %s615, %s617
      %p624 = scmp.eq.s32.totalorder %s93, 1
      %p625 = por %p623, %p624
      %p626 = scmp.ne.s32.totalorder %s617, %s618
      %p627 = scmp.eq.s32.totalorder %s93, 0
      %p628 = por %p626, %p627
      %p629 = scmp.ne.s32.totalorder %s617, %s618
      %p630 = scmp.eq.s32.totalorder %s94, 1
      %p631 = por %p629, %p630
      %p633 = scmp.ne.s32.totalorder %s618, %s632
      %p634 = scmp.eq.s32.totalorder %s94, 0
      %p635 = por %p633, %p634
      %s637 = sadd.s32 %s636, 1
      %p640 = scmp.eq.s32.totalorder %s88, 1
      %p641 = scmp.ne.s32.totalorder %s636, %s638
      %p642 = scmp.eq.s32.totalorder %s88, 0
      %p643 = por %p641, %p642
      %p644 = scmp.ne.s32.totalorder %s636, %s638
      %p645 = scmp.eq.s32.totalorder %s93, 1
      %p646 = por %p644, %p645
      %p647 = scmp.ne.s32.totalorder %s638, %s639
      %p648 = scmp.eq.s32.totalorder %s93, 0
      %p649 = por %p647, %p648
      %p650 = scmp.ne.s32.totalorder %s638, %s639
      %p651 = scmp.eq.s32.totalorder %s94, 1
      %p652 = por %p650, %p651
      %p654 = scmp.ne.s32.totalorder %s639, %s653
      %p655 = scmp.eq.s32.totalorder %s94, 0
      %p656 = por %p654, %p655
      %s658 = sadd.s32 %s657, 1
      %p661 = scmp.eq.s32.totalorder %s88, 1
      %p662 = scmp.ne.s32.totalorder %s657, %s659
      %p663 = scmp.eq.s32.totalorder %s88, 0
      %p664 = por %p662, %p663
      %p665 = scmp.ne.s32.totalorder %s657, %s659
      %p666 = scmp.eq.s32.totalorder %s93, 1
      %p667 = por %p665, %p666
      %p668 = scmp.ne.s32.totalorder %s659, %s660
      %p669 = scmp.eq.s32.totalorder %s93, 0
      %p670 = por %p668, %p669
      %p671 = scmp.ne.s32.totalorder %s659, %s660
      %p672 = scmp.eq.s32.totalorder %s94, 1
      %p673 = por %p671, %p672
      %p675 = scmp.ne.s32.totalorder %s660, %s674
      %p676 = scmp.eq.s32.totalorder %s94, 0
      %p677 = por %p675, %p676
      %s679 = sadd.s32 %s678, 1
      %p682 = scmp.eq.s32.totalorder %s88, 1
      %p683 = scmp.ne.s32.totalorder %s678, %s680
      %p684 = scmp.eq.s32.totalorder %s88, 0
      %p685 = por %p683, %p684
      %p686 = scmp.ne.s32.totalorder %s678, %s680
      %p687 = scmp.eq.s32.totalorder %s93, 1
      %p688 = por %p686, %p687
      %p689 = scmp.ne.s32.totalorder %s680, %s681
      %p690 = scmp.eq.s32.totalorder %s93, 0
      %p691 = por %p689, %p690
      %p692 = scmp.ne.s32.totalorder %s680, %s681
      %p693 = scmp.eq.s32.totalorder %s94, 1
      %p694 = por %p692, %p693
      %p696 = scmp.ne.s32.totalorder %s681, %s695
      %p697 = scmp.eq.s32.totalorder %s94, 0
      %p698 = por %p696, %p697
      %s699 = ssub.s32 %s88, %s95
      %p700 = scmp.eq.s32.totalorder %s699, 0
      %s702 = sadd.s32 %s701, 1
      %s703 = scalar_select %p700, %s701, %s702
      %p706 = pneg %p700
      %p707 = scmp.eq.s32.totalorder %s88, 1
      %p708 = por %p706, %p707
      %p709 = scmp.ne.s32.totalorder %s701, %s704
      %p710 = scmp.eq.s32.totalorder %s88, 0
      %p711 = por %p709, %p710
      %p712 = scmp.ne.s32.totalorder %s701, %s704
      %p713 = scmp.eq.s32.totalorder %s93, 1
      %p714 = por %p712, %p713
      %p715 = scmp.ne.s32.totalorder %s704, %s705
      %p716 = scmp.eq.s32.totalorder %s93, 0
      %p717 = por %p715, %p716
      %p718 = scmp.ne.s32.totalorder %s704, %s705
      %p719 = scmp.eq.s32.totalorder %s94, 1
      %p720 = por %p718, %p719
      %p722 = scmp.ne.s32.totalorder %s705, %s721
      %p723 = scmp.eq.s32.totalorder %s94, 0
      %p724 = por %p722, %p723
      %s725 = ssub.s32 %s88, %s95
      %p726 = scmp.eq.s32.totalorder %s725, 0
      %s728 = sadd.s32 %s727, 1
      %s729 = scalar_select %p726, %s727, %s728
      %p732 = pneg %p726
      %p733 = scmp.eq.s32.totalorder %s88, 1
      %p734 = por %p732, %p733
      %p735 = scmp.ne.s32.totalorder %s727, %s730
      %p736 = scmp.eq.s32.totalorder %s88, 0
      %p737 = por %p735, %p736
      %p738 = scmp.ne.s32.totalorder %s727, %s730
      %p739 = scmp.eq.s32.totalorder %s93, 1
      %p740 = por %p738, %p739
      %p741 = scmp.ne.s32.totalorder %s730, %s731
      %p742 = scmp.eq.s32.totalorder %s93, 0
      %p743 = por %p741, %p742
      %p744 = scmp.ne.s32.totalorder %s730, %s731
      %p745 = scmp.eq.s32.totalorder %s94, 1
      %p746 = por %p744, %p745
      %p748 = scmp.ne.s32.totalorder %s731, %s747
      %p749 = scmp.eq.s32.totalorder %s94, 0
      %p750 = por %p748, %p749
      %s751 = ssub.s32 %s88, %s95
      %p752 = scmp.eq.s32.totalorder %s751, 0
      %s754 = sadd.s32 %s753, 1
      %s755 = scalar_select %p752, %s753, %s754
      %p758 = pneg %p752
      %p759 = scmp.eq.s32.totalorder %s88, 1
      %p760 = por %p758, %p759
      %p761 = scmp.ne.s32.totalorder %s753, %s756
      %p762 = scmp.eq.s32.totalorder %s88, 0
      %p763 = por %p761, %p762
      %p764 = scmp.ne.s32.totalorder %s753, %s756
      %p765 = scmp.eq.s32.totalorder %s93, 1
      %p766 = por %p764, %p765
      %p767 = scmp.ne.s32.totalorder %s756, %s757
      %p768 = scmp.eq.s32.totalorder %s93, 0
      %p769 = por %p767, %p768
      %p770 = scmp.ne.s32.totalorder %s756, %s757
      %p771 = scmp.eq.s32.totalorder %s94, 1
      %p772 = por %p770, %p771
      %p774 = scmp.ne.s32.totalorder %s757, %s773
      %p775 = scmp.eq.s32.totalorder %s94, 0
      %p776 = por %p774, %p775
      %s777 = ssub.s32 %s88, %s95
      %p778 = scmp.eq.s32.totalorder %s777, 0
      %s780 = sadd.s32 %s779, 1
      %s781 = scalar_select %p778, %s779, %s780
      %p784 = pneg %p778
      %p785 = scmp.eq.s32.totalorder %s88, 1
      %p786 = por %p784, %p785
      %p787 = scmp.ne.s32.totalorder %s779, %s782
      %p788 = scmp.eq.s32.totalorder %s88, 0
      %p789 = por %p787, %p788
      %p790 = scmp.ne.s32.totalorder %s779, %s782
      %p791 = scmp.eq.s32.totalorder %s93, 1
      %p792 = por %p790, %p791
      %p793 = scmp.ne.s32.totalorder %s782, %s783
      %p794 = scmp.eq.s32.totalorder %s93, 0
      %p795 = por %p793, %p794
      %p796 = scmp.ne.s32.totalorder %s782, %s783
      %p797 = scmp.eq.s32.totalorder %s94, 1
      %p798 = por %p796, %p797
      %p800 = scmp.ne.s32.totalorder %s783, %s799
      %p801 = scmp.eq.s32.totalorder %s94, 0
      %p802 = por %p800, %p801
      %p803 = scmp.le.s32.totalorder 1, %s88
      %p804 = scmp.lt.s32.totalorder %s88, 3
      %p805 = pnand %p803, %p804
      %p806 = pneg %p805
      // Predicated region
      $region9: #{model_forward.1} parent=5 // pred_check
        _
      $region10: #{model_forward.1} parent=5 // pred_check_branch
        %808 = sbr.rel (%p805) target = $region12
      $region11: #{model_forward.1} parent=5 // pred_region
        %s809 = ssub.s32 %s88, 1
        // Predicated region
        $region13: #{model_forward.1} parent=11 // pred_check
          %p810 = pneg %p109
        $region14: #{model_forward.1} parent=11 // pred_check_branch
          %812 = sbr.rel (%p810) target = $region16
        $region15: #{model_forward.1} parent=11 // pred_region
          %s814 = ssub.s32 16, 16
          %815 = vsyncadd [#allocation5], %s814
          %s817 = sshll.u32 %s1, 4
          %s818 = int_to_ptr.vmem [resolvable:$true] %s817
          %820 = dma.vmem_to_smem %s818, 16, [#allocation2], [#allocation5]
        $region16: #{model_forward.1} parent=11 // pred_fallthru
          _
        // Predicated region
        $region17: #{model_forward.1} parent=11 // pred_check
          %p821 = pneg %p208
        $region18: #{model_forward.1} parent=11 // pred_check_branch
          %823 = sbr.rel (%p821) target = $region20
        $region19: #{model_forward.1} parent=11 // pred_region
          _
        $region20: #{model_forward.1} parent=11 // pred_fallthru
          _
        // Predicated region
        $region21: #{model_forward.1} parent=11 // pred_check
          %p824 = pneg %p229
        $region22: #{model_forward.1} parent=11 // pred_check_branch
          %826 = sbr.rel (%p824) target = $region24
        $region23: #{model_forward.1} parent=11 // pred_region
          _
        $region24: #{model_forward.1} parent=11 // pred_fallthru
          _
        // Predicated region
        $region25: #{model_forward.1} parent=11 // pred_check
          %p827 = pneg %p250
        $region26: #{model_forward.1} parent=11 // pred_check_branch
          %829 = sbr.rel (%p827) target = $region28
        $region27: #{model_forward.1} parent=11 // pred_region
          %s831 = ssub.s32 512, 512
          %832 = vsyncadd [#allocation8], %s831
          %s833 = sshll.u32 [#allocation7], 4
          %s834 = int_to_ptr.vmem [resolvable:$true] %s833
          %839 = dma.hbm_to_vmem [thread:$0]  %s13, 512, %s834, [#allocation8], 128, 128, 8
        $region28: #{model_forward.1} parent=11 // pred_fallthru
          _
        // Predicated region
        $region29: #{model_forward.1} parent=11 // pred_check
          %p840 = pneg %p271
        $region30: #{model_forward.1} parent=11 // pred_check_branch
          %842 = sbr.rel (%p840) target = $region32
        $region31: #{model_forward.1} parent=11 // pred_region
          _
        $region32: #{model_forward.1} parent=11 // pred_fallthru
          _
        // Predicated region
        $region33: #{model_forward.1} parent=11 // pred_check
          %p843 = pneg %p292
        $region34: #{model_forward.1} parent=11 // pred_check_branch
          %845 = sbr.rel (%p843) target = $region36
        $region35: #{model_forward.1} parent=11 // pred_region
          _
        $region36: #{model_forward.1} parent=11 // pred_fallthru
          _
        // Predicated region
        $region37: #{model_forward.1} parent=11 // pred_check
          %p846 = pneg %p313
        $region38: #{model_forward.1} parent=11 // pred_check_branch
          %848 = sbr.rel (%p846) target = $region40
        $region39: #{model_forward.1} parent=11 // pred_region
          _
        $region40: #{model_forward.1} parent=11 // pred_fallthru
          _
        // Predicated region
        $region41: #{model_forward.1} parent=11 // pred_check
          %p849 = pneg %p334
        $region42: #{model_forward.1} parent=11 // pred_check_branch
          %851 = sbr.rel (%p849) target = $region44
        $region43: #{model_forward.1} parent=11 // pred_region
          %s853 = ssub.s32 512, 512
          %854 = vsyncadd [#allocation8], %s853
          %s855 = sshll.u32 [#allocation9], 4
          %s856 = int_to_ptr.vmem [resolvable:$true] %s855
          %861 = dma.hbm_to_vmem [thread:$0]  %s21, 512, %s856, [#allocation8], 128, 128, 8
        $region44: #{model_forward.1} parent=11 // pred_fallthru
          _
        // Predicated region
        $region45: #{model_forward.1} parent=11 // pred_check
          %p862 = pneg %p355
        $region46: #{model_forward.1} parent=11 // pred_check_branch
          %864 = sbr.rel (%p862) target = $region48
        $region47: #{model_forward.1} parent=11 // pred_region
          _
        $region48: #{model_forward.1} parent=11 // pred_fallthru
          _
        // Predicated region
        $region49: #{model_forward.1} parent=11 // pred_check
          %p865 = pneg %p376
        $region50: #{model_forward.1} parent=11 // pred_check_branch
          %867 = sbr.rel (%p865) target = $region52
        $region51: #{model_forward.1} parent=11 // pred_region
          %s869 = ssub.s32 512, 512
          %870 = vsyncadd [#allocation11], %s869
          %s871 = sshll.u32 [#allocation10], 4
          %s872 = int_to_ptr.vmem [resolvable:$true] %s871
          %877 = dma.hbm_to_vmem [thread:$0]  %s25, 512, %s872, [#allocation11], 128, 128, 8
        $region52: #{model_forward.1} parent=11 // pred_fallthru
          _
        // Predicated region
        $region53: #{model_forward.1} parent=11 // pred_check
          %p878 = pneg %p397
        $region54: #{model_forward.1} parent=11 // pred_check_branch
          %880 = sbr.rel (%p878) target = $region56
        $region55: #{model_forward.1} parent=11 // pred_region
          _
        $region56: #{model_forward.1} parent=11 // pred_fallthru
          _
        // Predicated region
        $region57: #{model_forward.1} parent=11 // pred_check
          %p881 = pneg %p418
        $region58: #{model_forward.1} parent=11 // pred_check_branch
          %883 = sbr.rel (%p881) target = $region60
        $region59: #{model_forward.1} parent=11 // pred_region
          %s885 = ssub.s32 512, 512
          %886 = vsyncadd [#allocation11], %s885
          %s887 = sshll.u32 [#allocation12], 4
          %s888 = int_to_ptr.vmem [resolvable:$true] %s887
          %893 = dma.hbm_to_vmem [thread:$0]  %s29, 512, %s888, [#allocation11], 128, 128, 8
        $region60: #{model_forward.1} parent=11 // pred_fallthru
          _
        // Predicated region
        $region61: #{model_forward.1} parent=11 // pred_check
          %p894 = pneg %p439
        $region62: #{model_forward.1} parent=11 // pred_check_branch
          %896 = sbr.rel (%p894) target = $region64
        $region63: #{model_forward.1} parent=11 // pred_region
          _
        $region64: #{model_forward.1} parent=11 // pred_fallthru
          _
        // Predicated region
        $region65: #{model_forward.1} parent=11 // pred_check
          %p897 = pneg %p460
        $region66: #{model_forward.1} parent=11 // pred_check_branch
          %899 = sbr.rel (%p897) target = $region68
        $region67: #{model_forward.1} parent=11 // pred_region
          %s901 = ssub.s32 512, 512
          %902 = vsyncadd [#allocation14], %s901
          %s903 = sshll.u32 [#allocation13], 4
          %s904 = int_to_ptr.vmem [resolvable:$true] %s903
          %909 = dma.hbm_to_vmem [thread:$0]  %s33, 512, %s904, [#allocation14], 128, 128, 8
        $region68: #{model_forward.1} parent=11 // pred_fallthru
          _
        // Predicated region
        $region69: #{model_forward.1} parent=11 // pred_check
          %p910 = pneg %p481
        $region70: #{model_forward.1} parent=11 // pred_check_branch
          %912 = sbr.rel (%p910) target = $region72
        $region71: #{model_forward.1} parent=11 // pred_region
          _
        $region72: #{model_forward.1} parent=11 // pred_fallthru
          _
        // Predicated region
        $region73: #{model_forward.1} parent=11 // pred_check
          %p913 = pneg %p502
        $region74: #{model_forward.1} parent=11 // pred_check_branch
          %915 = sbr.rel (%p913) target = $region76
        $region75: #{model_forward.1} parent=11 // pred_region
          %s917 = ssub.s32 512, 512
          %918 = vsyncadd [#allocation14], %s917
          %s919 = sshll.u32 [#allocation15], 4
          %s920 = int_to_ptr.vmem [resolvable:$true] %s919
          %925 = dma.hbm_to_vmem [thread:$0]  %s37, 512, %s920, [#allocation14], 128, 128, 8
        $region76: #{model_forward.1} parent=11 // pred_fallthru
          _
        // Predicated region
        $region77: #{model_forward.1} parent=11 // pred_check
          %p926 = pneg %p523
        $region78: #{model_forward.1} parent=11 // pred_check_branch
          %928 = sbr.rel (%p926) target = $region80
        $region79: #{model_forward.1} parent=11 // pred_region
          _
        $region80: #{model_forward.1} parent=11 // pred_fallthru
          _
        // Predicated region
        $region81: #{model_forward.1} parent=11 // pred_check
          %p929 = pneg %p544
        $region82: #{model_forward.1} parent=11 // pred_check_branch
          %931 = sbr.rel (%p929) target = $region84
        $region83: #{model_forward.1} parent=11 // pred_region
          %s933 = ssub.s32 1024, 1024
          %934 = vsyncadd [#allocation17], %s933
          %s935 = sshll.u32 [#allocation16], 4
          %s936 = int_to_ptr.vmem [resolvable:$true] %s935
          %941 = dma.hbm_to_vmem [thread:$0]  %s41, 1024, %s936, [#allocation17], 128, 128, 8
        $region84: #{model_forward.1} parent=11 // pred_fallthru
          _
        // Predicated region
        $region85: #{model_forward.1} parent=11 // pred_check
          %p942 = pneg %p565
        $region86: #{model_forward.1} parent=11 // pred_check_branch
          %944 = sbr.rel (%p942) target = $region88
        $region87: #{model_forward.1} parent=11 // pred_region
          _
        $region88: #{model_forward.1} parent=11 // pred_fallthru
          _
        // Predicated region
        $region89: #{model_forward.1} parent=11 // pred_check
          %p945 = pneg %p586
        $region90: #{model_forward.1} parent=11 // pred_check_branch
          %947 = sbr.rel (%p945) target = $region92
        $region91: #{model_forward.1} parent=11 // pred_region
          %s949 = ssub.s32 512, 512
          %950 = vsyncadd [#allocation17], %s949
          %s951 = sshll.u32 [#allocation18], 4
          %s952 = int_to_ptr.vmem [resolvable:$true] %s951
          %957 = dma.hbm_to_vmem [thread:$0]  %s45, 512, %s952, [#allocation17], 128, 128, 8
        $region92: #{model_forward.1} parent=11 // pred_fallthru
          _
        // Predicated region
        $region93: #{model_forward.1} parent=11 // pred_check
          %p958 = pneg %p607
        $region94: #{model_forward.1} parent=11 // pred_check_branch
          %960 = sbr.rel (%p958) target = $region96
        $region95: #{model_forward.1} parent=11 // pred_region
          _
        $region96: #{model_forward.1} parent=11 // pred_fallthru
          _
        // Predicated region
        $region97: #{model_forward.1} parent=11 // pred_check
          %p961 = pneg %p628
        $region98: #{model_forward.1} parent=11 // pred_check_branch
          %963 = sbr.rel (%p961) target = $region100
        $region99: #{model_forward.1} parent=11 // pred_region
          %s965 = ssub.s32 512, 512
          %966 = vsyncadd [#allocation20], %s965
          %s967 = sshll.u32 [#allocation19], 4
          %s968 = int_to_ptr.vmem [resolvable:$true] %s967
          %973 = dma.hbm_to_vmem [thread:$0]  %s49, 512, %s968, [#allocation20], 128, 128, 8
        $region100: #{model_forward.1} parent=11 // pred_fallthru
          _
        // Predicated region
        $region101: #{model_forward.1} parent=11 // pred_check
          %p974 = pneg %p649
        $region102: #{model_forward.1} parent=11 // pred_check_branch
          %976 = sbr.rel (%p974) target = $region104
        $region103: #{model_forward.1} parent=11 // pred_region
          _
        $region104: #{model_forward.1} parent=11 // pred_fallthru
          _
        // Predicated region
        $region105: #{model_forward.1} parent=11 // pred_check
          %p977 = pneg %p670
        $region106: #{model_forward.1} parent=11 // pred_check_branch
          %979 = sbr.rel (%p977) target = $region108
        $region107: #{model_forward.1} parent=11 // pred_region
          _
        $region108: #{model_forward.1} parent=11 // pred_fallthru
          _
        // Predicated region
        $region109: #{model_forward.1} parent=11 // pred_check
          %p980 = pneg %p691
        $region110: #{model_forward.1} parent=11 // pred_check_branch
          %982 = sbr.rel (%p980) target = $region112
        $region111: #{model_forward.1} parent=11 // pred_region
          _
        $region112: #{model_forward.1} parent=11 // pred_fallthru
          _
      $region12: #{model_forward.1} parent=5 // pred_fallthru
        _
      %p983 = scmp.lt.s32.totalorder %s88, 2
      // Predicated region
      $region113: #{model_forward.1} parent=5 // pred_check
        %p984 = pneg %p983
      $region114: #{model_forward.1} parent=5 // pred_check_branch
        %986 = sbr.rel (%p984) target = $region116
      $region115: #{model_forward.1} parent=5 // pred_region
        // Predicated region
        $region117: #{model_forward.1} parent=115 // pred_check
          %p987 = pneg %p129
        $region118: #{model_forward.1} parent=115 // pred_check_branch
          %989 = sbr.rel (%p987) target = $region120
        $region119: #{model_forward.1} parent=115 // pred_region
          %p990 = scmp.lt.s32.totalorder %s88, 1
          %s991 = scalar_select %p990, %s88, 1
          %s992 = smul.addr %s991, 2
          %s993 = smul.addr %s992, 8
          %s994 = scalar_lea.vmem %s3, %s993
        $region120: #{model_forward.1} parent=115 // pred_fallthru
          _
        // Predicated region
        $region121: #{model_forward.1} parent=115 // pred_check
          %p995 = pneg %p155
        $region122: #{model_forward.1} parent=115 // pred_check_branch
          %997 = sbr.rel (%p995) target = $region124
        $region123: #{model_forward.1} parent=115 // pred_region
          %p998 = scmp.lt.s32.totalorder %s88, 1
          %s999 = scalar_select %p998, %s88, 1
          %s1000 = smul.addr %s999, 2
          %s1001 = smul.addr %s1000, 8
          %s1002 = scalar_lea.vmem %s5, %s1001
        $region124: #{model_forward.1} parent=115 // pred_fallthru
          _
        // Predicated region
        $region125: #{model_forward.1} parent=115 // pred_check
          %p1003 = pneg %p181
        $region126: #{model_forward.1} parent=115 // pred_check_branch
          %1005 = sbr.rel (%p1003) target = $region128
        $region127: #{model_forward.1} parent=115 // pred_region
          %s1006 = sand.u32 %s171, 1
          %s1007 = scalar_lea.sflag [#allocation3], %s1006
          %s1008 = sand.u32 %s171, 1
          %s1009 = smul.addr %s1008, 16
          %s1010 = scalar_lea.vmem [#allocation6], %s1009
          %s1012 = ssub.s32 256, 256
          %1013 = vsyncadd %s1007, %s1012
          %s1014 = smul.addr %s88, 2
          %s1015 = smul.addr %s1014, 128
          %s1016 = scalar_lea.hbm %s7, %s1015
          %s1017 = sshll.u32 %s1010, 4
          %s1018 = int_to_ptr.vmem [resolvable:$true] %s1017
          %1023 = dma.hbm_to_vmem [thread:$0]  %s1016, 256, %s1018, %s1007, 128, 128, 8
        $region128: #{model_forward.1} parent=115 // pred_fallthru
          _
      $region116: #{model_forward.1} parent=5 // pred_fallthru
        _
      %p1024 = scmp.le.s32.totalorder 1, %s88
      %p1025 = scmp.lt.s32.totalorder %s88, 3
      %p1026 = pnand %p1024, %p1025
      %p1027 = pneg %p1026
      // Predicated region
      $region129: #{model_forward.1} parent=5 // pred_check
        _
      $region130: #{model_forward.1} parent=5 // pred_check_branch
        %1029 = sbr.rel (%p1026) target = $region132
      $region131: #{model_forward.1} parent=5 // pred_region
        %s1030 = ssub.s32 %s88, 1
        // Predicated region
        $region133: #{model_forward.1} parent=131 // pred_check
          %p1031 = pneg %p109
        $region134: #{model_forward.1} parent=131 // pred_check_branch
          %1033 = sbr.rel (%p1031) target = $region136
        $region135: #{model_forward.1} parent=131 // pred_region
          %1034 = dma.done [#allocation5], 16
        $region136: #{model_forward.1} parent=131 // pred_fallthru
          _
        %s1035 = sand.u32 %s174, 1
        %s1036 = scalar_lea.sflag [#allocation3], %s1035
        %s1037 = sand.u32 %s174, 1
        %s1038 = smul.addr %s1037, 16
        %s1039 = scalar_lea.vmem [#allocation6], %s1038
        // Predicated region
        $region137: #{model_forward.1} parent=131 // pred_check
          %p1040 = pneg %p187
        $region138: #{model_forward.1} parent=131 // pred_check_branch
          %1042 = sbr.rel (%p1040) target = $region140
        $region139: #{model_forward.1} parent=131 // pred_region
          %1043 = dma.done %s1036, 256
        $region140: #{model_forward.1} parent=131 // pred_fallthru
          _
        // Predicated region
        $region141: #{model_forward.1} parent=131 // pred_check
          %p1044 = pneg %p250
        $region142: #{model_forward.1} parent=131 // pred_check_branch
          %1046 = sbr.rel (%p1044) target = $region144
        $region143: #{model_forward.1} parent=131 // pred_region
          %1047 = dma.done [#allocation8], 512
        $region144: #{model_forward.1} parent=131 // pred_fallthru
          _
        // Predicated region
        $region145: #{model_forward.1} parent=131 // pred_check
          %p1048 = pneg %p334
        $region146: #{model_forward.1} parent=131 // pred_check_branch
          %1050 = sbr.rel (%p1048) target = $region148
        $region147: #{model_forward.1} parent=131 // pred_region
          %1051 = dma.done [#allocation8], 512
        $region148: #{model_forward.1} parent=131 // pred_fallthru
          _
        // Predicated region
        $region149: #{model_forward.1} parent=131 // pred_check
          %p1052 = pneg %p376
        $region150: #{model_forward.1} parent=131 // pred_check_branch
          %1054 = sbr.rel (%p1052) target = $region152
        $region151: #{model_forward.1} parent=131 // pred_region
          %1055 = dma.done [#allocation11], 512
        $region152: #{model_forward.1} parent=131 // pred_fallthru
          _
        // Predicated region
        $region153: #{model_forward.1} parent=131 // pred_check
          %p1056 = pneg %p418
        $region154: #{model_forward.1} parent=131 // pred_check_branch
          %1058 = sbr.rel (%p1056) target = $region156
        $region155: #{model_forward.1} parent=131 // pred_region
          %1059 = dma.done [#allocation11], 512
        $region156: #{model_forward.1} parent=131 // pred_fallthru
          _
        // Predicated region
        $region157: #{model_forward.1} parent=131 // pred_check
          %p1060 = pneg %p460
        $region158: #{model_forward.1} parent=131 // pred_check_branch
          %1062 = sbr.rel (%p1060) target = $region160
        $region159: #{model_forward.1} parent=131 // pred_region
          %1063 = dma.done [#allocation14], 512
        $region160: #{model_forward.1} parent=131 // pred_fallthru
          _
        // Predicated region
        $region161: #{model_forward.1} parent=131 // pred_check
          %p1064 = pneg %p502
        $region162: #{model_forward.1} parent=131 // pred_check_branch
          %1066 = sbr.rel (%p1064) target = $region164
        $region163: #{model_forward.1} parent=131 // pred_region
          %1067 = dma.done [#allocation14], 512
        $region164: #{model_forward.1} parent=131 // pred_fallthru
          _
        // Predicated region
        $region165: #{model_forward.1} parent=131 // pred_check
          %p1068 = pneg %p544
        $region166: #{model_forward.1} parent=131 // pred_check_branch
          %1070 = sbr.rel (%p1068) target = $region168
        $region167: #{model_forward.1} parent=131 // pred_region
          %1071 = dma.done [#allocation17], 1024
        $region168: #{model_forward.1} parent=131 // pred_fallthru
          _
        // Predicated region
        $region169: #{model_forward.1} parent=131 // pred_check
          %p1072 = pneg %p586
        $region170: #{model_forward.1} parent=131 // pred_check_branch
          %1074 = sbr.rel (%p1072) target = $region172
        $region171: #{model_forward.1} parent=131 // pred_region
          %1075 = dma.done [#allocation17], 512
        $region172: #{model_forward.1} parent=131 // pred_fallthru
          _
        // Predicated region
        $region173: #{model_forward.1} parent=131 // pred_check
          %p1076 = pneg %p628
        $region174: #{model_forward.1} parent=131 // pred_check_branch
          %1078 = sbr.rel (%p1076) target = $region176
        $region175: #{model_forward.1} parent=131 // pred_region
          %1079 = dma.done [#allocation20], 512
        $region176: #{model_forward.1} parent=131 // pred_fallthru
          _
        %1080 = sfence
        %p1081 = pneg %p109
        %p1082 = pneg %p106
        %p1083 = scmp.lt.s32.totalorder %s93, 1
        %s1084 = scalar_select %p1083, %s93, 1
        %s1085 = smul.addr %s1084, 2
        %s1086 = smul.addr %s1085, 8
        %s1087 = scalar_lea.vmem %s3, %s1086
        %p1088 = pneg %p135
        %p1089 = pneg %p132
        %p1090 = scmp.lt.s32.totalorder %s93, 1
        %s1091 = scalar_select %p1090, %s93, 1
        %s1092 = smul.addr %s1091, 2
        %s1093 = smul.addr %s1092, 8
        %s1094 = scalar_lea.vmem %s5, %s1093
        %p1095 = pneg %p161
        %p1096 = pneg %p158
        %s1097 = sand.u32 %s174, 1
        %s1098 = scalar_lea.sflag [#allocation3], %s1097
        %s1099 = sand.u32 %s174, 1
        %s1100 = smul.addr %s1099, 16
        %s1101 = scalar_lea.vmem [#allocation6], %s1100
        %p1102 = pneg %p187
        %p1103 = pneg %p184
        %p1104 = pneg %p208
        %p1105 = pneg %p205
        %p1106 = pneg %p229
        %p1107 = pneg %p226
        %p1108 = pneg %p250
        %p1109 = pneg %p247
        %p1110 = pneg %p271
        %p1111 = pneg %p268
        %p1112 = pneg %p292
        %p1113 = pneg %p289
        %p1114 = pneg %p313
        %p1115 = pneg %p310
        %p1116 = pneg %p334
        %p1117 = pneg %p331
        %p1118 = pneg %p355
        %p1119 = pneg %p352
        %p1120 = pneg %p376
        %p1121 = pneg %p373
        %p1122 = pneg %p397
        %p1123 = pneg %p394
        %p1124 = pneg %p418
        %p1125 = pneg %p415
        %p1126 = pneg %p439
        %p1127 = pneg %p436
        %p1128 = pneg %p460
        %p1129 = pneg %p457
        %p1130 = pneg %p481
        %p1131 = pneg %p478
        %p1132 = pneg %p502
        %p1133 = pneg %p499
        %p1134 = pneg %p523
        %p1135 = pneg %p520
        %p1136 = pneg %p544
        %p1137 = pneg %p541
        %p1138 = pneg %p565
        %p1139 = pneg %p562
        %p1140 = pneg %p586
        %p1141 = pneg %p583
        %p1142 = pneg %p607
        %p1143 = pneg %p604
        %p1144 = pneg %p628
        %p1145 = pneg %p625
        %p1146 = pneg %p649
        %p1147 = pneg %p646
        %p1148 = pneg %p670
        %p1149 = pneg %p667
        %p1150 = pneg %p691
        %p1151 = pneg %p688
        %p1152 = pneg %p717
        %p1153 = pneg %p714
        %s1154 = sand.u32 %s704, 1
        %s1155 = scalar_lea.sflag [#allocation4], %s1154
        %s1156 = sand.u32 %s704, 1
        %s1157 = smul.addr %s1156, 16
        %s1158 = scalar_lea.vmem [#allocation21], %s1157
        %p1159 = pneg %p743
        %p1160 = pneg %p740
        %s1161 = sand.u32 %s93, 1
        %s1162 = scalar_lea.sflag [#allocation23], %s1161
        %s1163 = sand.u32 %s730, 1
        %s1164 = scalar_lea.vmem [#allocation22], %s1163
        %p1165 = pneg %p769
        %p1166 = pneg %p766
        %s1167 = sand.u32 %s93, 1
        %s1168 = scalar_lea.sflag [#allocation23], %s1167
        %s1169 = sand.u32 %s756, 1
        %s1170 = smul.addr %s1169, 16
        %s1171 = scalar_lea.vmem [#allocation24], %s1170
        %p1172 = pneg %p795
        %p1173 = pneg %p792
        %s1174 = sand.u32 %s782, 1
        %s1175 = scalar_lea.sflag [#allocation26], %s1174
        %s1176 = sand.u32 %s782, 1
        %s1177 = scalar_lea.vmem [#allocation25], %s1176
        %p1178 = scmp.lt.s32.totalorder %s93, 1
        %s1179 = scalar_select %p1178, %s93, 1
        %s1180 = smul.addr %s1179, 2
        %s1181 = smul.addr %s1180, 8
        %s1182 = scalar_lea.vmem %s3, %s1181
        %p1183 = scmp.lt.s32.totalorder %s93, 1
        %s1184 = scalar_select %p1183, %s93, 1
        %s1185 = smul.addr %s1184, 2
        %s1186 = smul.addr %s1185, 8
        %s1187 = scalar_lea.vmem %s5, %s1186
        %v1188 = vld [vmem:[%s1182] sm:$0xff]
        %v1189 = vld [vmem:[%s1182 + $0x8] sm:$0xff]
        %v1190 = vld [vmem:[%s1187] sm:$0xff]
        %v1191 = vld [vmem:[%s1187 + $0x8] sm:$0xff]
        %v1192 = vld [vmem:[%s1039] sm:$0xff]
        %v1193 = vld [vmem:[%s1039 + $0x8] sm:$0xff]
        %v1194 = vld [vmem:[%s9] sm:$0xff]
        %v1195 = vld [vmem:[%s11] sm:$0x1]
        %s1196 = sld [smem:[#allocation2]]
        %vm1197 = vcmask 130048
        %v1199 = vsel %vm1197, %v1190, 0
        %v1202 = vsel %vm1197, %v1191, 0
        %1204 = vmatprep.subr.mxu0 0.0
        %1205 = vmatpush1.msra.mxu0 %v1188
        %1206 = vmatprep.subr.mxu0 0.0
        %1207 = vmatpush1.msra.mxu0 %v1189
        %1208 = vmatprep.subr.mxu0 0.0
        %1209 = vmatpush1.msra.mxu0 0.0
        %1210 = vmatprep.subr.mxu0 0.0
        %1211 = vmatpush1.msra.mxu0 0.0
        %1212 = vmatprep.subr.mxu0 0.0
        %1213 = vmatpush1.msra.mxu0 0.0
        %1214 = vmatprep.subr.mxu0 0.0
        %1215 = vmatpush1.msra.mxu0 0.0
        %1216 = vmatprep.subr.mxu0 0.0
        %1217 = vmatpush1.msra.mxu0 0.0
        %1218 = vmatprep.subr.mxu0 0.0
        %1219 = vmatpush1.msra.mxu0 0.0
        %1220 = vmatprep.subr.mxu0 0.0
        %1221 = vmatpush1.msra.mxu0 0.0
        %1222 = vmatprep.subr.mxu0 0.0
        %1223 = vmatpush1.msra.mxu0 0.0
        %1224 = vmatprep.subr.mxu0 0.0
        %1225 = vmatpush1.msra.mxu0 0.0
        %1226 = vmatprep.subr.mxu0 0.0
        %1227 = vmatpush1.msra.mxu0 0.0
        %1228 = vmatprep.subr.mxu0 0.0
        %1229 = vmatpush1.msra.mxu0 0.0
        %1230 = vmatprep.subr.mxu0 0.0
        %1231 = vmatpush1.msra.mxu0 0.0
        %1232 = vmatprep.subr.mxu0 0.0
        %1233 = vmatpush1.msra.mxu0 0.0
        %1234 = vmatprep.subr.mxu0 0.0
        %1235 = vmatpush1.msra.mxu0 0.0
        %1236 = vmatprep.subr.mxu0 0.0
        %1237 = vmatpush1.msra.mxu0 0.0
        %1238 = vmatprep.subr.mxu0 0.0
        %1239 = vmatpush1.msra.mxu0 0.0
        %1240 = vmatprep.subr.mxu0 0.0
        %1241 = vmatpush1.msra.mxu0 0.0
        %1242 = vmatprep.subr.mxu0 0.0
        %1243 = vmatpush1.msra.mxu0 0.0
        %1244 = vmatprep.subr.mxu0 0.0
        %1245 = vmatpush1.msra.mxu0 0.0
        %1246 = vmatprep.subr.mxu0 0.0
        %1247 = vmatpush1.msra.mxu0 0.0
        %1248 = vmatprep.subr.mxu0 0.0
        %1249 = vmatpush1.msra.mxu0 0.0
        %1250 = vmatprep.subr.mxu0 0.0
        %1251 = vmatpush1.msra.mxu0 0.0
        %1252 = vmatprep.subr.mxu0 0.0
        %1253 = vmatpush1.msra.mxu0 0.0
        %1254 = vmatprep.subr.mxu0 0.0
        %1255 = vmatpush1.msra.mxu0 0.0
        %1256 = vmatprep.subr.mxu0 0.0
        %1257 = vmatpush1.msra.mxu0 0.0
        %1258 = vmatprep.subr.mxu0 0.0
        %1259 = vmatpush1.msra.mxu0 0.0
        %1260 = vmatprep.subr.mxu0 0.0
        %1261 = vmatpush1.msra.mxu0 0.0
        %1262 = vmatprep.subr.mxu0 0.0
        %1263 = vmatpush1.msra.mxu0 0.0
        %1264 = vmatprep.subr.mxu0 0.0
        %1265 = vmatpush1.msra.mxu0 0.0
        %1266 = vmatprep.subr.mxu0 0.0
        %1267 = vmatpush1.msra.mxu0 0.0
        %1268 = vmatprep.mubr.f32.mxu0 0.0
        %1269 = vmatmul.mubr.f32.gmra.mrb[0].mxu0 %v1199
        %v1270 = vpop.f32.mrb[0].mxu0
        %v1271 = vadd.f32 0.0, %v1270
        %v1272 = vpop.f32.mrb[0].mxu0
        %1273 = vmatprep.mubr.f32.mxu0 0.0
        %1274 = vmatmul.mubr.f32.gmra.mrb[0].mxu0 %v1202
        %v1275 = vpop.f32.mrb[0].mxu0
        %v1276 = vadd.f32 0.0, %v1275
        %v1277 = vpop.f32.mrb[0].mxu0
        %1278 = vdwg.mxu0
        %v1280 = vlaneseq
        %v1281 = vshrl.u32 %v1280, 7
        %v1282 = vsub.s32 0, %v1281
        %v1283 = vrot.slane %v1195, %v1282
        %vm1285 = vcmask 64512
        %v1287 = vsel %vm1285, %v1271, 0
        %v1290 = vsel %vm1285, %v1276, 0
        %1292 = vmatprep.subr.mxu0 0.0
        %1293 = vmatpush1.msra.mxu0 %v1194
        %1294 = vmatprep.subr.mxu0 0.0
        %1295 = vmatpush1.msra.mxu0 0.0
        %1296 = vmatprep.subr.mxu0 0.0
        %1297 = vmatpush1.msra.mxu0 0.0
        %1298 = vmatprep.subr.mxu0 0.0
        %1299 = vmatpush1.msra.mxu0 0.0
        %1300 = vmatprep.subr.mxu0 0.0
        %1301 = vmatpush1.msra.mxu0 0.0
        %1302 = vmatprep.subr.mxu0 0.0
        %1303 = vmatpush1.msra.mxu0 0.0
        %1304 = vmatprep.subr.mxu0 0.0
        %1305 = vmatpush1.msra.mxu0 0.0
        %1306 = vmatprep.subr.mxu0 0.0
        %1307 = vmatpush1.msra.mxu0 0.0
        %1308 = vmatprep.subr.mxu0 0.0
        %1309 = vmatpush1.msra.mxu0 0.0
        %1310 = vmatprep.subr.mxu0 0.0
        %1311 = vmatpush1.msra.mxu0 0.0
        %1312 = vmatprep.subr.mxu0 0.0
        %1313 = vmatpush1.msra.mxu0 0.0
        %1314 = vmatprep.subr.mxu0 0.0
        %1315 = vmatpush1.msra.mxu0 0.0
        %1316 = vmatprep.subr.mxu0 0.0
        %1317 = vmatpush1.msra.mxu0 0.0
        %1318 = vmatprep.subr.mxu0 0.0
        %1319 = vmatpush1.msra.mxu0 0.0
        %1320 = vmatprep.subr.mxu0 0.0
        %1321 = vmatpush1.msra.mxu0 0.0
        %1322 = vmatprep.subr.mxu0 0.0
        %1323 = vmatpush1.msra.mxu0 0.0
        %1324 = vmatprep.subr.mxu0 0.0
        %1325 = vmatpush1.msra.mxu0 0.0
        %1326 = vmatprep.subr.mxu0 0.0
        %1327 = vmatpush1.msra.mxu0 0.0
        %1328 = vmatprep.subr.mxu0 0.0
        %1329 = vmatpush1.msra.mxu0 0.0
        %1330 = vmatprep.subr.mxu0 0.0
        %1331 = vmatpush1.msra.mxu0 0.0
        %1332 = vmatprep.subr.mxu0 0.0
        %1333 = vmatpush1.msra.mxu0 0.0
        %1334 = vmatprep.subr.mxu0 0.0
        %1335 = vmatpush1.msra.mxu0 0.0
        %1336 = vmatprep.subr.mxu0 0.0
        %1337 = vmatpush1.msra.mxu0 0.0
        %1338 = vmatprep.subr.mxu0 0.0
        %1339 = vmatpush1.msra.mxu0 0.0
        %1340 = vmatprep.subr.mxu0 0.0
        %1341 = vmatpush1.msra.mxu0 0.0
        %1342 = vmatprep.subr.mxu0 0.0
        %1343 = vmatpush1.msra.mxu0 0.0
        %1344 = vmatprep.subr.mxu0 0.0
        %1345 = vmatpush1.msra.mxu0 0.0
        %1346 = vmatprep.subr.mxu0 0.0
        %1347 = vmatpush1.msra.mxu0 0.0
        %1348 = vmatprep.subr.mxu0 0.0
        %1349 = vmatpush1.msra.mxu0 0.0
        %1350 = vmatprep.subr.mxu0 0.0
        %1351 = vmatpush1.msra.mxu0 0.0
        %1352 = vmatprep.subr.mxu0 0.0
        %1353 = vmatpush1.msra.mxu0 0.0
        %1354 = vmatprep.subr.mxu0 0.0
        %1355 = vmatpush1.msra.mxu0 0.0
        %1356 = vmatprep.mubr.f32.mxu0 0.0
        %1357 = vmatmul.mubr.f32.gmra.mrb[0].mxu0 %v1287
        %v1358 = vpop.f32.mrb[0].mxu0
        %v1359 = vadd.f32 %v1283, %v1358
        %v1360 = vpop.f32.mrb[0].mxu0
        %1361 = vmatprep.mubr.f32.mxu0 0.0
        %1362 = vmatmul.mubr.f32.gmra.mrb[0].mxu0 %v1290
        %v1363 = vpop.f32.mrb[0].mxu0
        %v1364 = vadd.f32 %v1283, %v1363
        %v1365 = vpop.f32.mrb[0].mxu0
        %1366 = vdwg.mxu0
        %v1367 = vmax.f32 %v1359, 0.0
        %v1368 = vmax.f32 %v1364, 0.0
        %v1369 = vmin.f32 %v1359, 0.0
        %v1370 = vmin.f32 %v1364, 0.0
        %v1371 = vstv %s1196
        %v1372 = vmul.f32 %v1371, %v1369
        %v1373 = vmul.f32 %v1371, %v1370
        %v1374 = vadd.f32 %v1367, %v1372
        %v1375 = vadd.f32 %v1368, %v1373
        %v1377 = vsel %vm1197, 1.0, 0
        %1379 = vmatprep.subr.mxu0 0.0
        %1380 = vmatpush1.msra.mxu0 %v1374
        %1381 = vmatprep.subr.mxu0 0.0
        %1382 = vmatpush1.msra.mxu0 %v1375
        %1383 = vmatprep.subr.mxu0 0.0
        %1384 = vmatpush1.msra.mxu0 0.0
        %1385 = vmatprep.subr.mxu0 0.0
        %1386 = vmatpush1.msra.mxu0 0.0
        %1387 = vmatprep.subr.mxu0 0.0
        %1388 = vmatpush1.msra.mxu0 0.0
        %1389 = vmatprep.subr.mxu0 0.0
        %1390 = vmatpush1.msra.mxu0 0.0
        %1391 = vmatprep.subr.mxu0 0.0
        %1392 = vmatpush1.msra.mxu0 0.0
        %1393 = vmatprep.subr.mxu0 0.0
        %1394 = vmatpush1.msra.mxu0 0.0
        %1395 = vmatprep.subr.mxu0 0.0
        %1396 = vmatpush1.msra.mxu0 0.0
        %1397 = vmatprep.subr.mxu0 0.0
        %1398 = vmatpush1.msra.mxu0 0.0
        %1399 = vmatprep.subr.mxu0 0.0
        %1400 = vmatpush1.msra.mxu0 0.0
        %1401 = vmatprep.subr.mxu0 0.0
        %1402 = vmatpush1.msra.mxu0 0.0
        %1403 = vmatprep.subr.mxu0 0.0
        %1404 = vmatpush1.msra.mxu0 0.0
        %1405 = vmatprep.subr.mxu0 0.0
        %1406 = vmatpush1.msra.mxu0 0.0
        %1407 = vmatprep.subr.mxu0 0.0
        %1408 = vmatpush1.msra.mxu0 0.0
        %1409 = vmatprep.subr.mxu0 0.0
        %1410 = vmatpush1.msra.mxu0 0.0
        %1411 = vmatprep.subr.mxu0 0.0
        %1412 = vmatpush1.msra.mxu0 0.0
        %1413 = vmatprep.subr.mxu0 0.0
        %1414 = vmatpush1.msra.mxu0 0.0
        %1415 = vmatprep.subr.mxu0 0.0
        %1416 = vmatpush1.msra.mxu0 0.0
        %1417 = vmatprep.subr.mxu0 0.0
        %1418 = vmatpush1.msra.mxu0 0.0
        %1419 = vmatprep.subr.mxu0 0.0
        %1420 = vmatpush1.msra.mxu0 0.0
        %1421 = vmatprep.subr.mxu0 0.0
        %1422 = vmatpush1.msra.mxu0 0.0
        %1423 = vmatprep.subr.mxu0 0.0
        %1424 = vmatpush1.msra.mxu0 0.0
        %1425 = vmatprep.subr.mxu0 0.0
        %1426 = vmatpush1.msra.mxu0 0.0
        %1427 = vmatprep.subr.mxu0 0.0
        %1428 = vmatpush1.msra.mxu0 0.0
        %1429 = vmatprep.subr.mxu0 0.0
        %1430 = vmatpush1.msra.mxu0 0.0
        %1431 = vmatprep.subr.mxu0 0.0
        %1432 = vmatpush1.msra.mxu0 0.0
        %1433 = vmatprep.subr.mxu0 0.0
        %1434 = vmatpush1.msra.mxu0 0.0
        %1435 = vmatprep.subr.mxu0 0.0
        %1436 = vmatpush1.msra.mxu0 0.0
        %1437 = vmatprep.subr.mxu0 0.0
        %1438 = vmatpush1.msra.mxu0 0.0
        %1439 = vmatprep.subr.mxu0 0.0
        %1440 = vmatpush1.msra.mxu0 0.0
        %1441 = vmatprep.subr.mxu0 0.0
        %1442 = vmatpush1.msra.mxu0 0.0
        %1443 = vmatprep.mubr.f32.mxu0 0.0
        %1444 = vmatmul.mubr.f32.gmra.mrb[0].mxu0 %v1377
        %v1445 = vpop.f32.mrb[0].mxu0
        %v1446 = vadd.f32 0.0, %v1445
        %v1447 = vpop.f32.mrb[0].mxu0
        %1448 = vdwg.mxu0
        %v1449 = vld [vmem:[#allocation7] sm:$0xff]
        %v1450 = vld [vmem:[#allocation7 + $0x8] sm:$0xff]
        %v1451 = vld [vmem:[#allocation7 + $0x10] sm:$0xff]
        %v1452 = vld [vmem:[#allocation7 + $0x18] sm:$0xff]
        %v1453 = vld [vmem:[%s15] sm:$0x1]
        %s1454 = sld [smem:[#allocation2 + $0x1]]
        %vm1455 = vcmask 261120
        %v1457 = vsel %vm1455, %v1374, 0
        %v1460 = vsel %vm1455, %v1375, 0
        %1462 = vmatprep.subr.mxu0 0.0
        %1463 = vmatpush1.msra.mxu0 %v1449
        %1464 = vmatprep.subr.mxu0 0.0
        %1465 = vmatpush1.msra.mxu0 %v1450
        %1466 = vmatprep.subr.mxu0 0.0
        %1467 = vmatpush1.msra.mxu0 %v1451
        %1468 = vmatprep.subr.mxu0 0.0
        %1469 = vmatpush1.msra.mxu0 %v1452
        %1470 = vmatprep.subr.mxu0 0.0
        %1471 = vmatpush1.msra.mxu0 0.0
        %1472 = vmatprep.subr.mxu0 0.0
        %1473 = vmatpush1.msra.mxu0 0.0
        %1474 = vmatprep.subr.mxu0 0.0
        %1475 = vmatpush1.msra.mxu0 0.0
        %1476 = vmatprep.subr.mxu0 0.0
        %1477 = vmatpush1.msra.mxu0 0.0
        %1478 = vmatprep.subr.mxu0 0.0
        %1479 = vmatpush1.msra.mxu0 0.0
        %1480 = vmatprep.subr.mxu0 0.0
        %1481 = vmatpush1.msra.mxu0 0.0
        %1482 = vmatprep.subr.mxu0 0.0
        %1483 = vmatpush1.msra.mxu0 0.0
        %1484 = vmatprep.subr.mxu0 0.0
        %1485 = vmatpush1.msra.mxu0 0.0
        %1486 = vmatprep.subr.mxu0 0.0
        %1487 = vmatpush1.msra.mxu0 0.0
        %1488 = vmatprep.subr.mxu0 0.0
        %1489 = vmatpush1.msra.mxu0 0.0
        %1490 = vmatprep.subr.mxu0 0.0
        %1491 = vmatpush1.msra.mxu0 0.0
        %1492 = vmatprep.subr.mxu0 0.0
        %1493 = vmatpush1.msra.mxu0 0.0
        %1494 = vmatprep.subr.mxu0 0.0
        %1495 = vmatpush1.msra.mxu0 0.0
        %1496 = vmatprep.subr.mxu0 0.0
        %1497 = vmatpush1.msra.mxu0 0.0
        %1498 = vmatprep.subr.mxu0 0.0
        %1499 = vmatpush1.msra.mxu0 0.0
        %1500 = vmatprep.subr.mxu0 0.0
        %1501 = vmatpush1.msra.mxu0 0.0
        %1502 = vmatprep.subr.mxu0 0.0
        %1503 = vmatpush1.msra.mxu0 0.0
        %1504 = vmatprep.subr.mxu0 0.0
        %1505 = vmatpush1.msra.mxu0 0.0
        %1506 = vmatprep.subr.mxu0 0.0
        %1507 = vmatpush1.msra.mxu0 0.0
        %1508 = vmatprep.subr.mxu0 0.0
        %1509 = vmatpush1.msra.mxu0 0.0
        %1510 = vmatprep.subr.mxu0 0.0
        %1511 = vmatpush1.msra.mxu0 0.0
        %1512 = vmatprep.subr.mxu0 0.0
        %1513 = vmatpush1.msra.mxu0 0.0
        %1514 = vmatprep.subr.mxu0 0.0
        %1515 = vmatpush1.msra.mxu0 0.0
        %1516 = vmatprep.subr.mxu0 0.0
        %1517 = vmatpush1.msra.mxu0 0.0
        %1518 = vmatprep.subr.mxu0 0.0
        %1519 = vmatpush1.msra.mxu0 0.0
        %1520 = vmatprep.subr.mxu0 0.0
        %1521 = vmatpush1.msra.mxu0 0.0
        %1522 = vmatprep.subr.mxu0 0.0
        %1523 = vmatpush1.msra.mxu0 0.0
        %1524 = vmatprep.subr.mxu0 0.0
        %1525 = vmatpush1.msra.mxu0 0.0
        %1526 = vmatprep.mubr.f32.mxu0 0.0
        %1527 = vmatmul.mubr.f32.gmra.mrb[0].mxu0 %v1457
        %v1528 = vpop.f32.mrb[0].mxu0
        %v1529 = vadd.f32 0.0, %v1528
        %v1530 = vpop.f32.mrb[0].mxu0
        %1531 = vmatprep.mubr.f32.mxu0 0.0
        %1532 = vmatmul.mubr.f32.gmra.mrb[0].mxu0 %v1460
        %v1533 = vpop.f32.mrb[0].mxu0
        %v1534 = vadd.f32 0.0, %v1533
        %v1535 = vpop.f32.mrb[0].mxu0
        %1536 = vdwg.mxu0
        %v1538 = vlaneseq
        %v1539 = vshrl.u32 %v1538, 7
        %v1540 = vsub.s32 0, %v1539
        %v1541 = vrot.slane %v1453, %v1540
        %1543 = vmatprep.subr.mxu0 0.0
        %1544 = vmatpush1.msra.mxu0 %v1529
        %1545 = vmatprep.subr.mxu0 0.0
        %1546 = vmatpush1.msra.mxu0 %v1534
        %1547 = vmatprep.subr.mxu0 0.0
        %1548 = vmatpush1.msra.mxu0 0.0
        %1549 = vmatprep.subr.mxu0 0.0
        %1550 = vmatpush1.msra.mxu0 0.0
        %1551 = vmatprep.subr.mxu0 0.0
        %1552 = vmatpush1.msra.mxu0 0.0
        %1553 = vmatprep.subr.mxu0 0.0
        %1554 = vmatpush1.msra.mxu0 0.0
        %1555 = vmatprep.subr.mxu0 0.0
        %1556 = vmatpush1.msra.mxu0 0.0
        %1557 = vmatprep.subr.mxu0 0.0
        %1558 = vmatpush1.msra.mxu0 0.0
        %1559 = vmatprep.subr.mxu0 0.0
        %1560 = vmatpush1.msra.mxu0 0.0
        %1561 = vmatprep.subr.mxu0 0.0
        %1562 = vmatpush1.msra.mxu0 0.0
        %1563 = vmatprep.subr.mxu0 0.0
        %1564 = vmatpush1.msra.mxu0 0.0
        %1565 = vmatprep.subr.mxu0 0.0
        %1566 = vmatpush1.msra.mxu0 0.0
        %1567 = vmatprep.subr.mxu0 0.0
        %1568 = vmatpush1.msra.mxu0 0.0
        %1569 = vmatprep.subr.mxu0 0.0
        %1570 = vmatpush1.msra.mxu0 0.0
        %1571 = vmatprep.subr.mxu0 0.0
        %1572 = vmatpush1.msra.mxu0 0.0
        %1573 = vmatprep.subr.mxu0 0.0
        %1574 = vmatpush1.msra.mxu0 0.0
        %1575 = vmatprep.subr.mxu0 0.0
        %1576 = vmatpush1.msra.mxu0 0.0
        %1577 = vmatprep.subr.mxu0 0.0
        %1578 = vmatpush1.msra.mxu0 0.0
        %1579 = vmatprep.subr.mxu0 0.0
        %1580 = vmatpush1.msra.mxu0 0.0
        %1581 = vmatprep.subr.mxu0 0.0
        %1582 = vmatpush1.msra.mxu0 0.0
        %1583 = vmatprep.subr.mxu0 0.0
        %1584 = vmatpush1.msra.mxu0 0.0
        %1585 = vmatprep.subr.mxu0 0.0
        %1586 = vmatpush1.msra.mxu0 0.0
        %1587 = vmatprep.subr.mxu0 0.0
        %1588 = vmatpush1.msra.mxu0 0.0
        %1589 = vmatprep.subr.mxu0 0.0
        %1590 = vmatpush1.msra.mxu0 0.0
        %1591 = vmatprep.subr.mxu0 0.0
        %1592 = vmatpush1.msra.mxu0 0.0
        %1593 = vmatprep.subr.mxu0 0.0
        %1594 = vmatpush1.msra.mxu0 0.0
        %1595 = vmatprep.subr.mxu0 0.0
        %1596 = vmatpush1.msra.mxu0 0.0
        %1597 = vmatprep.subr.mxu0 0.0
        %1598 = vmatpush1.msra.mxu0 0.0
        %1599 = vmatprep.subr.mxu0 0.0
        %1600 = vmatpush1.msra.mxu0 0.0
        %1601 = vmatprep.subr.mxu0 0.0
        %1602 = vmatpush1.msra.mxu0 0.0
        %1603 = vmatprep.subr.mxu0 0.0
        %1604 = vmatpush1.msra.mxu0 0.0
        %1605 = vmatprep.subr.mxu0 0.0
        %1606 = vmatpush1.msra.mxu0 0.0
        %1607 = vmatprep.mubr.f32.mxu0 0.0
        %1608 = vmatmul.mubr.f32.gmra.mrb[0].mxu0 %v1199
        %v1609 = vpop.f32.mrb[0].mxu0
        %v1610 = vadd.f32 %v1541, %v1609
        %v1611 = vpop.f32.mrb[0].mxu0
        %1612 = vmatprep.mubr.f32.mxu0 0.0
        %1613 = vmatmul.mubr.f32.gmra.mrb[0].mxu0 %v1202
        %v1614 = vpop.f32.mrb[0].mxu0
        %v1615 = vadd.f32 %v1541, %v1614
        %v1616 = vpop.f32.mrb[0].mxu0
        %1617 = vdwg.mxu0
        %v1618 = vmax.f32 %v1610, 0.0
        %v1619 = vmax.f32 %v1615, 0.0
        %v1620 = vmin.f32 %v1610, 0.0
        %v1621 = vmin.f32 %v1615, 0.0
        %v1622 = vstv %s1454
        %v1623 = vmul.f32 %v1622, %v1620
        %v1624 = vmul.f32 %v1622, %v1621
        %v1625 = vadd.f32 %v1618, %v1623
        %v1626 = vadd.f32 %v1619, %v1624
        %1627 = vmatprep.subr.mxu0 0.0
        %1628 = vmatpush1.msra.mxu0 %v1625
        %1629 = vmatprep.subr.mxu0 0.0
        %1630 = vmatpush1.msra.mxu0 %v1626
        %1631 = vmatprep.subr.mxu0 0.0
        %1632 = vmatpush1.msra.mxu0 0.0
        %1633 = vmatprep.subr.mxu0 0.0
        %1634 = vmatpush1.msra.mxu0 0.0
        %1635 = vmatprep.subr.mxu0 0.0
        %1636 = vmatpush1.msra.mxu0 0.0
        %1637 = vmatprep.subr.mxu0 0.0
        %1638 = vmatpush1.msra.mxu0 0.0
        %1639 = vmatprep.subr.mxu0 0.0
        %1640 = vmatpush1.msra.mxu0 0.0
        %1641 = vmatprep.subr.mxu0 0.0
        %1642 = vmatpush1.msra.mxu0 0.0
        %1643 = vmatprep.subr.mxu0 0.0
        %1644 = vmatpush1.msra.mxu0 0.0
        %1645 = vmatprep.subr.mxu0 0.0
        %1646 = vmatpush1.msra.mxu0 0.0
        %1647 = vmatprep.subr.mxu0 0.0
        %1648 = vmatpush1.msra.mxu0 0.0
        %1649 = vmatprep.subr.mxu0 0.0
        %1650 = vmatpush1.msra.mxu0 0.0
        %1651 = vmatprep.subr.mxu0 0.0
        %1652 = vmatpush1.msra.mxu0 0.0
        %1653 = vmatprep.subr.mxu0 0.0
        %1654 = vmatpush1.msra.mxu0 0.0
        %1655 = vmatprep.subr.mxu0 0.0
        %1656 = vmatpush1.msra.mxu0 0.0
        %1657 = vmatprep.subr.mxu0 0.0
        %1658 = vmatpush1.msra.mxu0 0.0
        %1659 = vmatprep.subr.mxu0 0.0
        %1660 = vmatpush1.msra.mxu0 0.0
        %1661 = vmatprep.subr.mxu0 0.0
        %1662 = vmatpush1.msra.mxu0 0.0
        %1663 = vmatprep.subr.mxu0 0.0
        %1664 = vmatpush1.msra.mxu0 0.0
        %1665 = vmatprep.subr.mxu0 0.0
        %1666 = vmatpush1.msra.mxu0 0.0
        %1667 = vmatprep.subr.mxu0 0.0
        %1668 = vmatpush1.msra.mxu0 0.0
        %1669 = vmatprep.subr.mxu0 0.0
        %1670 = vmatpush1.msra.mxu0 0.0
        %1671 = vmatprep.subr.mxu0 0.0
        %1672 = vmatpush1.msra.mxu0 0.0
        %1673 = vmatprep.subr.mxu0 0.0
        %1674 = vmatpush1.msra.mxu0 0.0
        %1675 = vmatprep.subr.mxu0 0.0
        %1676 = vmatpush1.msra.mxu0 0.0
        %1677 = vmatprep.subr.mxu0 0.0
        %1678 = vmatpush1.msra.mxu0 0.0
        %1679 = vmatprep.subr.mxu0 0.0
        %1680 = vmatpush1.msra.mxu0 0.0
        %1681 = vmatprep.subr.mxu0 0.0
        %1682 = vmatpush1.msra.mxu0 0.0
        %1683 = vmatprep.subr.mxu0 0.0
        %1684 = vmatpush1.msra.mxu0 0.0
        %1685 = vmatprep.subr.mxu0 0.0
        %1686 = vmatpush1.msra.mxu0 0.0
        %1687 = vmatprep.subr.mxu0 0.0
        %1688 = vmatpush1.msra.mxu0 0.0
        %1689 = vmatprep.subr.mxu0 0.0
        %1690 = vmatpush1.msra.mxu0 0.0
        %1691 = vmatprep.mubr.f32.mxu0 0.0
        %1692 = vmatmul.mubr.f32.gmra.mrb[0].mxu0 %v1377
        %v1693 = vpop.f32.mrb[0].mxu0
        %v1694 = vadd.f32 0.0, %v1693
        %v1695 = vpop.f32.mrb[0].mxu0
        %1696 = vdwg.mxu0
        %1698 = vrot.lane.b32.xlu0 %v1694, 32
        %v1699 = vpop.permute.xlu0 %1698
        %v1701 = vsel %vm1455, %v1446, %v1699
        %v1702 = vld [vmem:[%s17] sm:$0xff]
        %v1703 = vld [vmem:[%s19] sm:$0x1]
        %s1704 = sld [smem:[#allocation2 + $0x2]]
        %v1706 = vsel %vm1197, %v1192, 0
        %v1709 = vsel %vm1197, %v1193, 0
        %1711 = vmatprep.subr.mxu0 0.0
        %1712 = vmatpush1.msra.mxu0 %v1188
        %1713 = vmatprep.subr.mxu0 0.0
        %1714 = vmatpush1.msra.mxu0 %v1189
        %1715 = vmatprep.subr.mxu0 0.0
        %1716 = vmatpush1.msra.mxu0 0.0
        %1717 = vmatprep.subr.mxu0 0.0
        %1718 = vmatpush1.msra.mxu0 0.0
        %1719 = vmatprep.subr.mxu0 0.0
        %1720 = vmatpush1.msra.mxu0 0.0
        %1721 = vmatprep.subr.mxu0 0.0
        %1722 = vmatpush1.msra.mxu0 0.0
        %1723 = vmatprep.subr.mxu0 0.0
        %1724 = vmatpush1.msra.mxu0 0.0
        %1725 = vmatprep.subr.mxu0 0.0
        %1726 = vmatpush1.msra.mxu0 0.0
        %1727 = vmatprep.subr.mxu0 0.0
        %1728 = vmatpush1.msra.mxu0 0.0
        %1729 = vmatprep.subr.mxu0 0.0
        %1730 = vmatpush1.msra.mxu0 0.0
        %1731 = vmatprep.subr.mxu0 0.0
        %1732 = vmatpush1.msra.mxu0 0.0
        %1733 = vmatprep.subr.mxu0 0.0
        %1734 = vmatpush1.msra.mxu0 0.0
        %1735 = vmatprep.subr.mxu0 0.0
        %1736 = vmatpush1.msra.mxu0 0.0
        %1737 = vmatprep.subr.mxu0 0.0
        %1738 = vmatpush1.msra.mxu0 0.0
        %1739 = vmatprep.subr.mxu0 0.0
        %1740 = vmatpush1.msra.mxu0 0.0
        %1741 = vmatprep.subr.mxu0 0.0
        %1742 = vmatpush1.msra.mxu0 0.0
        %1743 = vmatprep.subr.mxu0 0.0
        %1744 = vmatpush1.msra.mxu0 0.0
        %1745 = vmatprep.subr.mxu0 0.0
        %1746 = vmatpush1.msra.mxu0 0.0
        %1747 = vmatprep.subr.mxu0 0.0
        %1748 = vmatpush1.msra.mxu0 0.0
        %1749 = vmatprep.subr.mxu0 0.0
        %1750 = vmatpush1.msra.mxu0 0.0
        %1751 = vmatprep.subr.mxu0 0.0
        %1752 = vmatpush1.msra.mxu0 0.0
        %1753 = vmatprep.subr.mxu0 0.0
        %1754 = vmatpush1.msra.mxu0 0.0
        %1755 = vmatprep.subr.mxu0 0.0
        %1756 = vmatpush1.msra.mxu0 0.0
        %1757 = vmatprep.subr.mxu0 0.0
        %1758 = vmatpush1.msra.mxu0 0.0
        %1759 = vmatprep.subr.mxu0 0.0
        %1760 = vmatpush1.msra.mxu0 0.0
        %1761 = vmatprep.subr.mxu0 0.0
        %1762 = vmatpush1.msra.mxu0 0.0
        %1763 = vmatprep.subr.mxu0 0.0
        %1764 = vmatpush1.msra.mxu0 0.0
        %1765 = vmatprep.subr.mxu0 0.0
        %1766 = vmatpush1.msra.mxu0 0.0
        %1767 = vmatprep.subr.mxu0 0.0
        %1768 = vmatpush1.msra.mxu0 0.0
        %1769 = vmatprep.subr.mxu0 0.0
        %1770 = vmatpush1.msra.mxu0 0.0
        %1771 = vmatprep.subr.mxu0 0.0
        %1772 = vmatpush1.msra.mxu0 0.0
        %1773 = vmatprep.subr.mxu0 0.0
        %1774 = vmatpush1.msra.mxu0 0.0
        %1775 = vmatprep.mubr.f32.mxu0 0.0
        %1776 = vmatmul.mubr.f32.gmra.mrb[0].mxu0 %v1706
        %v1777 = vpop.f32.mrb[0].mxu0
        %v1778 = vadd.f32 0.0, %v1777
        %v1779 = vpop.f32.mrb[0].mxu0
        %1780 = vmatprep.mubr.f32.mxu0 0.0
        %1781 = vmatmul.mubr.f32.gmra.mrb[0].mxu0 %v1709
        %v1782 = vpop.f32.mrb[0].mxu0
        %v1783 = vadd.f32 0.0, %v1782
        %v1784 = vpop.f32.mrb[0].mxu0
        %1785 = vdwg.mxu0
        %v1787 = vlaneseq
        %v1788 = vshrl.u32 %v1787, 7
        %v1789 = vsub.s32 0, %v1788
        %v1790 = vrot.slane %v1703, %v1789
        %v1793 = vsel %vm1285, %v1778, 0
        %v1796 = vsel %vm1285, %v1783, 0
        %1798 = vmatprep.subr.mxu0 0.0
        %1799 = vmatpush1.msra.mxu0 %v1702
        %1800 = vmatprep.subr.mxu0 0.0
        %1801 = vmatpush1.msra.mxu0 0.0
        %1802 = vmatprep.subr.mxu0 0.0
        %1803 = vmatpush1.msra.mxu0 0.0
        %1804 = vmatprep.subr.mxu0 0.0
        %1805 = vmatpush1.msra.mxu0 0.0
        %1806 = vmatprep.subr.mxu0 0.0
        %1807 = vmatpush1.msra.mxu0 0.0
        %1808 = vmatprep.subr.mxu0 0.0
        %1809 = vmatpush1.msra.mxu0 0.0
        %1810 = vmatprep.subr.mxu0 0.0
        %1811 = vmatpush1.msra.mxu0 0.0
        %1812 = vmatprep.subr.mxu0 0.0
        %1813 = vmatpush1.msra.mxu0 0.0
        %1814 = vmatprep.subr.mxu0 0.0
        %1815 = vmatpush1.msra.mxu0 0.0
        %1816 = vmatprep.subr.mxu0 0.0
        %1817 = vmatpush1.msra.mxu0 0.0
        %1818 = vmatprep.subr.mxu0 0.0
        %1819 = vmatpush1.msra.mxu0 0.0
        %1820 = vmatprep.subr.mxu0 0.0
        %1821 = vmatpush1.msra.mxu0 0.0
        %1822 = vmatprep.subr.mxu0 0.0
        %1823 = vmatpush1.msra.mxu0 0.0
        %1824 = vmatprep.subr.mxu0 0.0
        %1825 = vmatpush1.msra.mxu0 0.0
        %1826 = vmatprep.subr.mxu0 0.0
        %1827 = vmatpush1.msra.mxu0 0.0
        %1828 = vmatprep.subr.mxu0 0.0
        %1829 = vmatpush1.msra.mxu0 0.0
        %1830 = vmatprep.subr.mxu0 0.0
        %1831 = vmatpush1.msra.mxu0 0.0
        %1832 = vmatprep.subr.mxu0 0.0
        %1833 = vmatpush1.msra.mxu0 0.0
        %1834 = vmatprep.subr.mxu0 0.0
        %1835 = vmatpush1.msra.mxu0 0.0
        %1836 = vmatprep.subr.mxu0 0.0
        %1837 = vmatpush1.msra.mxu0 0.0
        %1838 = vmatprep.subr.mxu0 0.0
        %1839 = vmatpush1.msra.mxu0 0.0
        %1840 = vmatprep.subr.mxu0 0.0
        %1841 = vmatpush1.msra.mxu0 0.0
        %1842 = vmatprep.subr.mxu0 0.0
        %1843 = vmatpush1.msra.mxu0 0.0
        %1844 = vmatprep.subr.mxu0 0.0
        %1845 = vmatpush1.msra.mxu0 0.0
        %1846 = vmatprep.subr.mxu0 0.0
        %1847 = vmatpush1.msra.mxu0 0.0
        %1848 = vmatprep.subr.mxu0 0.0
        %1849 = vmatpush1.msra.mxu0 0.0
        %1850 = vmatprep.subr.mxu0 0.0
        %1851 = vmatpush1.msra.mxu0 0.0
        %1852 = vmatprep.subr.mxu0 0.0
        %1853 = vmatpush1.msra.mxu0 0.0
        %1854 = vmatprep.subr.mxu0 0.0
        %1855 = vmatpush1.msra.mxu0 0.0
        %1856 = vmatprep.subr.mxu0 0.0
        %1857 = vmatpush1.msra.mxu0 0.0
        %1858 = vmatprep.subr.mxu0 0.0
        %1859 = vmatpush1.msra.mxu0 0.0
        %1860 = vmatprep.subr.mxu0 0.0
        %1861 = vmatpush1.msra.mxu0 0.0
        %1862 = vmatprep.mubr.f32.mxu0 0.0
        %1863 = vmatmul.mubr.f32.gmra.mrb[0].mxu0 %v1793
        %v1864 = vpop.f32.mrb[0].mxu0
        %v1865 = vadd.f32 %v1790, %v1864
        %v1866 = vpop.f32.mrb[0].mxu0
        %1867 = vmatprep.mubr.f32.mxu0 0.0
        %1868 = vmatmul.mubr.f32.gmra.mrb[0].mxu0 %v1796
        %v1869 = vpop.f32.mrb[0].mxu0
        %v1870 = vadd.f32 %v1790, %v1869
        %v1871 = vpop.f32.mrb[0].mxu0
        %1872 = vdwg.mxu0
        %v1873 = vmax.f32 %v1865, 0.0
        %v1874 = vmax.f32 %v1870, 0.0
        %v1875 = vmin.f32 %v1865, 0.0
        %v1876 = vmin.f32 %v1870, 0.0
        %v1877 = vstv %s1704
        %v1878 = vmul.f32 %v1877, %v1875
        %v1879 = vmul.f32 %v1877, %v1876
        %v1880 = vadd.f32 %v1873, %v1878
        %v1881 = vadd.f32 %v1874, %v1879
        %1882 = vmatprep.subr.mxu0 0.0
        %1883 = vmatpush1.msra.mxu0 %v1880
        %1884 = vmatprep.subr.mxu0 0.0
        %1885 = vmatpush1.msra.mxu0 %v1881
        %1886 = vmatprep.subr.mxu0 0.0
        %1887 = vmatpush1.msra.mxu0 0.0
        %1888 = vmatprep.subr.mxu0 0.0
        %1889 = vmatpush1.msra.mxu0 0.0
        %1890 = vmatprep.subr.mxu0 0.0
        %1891 = vmatpush1.msra.mxu0 0.0
        %1892 = vmatprep.subr.mxu0 0.0
        %1893 = vmatpush1.msra.mxu0 0.0
        %1894 = vmatprep.subr.mxu0 0.0
        %1895 = vmatpush1.msra.mxu0 0.0
        %1896 = vmatprep.subr.mxu0 0.0
        %1897 = vmatpush1.msra.mxu0 0.0
        %1898 = vmatprep.subr.mxu0 0.0
        %1899 = vmatpush1.msra.mxu0 0.0
        %1900 = vmatprep.subr.mxu0 0.0
        %1901 = vmatpush1.msra.mxu0 0.0
        %1902 = vmatprep.subr.mxu0 0.0
        %1903 = vmatpush1.msra.mxu0 0.0
        %1904 = vmatprep.subr.mxu0 0.0
        %1905 = vmatpush1.msra.mxu0 0.0
        %1906 = vmatprep.subr.mxu0 0.0
        %1907 = vmatpush1.msra.mxu0 0.0
        %1908 = vmatprep.subr.mxu0 0.0
        %1909 = vmatpush1.msra.mxu0 0.0
        %1910 = vmatprep.subr.mxu0 0.0
        %1911 = vmatpush1.msra.mxu0 0.0
        %1912 = vmatprep.subr.mxu0 0.0
        %1913 = vmatpush1.msra.mxu0 0.0
        %1914 = vmatprep.subr.mxu0 0.0
        %1915 = vmatpush1.msra.mxu0 0.0
        %1916 = vmatprep.subr.mxu0 0.0
        %1917 = vmatpush1.msra.mxu0 0.0
        %1918 = vmatprep.subr.mxu0 0.0
        %1919 = vmatpush1.msra.mxu0 0.0
        %1920 = vmatprep.subr.mxu0 0.0
        %1921 = vmatpush1.msra.mxu0 0.0
        %1922 = vmatprep.subr.mxu0 0.0
        %1923 = vmatpush1.msra.mxu0 0.0
        %1924 = vmatprep.subr.mxu0 0.0
        %1925 = vmatpush1.msra.mxu0 0.0
        %1926 = vmatprep.subr.mxu0 0.0
        %1927 = vmatpush1.msra.mxu0 0.0
        %1928 = vmatprep.subr.mxu0 0.0
        %1929 = vmatpush1.msra.mxu0 0.0
        %1930 = vmatprep.subr.mxu0 0.0
        %1931 = vmatpush1.msra.mxu0 0.0
        %1932 = vmatprep.subr.mxu0 0.0
        %1933 = vmatpush1.msra.mxu0 0.0
        %1934 = vmatprep.subr.mxu0 0.0
        %1935 = vmatpush1.msra.mxu0 0.0
        %1936 = vmatprep.subr.mxu0 0.0
        %1937 = vmatpush1.msra.mxu0 0.0
        %1938 = vmatprep.subr.mxu0 0.0
        %1939 = vmatpush1.msra.mxu0 0.0
        %1940 = vmatprep.subr.mxu0 0.0
        %1941 = vmatpush1.msra.mxu0 0.0
        %1942 = vmatprep.subr.mxu0 0.0
        %1943 = vmatpush1.msra.mxu0 0.0
        %1944 = vmatprep.subr.mxu0 0.0
        %1945 = vmatpush1.msra.mxu0 0.0
        %1946 = vmatprep.mubr.f32.mxu0 0.0
        %1947 = vmatmul.mubr.f32.gmra.mrb[0].mxu0 %v1377
        %v1948 = vpop.f32.mrb[0].mxu0
        %v1949 = vadd.f32 0.0, %v1948
        %v1950 = vpop.f32.mrb[0].mxu0
        %1951 = vdwg.mxu0
        %v1952 = vld [vmem:[#allocation9] sm:$0xff]
        %v1953 = vld [vmem:[#allocation9 + $0x8] sm:$0xff]
        %v1954 = vld [vmem:[#allocation9 + $0x10] sm:$0xff]
        %v1955 = vld [vmem:[#allocation9 + $0x18] sm:$0xff]
        %v1956 = vld [vmem:[%s23] sm:$0x1]
        %s1957 = sld [smem:[#allocation2 + $0x3]]
        %v1959 = vsel %vm1455, %v1880, 0
        %v1962 = vsel %vm1455, %v1881, 0
        %1964 = vmatprep.subr.mxu0 0.0
        %1965 = vmatpush1.msra.mxu0 %v1952
        %1966 = vmatprep.subr.mxu0 0.0
        %1967 = vmatpush1.msra.mxu0 %v1953
        %1968 = vmatprep.subr.mxu0 0.0
        %1969 = vmatpush1.msra.mxu0 %v1954
        %1970 = vmatprep.subr.mxu0 0.0
        %1971 = vmatpush1.msra.mxu0 %v1955
        %1972 = vmatprep.subr.mxu0 0.0
        %1973 = vmatpush1.msra.mxu0 0.0
        %1974 = vmatprep.subr.mxu0 0.0
        %1975 = vmatpush1.msra.mxu0 0.0
        %1976 = vmatprep.subr.mxu0 0.0
        %1977 = vmatpush1.msra.mxu0 0.0
        %1978 = vmatprep.subr.mxu0 0.0
        %1979 = vmatpush1.msra.mxu0 0.0
        %1980 = vmatprep.subr.mxu0 0.0
        %1981 = vmatpush1.msra.mxu0 0.0
        %1982 = vmatprep.subr.mxu0 0.0
        %1983 = vmatpush1.msra.mxu0 0.0
        %1984 = vmatprep.subr.mxu0 0.0
        %1985 = vmatpush1.msra.mxu0 0.0
        %1986 = vmatprep.subr.mxu0 0.0
        %1987 = vmatpush1.msra.mxu0 0.0
        %1988 = vmatprep.subr.mxu0 0.0
        %1989 = vmatpush1.msra.mxu0 0.0
        %1990 = vmatprep.subr.mxu0 0.0
        %1991 = vmatpush1.msra.mxu0 0.0
        %1992 = vmatprep.subr.mxu0 0.0
        %1993 = vmatpush1.msra.mxu0 0.0
        %1994 = vmatprep.subr.mxu0 0.0
        %1995 = vmatpush1.msra.mxu0 0.0
        %1996 = vmatprep.subr.mxu0 0.0
        %1997 = vmatpush1.msra.mxu0 0.0
        %1998 = vmatprep.subr.mxu0 0.0
        %1999 = vmatpush1.msra.mxu0 0.0
        %2000 = vmatprep.subr.mxu0 0.0
        %2001 = vmatpush1.msra.mxu0 0.0
        %2002 = vmatprep.subr.mxu0 0.0
        %2003 = vmatpush1.msra.mxu0 0.0
        %2004 = vmatprep.subr.mxu0 0.0
        %2005 = vmatpush1.msra.mxu0 0.0
        %2006 = vmatprep.subr.mxu0 0.0
        %2007 = vmatpush1.msra.mxu0 0.0
        %2008 = vmatprep.subr.mxu0 0.0
        %2009 = vmatpush1.msra.mxu0 0.0
        %2010 = vmatprep.subr.mxu0 0.0
        %2011 = vmatpush1.msra.mxu0 0.0
        %2012 = vmatprep.subr.mxu0 0.0
        %2013 = vmatpush1.msra.mxu0 0.0
        %2014 = vmatprep.subr.mxu0 0.0
        %2015 = vmatpush1.msra.mxu0 0.0
        %2016 = vmatprep.subr.mxu0 0.0
        %2017 = vmatpush1.msra.mxu0 0.0
        %2018 = vmatprep.subr.mxu0 0.0
        %2019 = vmatpush1.msra.mxu0 0.0
        %2020 = vmatprep.subr.mxu0 0.0
        %2021 = vmatpush1.msra.mxu0 0.0
        %2022 = vmatprep.subr.mxu0 0.0
        %2023 = vmatpush1.msra.mxu0 0.0
        %2024 = vmatprep.subr.mxu0 0.0
        %2025 = vmatpush1.msra.mxu0 0.0
        %2026 = vmatprep.subr.mxu0 0.0
        %2027 = vmatpush1.msra.mxu0 0.0
        %2028 = vmatprep.mubr.f32.mxu0 0.0
        %2029 = vmatmul.mubr.f32.gmra.mrb[0].mxu0 %v1959
        %v2030 = vpop.f32.mrb[0].mxu0
        %v2031 = vadd.f32 0.0, %v2030
        %v2032 = vpop.f32.mrb[0].mxu0
        %2033 = vmatprep.mubr.f32.mxu0 0.0
        %2034 = vmatmul.mubr.f32.gmra.mrb[0].mxu0 %v1962
        %v2035 = vpop.f32.mrb[0].mxu0
        %v2036 = vadd.f32 0.0, %v2035
        %v2037 = vpop.f32.mrb[0].mxu0
        %2038 = vdwg.mxu0
        %v2040 = vlaneseq
        %v2041 = vshrl.u32 %v2040, 7
        %v2042 = vsub.s32 0, %v2041
        %v2043 = vrot.slane %v1956, %v2042
        %2045 = vmatprep.subr.mxu0 0.0
        %2046 = vmatpush1.msra.mxu0 %v2031
        %2047 = vmatprep.subr.mxu0 0.0
        %2048 = vmatpush1.msra.mxu0 %v2036
        %2049 = vmatprep.subr.mxu0 0.0
        %2050 = vmatpush1.msra.mxu0 0.0
        %2051 = vmatprep.subr.mxu0 0.0
        %2052 = vmatpush1.msra.mxu0 0.0
        %2053 = vmatprep.subr.mxu0 0.0
        %2054 = vmatpush1.msra.mxu0 0.0
        %2055 = vmatprep.subr.mxu0 0.0
        %2056 = vmatpush1.msra.mxu0 0.0
        %2057 = vmatprep.subr.mxu0 0.0
        %2058 = vmatpush1.msra.mxu0 0.0
        %2059 = vmatprep.subr.mxu0 0.0
        %2060 = vmatpush1.msra.mxu0 0.0
        %2061 = vmatprep.subr.mxu0 0.0
        %2062 = vmatpush1.msra.mxu0 0.0
        %2063 = vmatprep.subr.mxu0 0.0
        %2064 = vmatpush1.msra.mxu0 0.0
        %2065 = vmatprep.subr.mxu0 0.0
        %2066 = vmatpush1.msra.mxu0 0.0
        %2067 = vmatprep.subr.mxu0 0.0
        %2068 = vmatpush1.msra.mxu0 0.0
        %2069 = vmatprep.subr.mxu0 0.0
        %2070 = vmatpush1.msra.mxu0 0.0
        %2071 = vmatprep.subr.mxu0 0.0
        %2072 = vmatpush1.msra.mxu0 0.0
        %2073 = vmatprep.subr.mxu0 0.0
        %2074 = vmatpush1.msra.mxu0 0.0
        %2075 = vmatprep.subr.mxu0 0.0
        %2076 = vmatpush1.msra.mxu0 0.0
        %2077 = vmatprep.subr.mxu0 0.0
        %2078 = vmatpush1.msra.mxu0 0.0
        %2079 = vmatprep.subr.mxu0 0.0
        %2080 = vmatpush1.msra.mxu0 0.0
        %2081 = vmatprep.subr.mxu0 0.0
        %2082 = vmatpush1.msra.mxu0 0.0
        %2083 = vmatprep.subr.mxu0 0.0
        %2084 = vmatpush1.msra.mxu0 0.0
        %2085 = vmatprep.subr.mxu0 0.0
        %2086 = vmatpush1.msra.mxu0 0.0
        %2087 = vmatprep.subr.mxu0 0.0
        %2088 = vmatpush1.msra.mxu0 0.0
        %2089 = vmatprep.subr.mxu0 0.0
        %2090 = vmatpush1.msra.mxu0 0.0
        %2091 = vmatprep.subr.mxu0 0.0
        %2092 = vmatpush1.msra.mxu0 0.0
        %2093 = vmatprep.subr.mxu0 0.0
        %2094 = vmatpush1.msra.mxu0 0.0
        %2095 = vmatprep.subr.mxu0 0.0
        %2096 = vmatpush1.msra.mxu0 0.0
        %2097 = vmatprep.subr.mxu0 0.0
        %2098 = vmatpush1.msra.mxu0 0.0
        %2099 = vmatprep.subr.mxu0 0.0
        %2100 = vmatpush1.msra.mxu0 0.0
        %2101 = vmatprep.subr.mxu0 0.0
        %2102 = vmatpush1.msra.mxu0 0.0
        %2103 = vmatprep.subr.mxu0 0.0
        %2104 = vmatpush1.msra.mxu0 0.0
        %2105 = vmatprep.subr.mxu0 0.0
        %2106 = vmatpush1.msra.mxu0 0.0
        %2107 = vmatprep.subr.mxu0 0.0
        %2108 = vmatpush1.msra.mxu0 0.0
        %2109 = vmatprep.mubr.f32.mxu0 0.0
        %2110 = vmatmul.mubr.f32.gmra.mrb[0].mxu0 %v1706
        %v2111 = vpop.f32.mrb[0].mxu0
        %v2112 = vadd.f32 %v2043, %v2111
        %v2113 = vpop.f32.mrb[0].mxu0
        %2114 = vmatprep.mubr.f32.mxu0 0.0
        %2115 = vmatmul.mubr.f32.gmra.mrb[0].mxu0 %v1709
        %v2116 = vpop.f32.mrb[0].mxu0
        %v2117 = vadd.f32 %v2043, %v2116
        %v2118 = vpop.f32.mrb[0].mxu0
        %2119 = vdwg.mxu0
        %v2120 = vmax.f32 %v2112, 0.0
        %v2121 = vmax.f32 %v2117, 0.0
        %v2122 = vmin.f32 %v2112, 0.0
        %v2123 = vmin.f32 %v2117, 0.0
        %v2124 = vstv %s1957
        %v2125 = vmul.f32 %v2124, %v2122
        %v2126 = vmul.f32 %v2124, %v2123
        %v2127 = vadd.f32 %v2120, %v2125
        %v2128 = vadd.f32 %v2121, %v2126
        %2129 = vmatprep.subr.mxu0 0.0
        %2130 = vmatpush1.msra.mxu0 %v2127
        %2131 = vmatprep.subr.mxu0 0.0
        %2132 = vmatpush1.msra.mxu0 %v2128
        %2133 = vmatprep.subr.mxu0 0.0
        %2134 = vmatpush1.msra.mxu0 0.0
        %2135 = vmatprep.subr.mxu0 0.0
        %2136 = vmatpush1.msra.mxu0 0.0
        %2137 = vmatprep.subr.mxu0 0.0
        %2138 = vmatpush1.msra.mxu0 0.0
        %2139 = vmatprep.subr.mxu0 0.0
        %2140 = vmatpush1.msra.mxu0 0.0
        %2141 = vmatprep.subr.mxu0 0.0
        %2142 = vmatpush1.msra.mxu0 0.0
        %2143 = vmatprep.subr.mxu0 0.0
        %2144 = vmatpush1.msra.mxu0 0.0
        %2145 = vmatprep.subr.mxu0 0.0
        %2146 = vmatpush1.msra.mxu0 0.0
        %2147 = vmatprep.subr.mxu0 0.0
        %2148 = vmatpush1.msra.mxu0 0.0
        %2149 = vmatprep.subr.mxu0 0.0
        %2150 = vmatpush1.msra.mxu0 0.0
        %2151 = vmatprep.subr.mxu0 0.0
        %2152 = vmatpush1.msra.mxu0 0.0
        %2153 = vmatprep.subr.mxu0 0.0
        %2154 = vmatpush1.msra.mxu0 0.0
        %2155 = vmatprep.subr.mxu0 0.0
        %2156 = vmatpush1.msra.mxu0 0.0
        %2157 = vmatprep.subr.mxu0 0.0
        %2158 = vmatpush1.msra.mxu0 0.0
        %2159 = vmatprep.subr.mxu0 0.0
        %2160 = vmatpush1.msra.mxu0 0.0
        %2161 = vmatprep.subr.mxu0 0.0
        %2162 = vmatpush1.msra.mxu0 0.0
        %2163 = vmatprep.subr.mxu0 0.0
        %2164 = vmatpush1.msra.mxu0 0.0
        %2165 = vmatprep.subr.mxu0 0.0
        %2166 = vmatpush1.msra.mxu0 0.0
        %2167 = vmatprep.subr.mxu0 0.0
        %2168 = vmatpush1.msra.mxu0 0.0
        %2169 = vmatprep.subr.mxu0 0.0
        %2170 = vmatpush1.msra.mxu0 0.0
        %2171 = vmatprep.subr.mxu0 0.0
        %2172 = vmatpush1.msra.mxu0 0.0
        %2173 = vmatprep.subr.mxu0 0.0
        %2174 = vmatpush1.msra.mxu0 0.0
        %2175 = vmatprep.subr.mxu0 0.0
        %2176 = vmatpush1.msra.mxu0 0.0
        %2177 = vmatprep.subr.mxu0 0.0
        %2178 = vmatpush1.msra.mxu0 0.0
        %2179 = vmatprep.subr.mxu0 0.0
        %2180 = vmatpush1.msra.mxu0 0.0
        %2181 = vmatprep.subr.mxu0 0.0
        %2182 = vmatpush1.msra.mxu0 0.0
        %2183 = vmatprep.subr.mxu0 0.0
        %2184 = vmatpush1.msra.mxu0 0.0
        %2185 = vmatprep.subr.mxu0 0.0
        %2186 = vmatpush1.msra.mxu0 0.0
        %2187 = vmatprep.subr.mxu0 0.0
        %2188 = vmatpush1.msra.mxu0 0.0
        %2189 = vmatprep.subr.mxu0 0.0
        %2190 = vmatpush1.msra.mxu0 0.0
        %2191 = vmatprep.subr.mxu0 0.0
        %2192 = vmatpush1.msra.mxu0 0.0
        %2193 = vmatprep.mubr.f32.mxu0 0.0
        %2194 = vmatmul.mubr.f32.gmra.mrb[0].mxu0 %v1377
        %v2195 = vpop.f32.mrb[0].mxu0
        %v2196 = vadd.f32 0.0, %v2195
        %v2197 = vpop.f32.mrb[0].mxu0
        %2198 = vdwg.mxu0
        %2200 = vrot.lane.b32.xlu0 %v2196, 32
        %v2201 = vpop.permute.xlu0 %2200
        %v2203 = vsel %vm1455, %v1949, %v2201
        %v2204 = vld [vmem:[#allocation10] sm:$0xff]
        %v2205 = vld [vmem:[#allocation10 + $0x8] sm:$0xff]
        %v2206 = vld [vmem:[#allocation10 + $0x10] sm:$0xff]
        %v2207 = vld [vmem:[#allocation10 + $0x18] sm:$0xff]
        %v2208 = vld [vmem:[%s27] sm:$0x1]
        %v2210 = vlaneseq
        %v2211 = vshrl.u32 %v2210, 7
        %v2212 = vsub.s32 0, %v2211
        %v2213 = vrot.slane %v2208, %v2212
        %v2216 = vsel %vm1455, %v1625, 0
        %v2219 = vsel %vm1455, %v1626, 0
        %v2222 = vsel %vm1455, %v2127, 0
        %v2225 = vsel %vm1455, %v2128, 0
        %2227 = vmatprep.subr.mxu0 0.0
        %2228 = vmatpush1.msra.mxu0 %v2204
        %2229 = vmatprep.subr.mxu0 0.0
        %2230 = vmatpush1.msra.mxu0 %v2205
        %2231 = vmatprep.subr.mxu0 0.0
        %2232 = vmatpush1.msra.mxu0 %v2206
        %2233 = vmatprep.subr.mxu0 0.0
        %2234 = vmatpush1.msra.mxu0 %v2207
        %2235 = vmatprep.subr.mxu0 0.0
        %2236 = vmatpush1.msra.mxu0 0.0
        %2237 = vmatprep.subr.mxu0 0.0
        %2238 = vmatpush1.msra.mxu0 0.0
        %2239 = vmatprep.subr.mxu0 0.0
        %2240 = vmatpush1.msra.mxu0 0.0
        %2241 = vmatprep.subr.mxu0 0.0
        %2242 = vmatpush1.msra.mxu0 0.0
        %2243 = vmatprep.subr.mxu0 0.0
        %2244 = vmatpush1.msra.mxu0 0.0
        %2245 = vmatprep.subr.mxu0 0.0
        %2246 = vmatpush1.msra.mxu0 0.0
        %2247 = vmatprep.subr.mxu0 0.0
        %2248 = vmatpush1.msra.mxu0 0.0
        %2249 = vmatprep.subr.mxu0 0.0
        %2250 = vmatpush1.msra.mxu0 0.0
        %2251 = vmatprep.subr.mxu0 0.0
        %2252 = vmatpush1.msra.mxu0 0.0
        %2253 = vmatprep.subr.mxu0 0.0
        %2254 = vmatpush1.msra.mxu0 0.0
        %2255 = vmatprep.subr.mxu0 0.0
        %2256 = vmatpush1.msra.mxu0 0.0
        %2257 = vmatprep.subr.mxu0 0.0
        %2258 = vmatpush1.msra.mxu0 0.0
        %2259 = vmatprep.subr.mxu0 0.0
        %2260 = vmatpush1.msra.mxu0 0.0
        %2261 = vmatprep.subr.mxu0 0.0
        %2262 = vmatpush1.msra.mxu0 0.0
        %2263 = vmatprep.subr.mxu0 0.0
        %2264 = vmatpush1.msra.mxu0 0.0
        %2265 = vmatprep.subr.mxu0 0.0
        %2266 = vmatpush1.msra.mxu0 0.0
        %2267 = vmatprep.subr.mxu0 0.0
        %2268 = vmatpush1.msra.mxu0 0.0
        %2269 = vmatprep.subr.mxu0 0.0
        %2270 = vmatpush1.msra.mxu0 0.0
        %2271 = vmatprep.subr.mxu0 0.0
        %2272 = vmatpush1.msra.mxu0 0.0
        %2273 = vmatprep.subr.mxu0 0.0
        %2274 = vmatpush1.msra.mxu0 0.0
        %2275 = vmatprep.subr.mxu0 0.0
        %2276 = vmatpush1.msra.mxu0 0.0
        %2277 = vmatprep.subr.mxu0 0.0
        %2278 = vmatpush1.msra.mxu0 0.0
        %2279 = vmatprep.subr.mxu0 0.0
        %2280 = vmatpush1.msra.mxu0 0.0
        %2281 = vmatprep.subr.mxu0 0.0
        %2282 = vmatpush1.msra.mxu0 0.0
        %2283 = vmatprep.subr.mxu0 0.0
        %2284 = vmatpush1.msra.mxu0 0.0
        %2285 = vmatprep.subr.mxu0 0.0
        %2286 = vmatpush1.msra.mxu0 0.0
        %2287 = vmatprep.subr.mxu0 0.0
        %2288 = vmatpush1.msra.mxu0 0.0
        %2289 = vmatprep.subr.mxu0 0.0
        %2290 = vmatpush1.msra.mxu0 0.0
        %2291 = vmatprep.mubr.f32.mxu0 0.0
        %2292 = vmatmul.mubr.f32.gmra.mrb[0].mxu0 %v2216
        %v2293 = vpop.f32.mrb[0].mxu0
        %v2294 = vadd.f32 %v2213, %v2293
        %v2295 = vpop.f32.mrb[0].mxu0
        %2296 = vmatprep.mubr.f32.mxu0 0.0
        %2297 = vmatmul.mubr.f32.gmra.mrb[0].mxu0 %v2219
        %v2298 = vpop.f32.mrb[0].mxu0
        %v2299 = vadd.f32 %v2213, %v2298
        %v2300 = vpop.f32.mrb[0].mxu0
        %2301 = vmatprep.mubr.f32.mxu0 0.0
        %2302 = vmatmul.mubr.f32.gmra.mrb[0].mxu0 %v2222
        %v2303 = vpop.f32.mrb[0].mxu0
        %v2304 = vadd.f32 %v2213, %v2303
        %v2305 = vpop.f32.mrb[0].mxu0
        %2306 = vmatprep.mubr.f32.mxu0 0.0
        %2307 = vmatmul.mubr.f32.gmra.mrb[0].mxu0 %v2225
        %v2308 = vpop.f32.mrb[0].mxu0
        %v2309 = vadd.f32 %v2213, %v2308
        %v2310 = vpop.f32.mrb[0].mxu0
        %2311 = vdwg.mxu0
        %s2312 = sld [smem:[#allocation2 + $0x4]]
        %v2313 = vmax.f32 %v2294, 0.0
        %v2314 = vmax.f32 %v2299, 0.0
        %v2315 = vmax.f32 %v2304, 0.0
        %v2316 = vmax.f32 %v2309, 0.0
        %v2317 = vmin.f32 %v2294, 0.0
        %v2318 = vmin.f32 %v2299, 0.0
        %v2319 = vmin.f32 %v2304, 0.0
        %v2320 = vmin.f32 %v2309, 0.0
        %v2321 = vstv %s2312
        %v2322 = vmul.f32 %v2321, %v2317
        %v2323 = vmul.f32 %v2321, %v2318
        %v2324 = vmul.f32 %v2321, %v2319
        %v2325 = vmul.f32 %v2321, %v2320
        %v2326 = vadd.f32 %v2313, %v2322
        %v2327 = vadd.f32 %v2314, %v2323
        %v2328 = vadd.f32 %v2315, %v2324
        %v2329 = vadd.f32 %v2316, %v2325
        %v2330 = vld [vmem:[#allocation12] sm:$0xff]
        %v2331 = vld [vmem:[#allocation12 + $0x8] sm:$0xff]
        %v2332 = vld [vmem:[#allocation12 + $0x10] sm:$0xff]
        %v2333 = vld [vmem:[#allocation12 + $0x18] sm:$0xff]
        %v2334 = vld [vmem:[%s31] sm:$0x1]
        %v2336 = vlaneseq
        %v2337 = vshrl.u32 %v2336, 7
        %v2338 = vsub.s32 0, %v2337
        %v2339 = vrot.slane %v2334, %v2338
        %v2342 = vsel %vm1455, %v2326, 0
        %v2345 = vsel %vm1455, %v2327, 0
        %v2348 = vsel %vm1455, %v2328, 0
        %v2351 = vsel %vm1455, %v2329, 0
        %2353 = vmatprep.subr.mxu0 0.0
        %2354 = vmatpush1.msra.mxu0 %v2330
        %2355 = vmatprep.subr.mxu0 0.0
        %2356 = vmatpush1.msra.mxu0 %v2331
        %2357 = vmatprep.subr.mxu0 0.0
        %2358 = vmatpush1.msra.mxu0 %v2332
        %2359 = vmatprep.subr.mxu0 0.0
        %2360 = vmatpush1.msra.mxu0 %v2333
        %2361 = vmatprep.subr.mxu0 0.0
        %2362 = vmatpush1.msra.mxu0 0.0
        %2363 = vmatprep.subr.mxu0 0.0
        %2364 = vmatpush1.msra.mxu0 0.0
        %2365 = vmatprep.subr.mxu0 0.0
        %2366 = vmatpush1.msra.mxu0 0.0
        %2367 = vmatprep.subr.mxu0 0.0
        %2368 = vmatpush1.msra.mxu0 0.0
        %2369 = vmatprep.subr.mxu0 0.0
        %2370 = vmatpush1.msra.mxu0 0.0
        %2371 = vmatprep.subr.mxu0 0.0
        %2372 = vmatpush1.msra.mxu0 0.0
        %2373 = vmatprep.subr.mxu0 0.0
        %2374 = vmatpush1.msra.mxu0 0.0
        %2375 = vmatprep.subr.mxu0 0.0
        %2376 = vmatpush1.msra.mxu0 0.0
        %2377 = vmatprep.subr.mxu0 0.0
        %2378 = vmatpush1.msra.mxu0 0.0
        %2379 = vmatprep.subr.mxu0 0.0
        %2380 = vmatpush1.msra.mxu0 0.0
        %2381 = vmatprep.subr.mxu0 0.0
        %2382 = vmatpush1.msra.mxu0 0.0
        %2383 = vmatprep.subr.mxu0 0.0
        %2384 = vmatpush1.msra.mxu0 0.0
        %2385 = vmatprep.subr.mxu0 0.0
        %2386 = vmatpush1.msra.mxu0 0.0
        %2387 = vmatprep.subr.mxu0 0.0
        %2388 = vmatpush1.msra.mxu0 0.0
        %2389 = vmatprep.subr.mxu0 0.0
        %2390 = vmatpush1.msra.mxu0 0.0
        %2391 = vmatprep.subr.mxu0 0.0
        %2392 = vmatpush1.msra.mxu0 0.0
        %2393 = vmatprep.subr.mxu0 0.0
        %2394 = vmatpush1.msra.mxu0 0.0
        %2395 = vmatprep.subr.mxu0 0.0
        %2396 = vmatpush1.msra.mxu0 0.0
        %2397 = vmatprep.subr.mxu0 0.0
        %2398 = vmatpush1.msra.mxu0 0.0
        %2399 = vmatprep.subr.mxu0 0.0
        %2400 = vmatpush1.msra.mxu0 0.0
        %2401 = vmatprep.subr.mxu0 0.0
        %2402 = vmatpush1.msra.mxu0 0.0
        %2403 = vmatprep.subr.mxu0 0.0
        %2404 = vmatpush1.msra.mxu0 0.0
        %2405 = vmatprep.subr.mxu0 0.0
        %2406 = vmatpush1.msra.mxu0 0.0
        %2407 = vmatprep.subr.mxu0 0.0
        %2408 = vmatpush1.msra.mxu0 0.0
        %2409 = vmatprep.subr.mxu0 0.0
        %2410 = vmatpush1.msra.mxu0 0.0
        %2411 = vmatprep.subr.mxu0 0.0
        %2412 = vmatpush1.msra.mxu0 0.0
        %2413 = vmatprep.subr.mxu0 0.0
        %2414 = vmatpush1.msra.mxu0 0.0
        %2415 = vmatprep.subr.mxu0 0.0
        %2416 = vmatpush1.msra.mxu0 0.0
        %2417 = vmatprep.mubr.f32.mxu0 0.0
        %2418 = vmatmul.mubr.f32.gmra.mrb[0].mxu0 %v2342
        %v2419 = vpop.f32.mrb[0].mxu0
        %v2420 = vadd.f32 %v2339, %v2419
        %v2421 = vpop.f32.mrb[0].mxu0
        %2422 = vmatprep.mubr.f32.mxu0 0.0
        %2423 = vmatmul.mubr.f32.gmra.mrb[0].mxu0 %v2345
        %v2424 = vpop.f32.mrb[0].mxu0
        %v2425 = vadd.f32 %v2339, %v2424
        %v2426 = vpop.f32.mrb[0].mxu0
        %2427 = vmatprep.mubr.f32.mxu0 0.0
        %2428 = vmatmul.mubr.f32.gmra.mrb[0].mxu0 %v2348
        %v2429 = vpop.f32.mrb[0].mxu0
        %v2430 = vadd.f32 %v2339, %v2429
        %v2431 = vpop.f32.mrb[0].mxu0
        %2432 = vmatprep.mubr.f32.mxu0 0.0
        %2433 = vmatmul.mubr.f32.gmra.mrb[0].mxu0 %v2351
        %v2434 = vpop.f32.mrb[0].mxu0
        %v2435 = vadd.f32 %v2339, %v2434
        %v2436 = vpop.f32.mrb[0].mxu0
        %2437 = vdwg.mxu0
        %s2438 = sld [smem:[#allocation2 + $0x5]]
        %v2439 = vmax.f32 %v2420, 0.0
        %v2440 = vmax.f32 %v2425, 0.0
        %v2441 = vmax.f32 %v2430, 0.0
        %v2442 = vmax.f32 %v2435, 0.0
        %v2443 = vmin.f32 %v2420, 0.0
        %v2444 = vmin.f32 %v2425, 0.0
        %v2445 = vmin.f32 %v2430, 0.0
        %v2446 = vmin.f32 %v2435, 0.0
        %v2447 = vstv %s2438
        %v2448 = vmul.f32 %v2447, %v2443
        %v2449 = vmul.f32 %v2447, %v2444
        %v2450 = vmul.f32 %v2447, %v2445
        %v2451 = vmul.f32 %v2447, %v2446
        %v2452 = vadd.f32 %v2439, %v2448
        %v2453 = vadd.f32 %v2440, %v2449
        %v2454 = vadd.f32 %v2441, %v2450
        %v2455 = vadd.f32 %v2442, %v2451
        %v2456 = vld [vmem:[#allocation13] sm:$0xff]
        %v2457 = vld [vmem:[#allocation13 + $0x8] sm:$0xff]
        %v2458 = vld [vmem:[#allocation13 + $0x10] sm:$0xff]
        %v2459 = vld [vmem:[#allocation13 + $0x18] sm:$0xff]
        %v2460 = vld [vmem:[%s35] sm:$0x1]
        %v2462 = vlaneseq
        %v2463 = vshrl.u32 %v2462, 7
        %v2464 = vsub.s32 0, %v2463
        %v2465 = vrot.slane %v2460, %v2464
        %v2468 = vsel %vm1455, %v2452, 0
        %v2471 = vsel %vm1455, %v2453, 0
        %v2474 = vsel %vm1455, %v2454, 0
        %v2477 = vsel %vm1455, %v2455, 0
        %2479 = vmatprep.subr.mxu0 0.0
        %2480 = vmatpush1.msra.mxu0 %v2456
        %2481 = vmatprep.subr.mxu0 0.0
        %2482 = vmatpush1.msra.mxu0 %v2457
        %2483 = vmatprep.subr.mxu0 0.0
        %2484 = vmatpush1.msra.mxu0 %v2458
        %2485 = vmatprep.subr.mxu0 0.0
        %2486 = vmatpush1.msra.mxu0 %v2459
        %2487 = vmatprep.subr.mxu0 0.0
        %2488 = vmatpush1.msra.mxu0 0.0
        %2489 = vmatprep.subr.mxu0 0.0
        %2490 = vmatpush1.msra.mxu0 0.0
        %2491 = vmatprep.subr.mxu0 0.0
        %2492 = vmatpush1.msra.mxu0 0.0
        %2493 = vmatprep.subr.mxu0 0.0
        %2494 = vmatpush1.msra.mxu0 0.0
        %2495 = vmatprep.subr.mxu0 0.0
        %2496 = vmatpush1.msra.mxu0 0.0
        %2497 = vmatprep.subr.mxu0 0.0
        %2498 = vmatpush1.msra.mxu0 0.0
        %2499 = vmatprep.subr.mxu0 0.0
        %2500 = vmatpush1.msra.mxu0 0.0
        %2501 = vmatprep.subr.mxu0 0.0
        %2502 = vmatpush1.msra.mxu0 0.0
        %2503 = vmatprep.subr.mxu0 0.0
        %2504 = vmatpush1.msra.mxu0 0.0
        %2505 = vmatprep.subr.mxu0 0.0
        %2506 = vmatpush1.msra.mxu0 0.0
        %2507 = vmatprep.subr.mxu0 0.0
        %2508 = vmatpush1.msra.mxu0 0.0
        %2509 = vmatprep.subr.mxu0 0.0
        %2510 = vmatpush1.msra.mxu0 0.0
        %2511 = vmatprep.subr.mxu0 0.0
        %2512 = vmatpush1.msra.mxu0 0.0
        %2513 = vmatprep.subr.mxu0 0.0
        %2514 = vmatpush1.msra.mxu0 0.0
        %2515 = vmatprep.subr.mxu0 0.0
        %2516 = vmatpush1.msra.mxu0 0.0
        %2517 = vmatprep.subr.mxu0 0.0
        %2518 = vmatpush1.msra.mxu0 0.0
        %2519 = vmatprep.subr.mxu0 0.0
        %2520 = vmatpush1.msra.mxu0 0.0
        %2521 = vmatprep.subr.mxu0 0.0
        %2522 = vmatpush1.msra.mxu0 0.0
        %2523 = vmatprep.subr.mxu0 0.0
        %2524 = vmatpush1.msra.mxu0 0.0
        %2525 = vmatprep.subr.mxu0 0.0
        %2526 = vmatpush1.msra.mxu0 0.0
        %2527 = vmatprep.subr.mxu0 0.0
        %2528 = vmatpush1.msra.mxu0 0.0
        %2529 = vmatprep.subr.mxu0 0.0
        %2530 = vmatpush1.msra.mxu0 0.0
        %2531 = vmatprep.subr.mxu0 0.0
        %2532 = vmatpush1.msra.mxu0 0.0
        %2533 = vmatprep.subr.mxu0 0.0
        %2534 = vmatpush1.msra.mxu0 0.0
        %2535 = vmatprep.subr.mxu0 0.0
        %2536 = vmatpush1.msra.mxu0 0.0
        %2537 = vmatprep.subr.mxu0 0.0
        %2538 = vmatpush1.msra.mxu0 0.0
        %2539 = vmatprep.subr.mxu0 0.0
        %2540 = vmatpush1.msra.mxu0 0.0
        %2541 = vmatprep.subr.mxu0 0.0
        %2542 = vmatpush1.msra.mxu0 0.0
        %2543 = vmatprep.mubr.f32.mxu0 0.0
        %2544 = vmatmul.mubr.f32.gmra.mrb[0].mxu0 %v2468
        %v2545 = vpop.f32.mrb[0].mxu0
        %v2546 = vadd.f32 %v2465, %v2545
        %v2547 = vpop.f32.mrb[0].mxu0
        %2548 = vmatprep.mubr.f32.mxu0 0.0
        %2549 = vmatmul.mubr.f32.gmra.mrb[0].mxu0 %v2471
        %v2550 = vpop.f32.mrb[0].mxu0
        %v2551 = vadd.f32 %v2465, %v2550
        %v2552 = vpop.f32.mrb[0].mxu0
        %2553 = vmatprep.mubr.f32.mxu0 0.0
        %2554 = vmatmul.mubr.f32.gmra.mrb[0].mxu0 %v2474
        %v2555 = vpop.f32.mrb[0].mxu0
        %v2556 = vadd.f32 %v2465, %v2555
        %v2557 = vpop.f32.mrb[0].mxu0
        %2558 = vmatprep.mubr.f32.mxu0 0.0
        %2559 = vmatmul.mubr.f32.gmra.mrb[0].mxu0 %v2477
        %v2560 = vpop.f32.mrb[0].mxu0
        %v2561 = vadd.f32 %v2465, %v2560
        %v2562 = vpop.f32.mrb[0].mxu0
        %2563 = vdwg.mxu0
        %s2564 = sld [smem:[#allocation2 + $0x6]]
        %v2565 = vmax.f32 %v2546, 0.0
        %v2566 = vmax.f32 %v2551, 0.0
        %v2567 = vmax.f32 %v2556, 0.0
        %v2568 = vmax.f32 %v2561, 0.0
        %v2569 = vmin.f32 %v2546, 0.0
        %v2570 = vmin.f32 %v2551, 0.0
        %v2571 = vmin.f32 %v2556, 0.0
        %v2572 = vmin.f32 %v2561, 0.0
        %v2573 = vstv %s2564
        %v2574 = vmul.f32 %v2573, %v2569
        %v2575 = vmul.f32 %v2573, %v2570
        %v2576 = vmul.f32 %v2573, %v2571
        %v2577 = vmul.f32 %v2573, %v2572
        %v2578 = vadd.f32 %v2565, %v2574
        %v2579 = vadd.f32 %v2566, %v2575
        %v2580 = vadd.f32 %v2567, %v2576
        %v2581 = vadd.f32 %v2568, %v2577
        %v2582 = vld [vmem:[#allocation15] sm:$0xff]
        %v2583 = vld [vmem:[#allocation15 + $0x8] sm:$0xff]
        %v2584 = vld [vmem:[#allocation15 + $0x10] sm:$0xff]
        %v2585 = vld [vmem:[#allocation15 + $0x18] sm:$0xff]
        %2586 = vmatprep.subr.mxu0 0.0
        %2587 = vmatpush1.msra.mxu0 %v2582
        %2588 = vmatprep.subr.mxu0 0.0
        %2589 = vmatpush1.msra.mxu0 %v2583
        %2590 = vmatprep.subr.mxu0 0.0
        %2591 = vmatpush1.msra.mxu0 %v2584
        %2592 = vmatprep.subr.mxu0 0.0
        %2593 = vmatpush1.msra.mxu0 %v2585
        %2594 = vmatprep.subr.mxu0 0.0
        %2595 = vmatpush1.msra.mxu0 0.0
        %2596 = vmatprep.subr.mxu0 0.0
        %2597 = vmatpush1.msra.mxu0 0.0
        %2598 = vmatprep.subr.mxu0 0.0
        %2599 = vmatpush1.msra.mxu0 0.0
        %2600 = vmatprep.subr.mxu0 0.0
        %2601 = vmatpush1.msra.mxu0 0.0
        %2602 = vmatprep.subr.mxu0 0.0
        %2603 = vmatpush1.msra.mxu0 0.0
        %2604 = vmatprep.subr.mxu0 0.0
        %2605 = vmatpush1.msra.mxu0 0.0
        %2606 = vmatprep.subr.mxu0 0.0
        %2607 = vmatpush1.msra.mxu0 0.0
        %2608 = vmatprep.subr.mxu0 0.0
        %2609 = vmatpush1.msra.mxu0 0.0
        %2610 = vmatprep.subr.mxu0 0.0
        %2611 = vmatpush1.msra.mxu0 0.0
        %2612 = vmatprep.subr.mxu0 0.0
        %2613 = vmatpush1.msra.mxu0 0.0
        %2614 = vmatprep.subr.mxu0 0.0
        %2615 = vmatpush1.msra.mxu0 0.0
        %2616 = vmatprep.subr.mxu0 0.0
        %2617 = vmatpush1.msra.mxu0 0.0
        %2618 = vmatprep.subr.mxu0 0.0
        %2619 = vmatpush1.msra.mxu0 0.0
        %2620 = vmatprep.subr.mxu0 0.0
        %2621 = vmatpush1.msra.mxu0 0.0
        %2622 = vmatprep.subr.mxu0 0.0
        %2623 = vmatpush1.msra.mxu0 0.0
        %2624 = vmatprep.subr.mxu0 0.0
        %2625 = vmatpush1.msra.mxu0 0.0
        %2626 = vmatprep.subr.mxu0 0.0
        %2627 = vmatpush1.msra.mxu0 0.0
        %2628 = vmatprep.subr.mxu0 0.0
        %2629 = vmatpush1.msra.mxu0 0.0
        %2630 = vmatprep.subr.mxu0 0.0
        %2631 = vmatpush1.msra.mxu0 0.0
        %2632 = vmatprep.subr.mxu0 0.0
        %2633 = vmatpush1.msra.mxu0 0.0
        %2634 = vmatprep.subr.mxu0 0.0
        %2635 = vmatpush1.msra.mxu0 0.0
        %2636 = vmatprep.subr.mxu0 0.0
        %2637 = vmatpush1.msra.mxu0 0.0
        %2638 = vmatprep.subr.mxu0 0.0
        %2639 = vmatpush1.msra.mxu0 0.0
        %2640 = vmatprep.subr.mxu0 0.0
        %2641 = vmatpush1.msra.mxu0 0.0
        %2642 = vmatprep.subr.mxu0 0.0
        %2643 = vmatpush1.msra.mxu0 0.0
        %2644 = vmatprep.subr.mxu0 0.0
        %2645 = vmatpush1.msra.mxu0 0.0
        %2646 = vmatprep.subr.mxu0 0.0
        %2647 = vmatpush1.msra.mxu0 0.0
        %2648 = vmatprep.subr.mxu0 0.0
        %2649 = vmatpush1.msra.mxu0 0.0
        %2650 = vmatprep.mubr.f32.mxu0 0.0
        %2651 = vmatmul.mubr.f32.gmra.mrb[0].mxu0 %v2216
        %v2652 = vpop.f32.mrb[0].mxu0
        %v2653 = vadd.f32 0.0, %v2652
        %v2654 = vpop.f32.mrb[0].mxu0
        %2655 = vmatprep.mubr.f32.mxu0 0.0
        %2656 = vmatmul.mubr.f32.gmra.mrb[0].mxu0 %v2219
        %v2657 = vpop.f32.mrb[0].mxu0
        %v2658 = vadd.f32 0.0, %v2657
        %v2659 = vpop.f32.mrb[0].mxu0
        %2660 = vmatprep.mubr.f32.mxu0 0.0
        %2661 = vmatmul.mubr.f32.gmra.mrb[0].mxu0 %v2222
        %v2662 = vpop.f32.mrb[0].mxu0
        %v2663 = vadd.f32 0.0, %v2662
        %v2664 = vpop.f32.mrb[0].mxu0
        %2665 = vmatprep.mubr.f32.mxu0 0.0
        %2666 = vmatmul.mubr.f32.gmra.mrb[0].mxu0 %v2225
        %v2667 = vpop.f32.mrb[0].mxu0
        %v2668 = vadd.f32 0.0, %v2667
        %v2669 = vpop.f32.mrb[0].mxu0
        %2670 = vdwg.mxu0
        %v2671 = vadd.f32 %v2578, %v2653
        %v2672 = vadd.f32 %v2579, %v2658
        %v2673 = vadd.f32 %v2580, %v2663
        %v2674 = vadd.f32 %v2581, %v2668
        %v2675 = vld [vmem:[%s39] sm:$0x1]
        %v2677 = vlaneseq
        %v2678 = vshrl.u32 %v2677, 7
        %v2679 = vsub.s32 0, %v2678
        %v2680 = vrot.slane %v2675, %v2679
        %v2682 = vadd.f32 %v2671, %v2680
        %v2683 = vadd.f32 %v2672, %v2680
        %v2684 = vadd.f32 %v2673, %v2680
        %v2685 = vadd.f32 %v2674, %v2680
        %v2687 = vrot.slane %v2203, 7
        %vm2689 = vcmask 1040384
        %v2690 = vsel %vm2689, %v1701, %v2687
        %v2691 = vld [vmem:[#allocation16] sm:$0xff]
        %v2692 = vld [vmem:[#allocation16 + $0x8] sm:$0xff]
        %v2693 = vld [vmem:[#allocation16 + $0x10] sm:$0xff]
        %v2694 = vld [vmem:[#allocation16 + $0x18] sm:$0xff]
        %v2695 = vld [vmem:[#allocation16 + $0x20] sm:$0xff]
        %v2696 = vld [vmem:[#allocation16 + $0x28] sm:$0xff]
        %v2697 = vld [vmem:[#allocation16 + $0x30] sm:$0xff]
        %v2698 = vld [vmem:[#allocation16 + $0x38] sm:$0xff]
        %v2699 = vld [vmem:[%s43] sm:$0x1]
        %v2701 = vlaneseq
        %v2702 = vshrl.u32 %v2701, 7
        %v2703 = vsub.s32 0, %v2702
        %v2704 = vrot.slane %v2699, %v2703
        %vm2706 = vcmask 523264
        %v2708 = vsel %vm2706, %v2690, 0
        %2710 = vmatprep.subr.mxu0 0.0
        %2711 = vmatpush1.msra.mxu0 %v2691
        %2712 = vmatprep.subr.mxu0 0.0
        %2713 = vmatpush1.msra.mxu0 %v2692
        %2714 = vmatprep.subr.mxu0 0.0
        %2715 = vmatpush1.msra.mxu0 %v2693
        %2716 = vmatprep.subr.mxu0 0.0
        %2717 = vmatpush1.msra.mxu0 %v2694
        %2718 = vmatprep.subr.mxu0 0.0
        %2719 = vmatpush1.msra.mxu0 %v2695
        %2720 = vmatprep.subr.mxu0 0.0
        %2721 = vmatpush1.msra.mxu0 %v2696
        %2722 = vmatprep.subr.mxu0 0.0
        %2723 = vmatpush1.msra.mxu0 %v2697
        %2724 = vmatprep.subr.mxu0 0.0
        %2725 = vmatpush1.msra.mxu0 %v2698
        %2726 = vmatprep.subr.mxu0 0.0
        %2727 = vmatpush1.msra.mxu0 0.0
        %2728 = vmatprep.subr.mxu0 0.0
        %2729 = vmatpush1.msra.mxu0 0.0
        %2730 = vmatprep.subr.mxu0 0.0
        %2731 = vmatpush1.msra.mxu0 0.0
        %2732 = vmatprep.subr.mxu0 0.0
        %2733 = vmatpush1.msra.mxu0 0.0
        %2734 = vmatprep.subr.mxu0 0.0
        %2735 = vmatpush1.msra.mxu0 0.0
        %2736 = vmatprep.subr.mxu0 0.0
        %2737 = vmatpush1.msra.mxu0 0.0
        %2738 = vmatprep.subr.mxu0 0.0
        %2739 = vmatpush1.msra.mxu0 0.0
        %2740 = vmatprep.subr.mxu0 0.0
        %2741 = vmatpush1.msra.mxu0 0.0
        %2742 = vmatprep.subr.mxu0 0.0
        %2743 = vmatpush1.msra.mxu0 0.0
        %2744 = vmatprep.subr.mxu0 0.0
        %2745 = vmatpush1.msra.mxu0 0.0
        %2746 = vmatprep.subr.mxu0 0.0
        %2747 = vmatpush1.msra.mxu0 0.0
        %2748 = vmatprep.subr.mxu0 0.0
        %2749 = vmatpush1.msra.mxu0 0.0
        %2750 = vmatprep.subr.mxu0 0.0
        %2751 = vmatpush1.msra.mxu0 0.0
        %2752 = vmatprep.subr.mxu0 0.0
        %2753 = vmatpush1.msra.mxu0 0.0
        %2754 = vmatprep.subr.mxu0 0.0
        %2755 = vmatpush1.msra.mxu0 0.0
        %2756 = vmatprep.subr.mxu0 0.0
        %2757 = vmatpush1.msra.mxu0 0.0
        %2758 = vmatprep.subr.mxu0 0.0
        %2759 = vmatpush1.msra.mxu0 0.0
        %2760 = vmatprep.subr.mxu0 0.0
        %2761 = vmatpush1.msra.mxu0 0.0
        %2762 = vmatprep.subr.mxu0 0.0
        %2763 = vmatpush1.msra.mxu0 0.0
        %2764 = vmatprep.subr.mxu0 0.0
        %2765 = vmatpush1.msra.mxu0 0.0
        %2766 = vmatprep.subr.mxu0 0.0
        %2767 = vmatpush1.msra.mxu0 0.0
        %2768 = vmatprep.subr.mxu0 0.0
        %2769 = vmatpush1.msra.mxu0 0.0
        %2770 = vmatprep.subr.mxu0 0.0
        %2771 = vmatpush1.msra.mxu0 0.0
        %2772 = vmatprep.subr.mxu0 0.0
        %2773 = vmatpush1.msra.mxu0 0.0
        %2774 = vmatprep.mubr.f32.mxu0 0.0
        %2775 = vmatmul.mubr.f32.gmra.mrb[0].mxu0 %v2708
        %v2776 = vpop.f32.mrb[0].mxu0
        %v2777 = vadd.f32 %v2704, %v2776
        %v2778 = vpop.f32.mrb[0].mxu0
        %2779 = vdwg.mxu0
        %s2780 = sld [smem:[#allocation2 + $0x7]]
        %v2781 = vmax.f32 %v2777, 0.0
        %v2782 = vmin.f32 %v2777, 0.0
        %v2783 = vstv %s2780
        %v2784 = vmul.f32 %v2783, %v2782
        %v2785 = vadd.f32 %v2781, %v2784
        %v2786 = vld [vmem:[#allocation18] sm:$0xff]
        %v2787 = vld [vmem:[#allocation18 + $0x8] sm:$0xff]
        %v2788 = vld [vmem:[#allocation18 + $0x10] sm:$0xff]
        %v2789 = vld [vmem:[#allocation18 + $0x18] sm:$0xff]
        %v2790 = vld [vmem:[%s47] sm:$0x1]
        %v2792 = vlaneseq
        %v2793 = vshrl.u32 %v2792, 7
        %v2794 = vsub.s32 0, %v2793
        %v2795 = vrot.slane %v2790, %v2794
        %v2798 = vsel %vm1455, %v2785, 0
        %2800 = vmatprep.subr.mxu0 0.0
        %2801 = vmatpush1.msra.mxu0 %v2786
        %2802 = vmatprep.subr.mxu0 0.0
        %2803 = vmatpush1.msra.mxu0 %v2787
        %2804 = vmatprep.subr.mxu0 0.0
        %2805 = vmatpush1.msra.mxu0 %v2788
        %2806 = vmatprep.subr.mxu0 0.0
        %2807 = vmatpush1.msra.mxu0 %v2789
        %2808 = vmatprep.subr.mxu0 0.0
        %2809 = vmatpush1.msra.mxu0 0.0
        %2810 = vmatprep.subr.mxu0 0.0
        %2811 = vmatpush1.msra.mxu0 0.0
        %2812 = vmatprep.subr.mxu0 0.0
        %2813 = vmatpush1.msra.mxu0 0.0
        %2814 = vmatprep.subr.mxu0 0.0
        %2815 = vmatpush1.msra.mxu0 0.0
        %2816 = vmatprep.subr.mxu0 0.0
        %2817 = vmatpush1.msra.mxu0 0.0
        %2818 = vmatprep.subr.mxu0 0.0
        %2819 = vmatpush1.msra.mxu0 0.0
        %2820 = vmatprep.subr.mxu0 0.0
        %2821 = vmatpush1.msra.mxu0 0.0
        %2822 = vmatprep.subr.mxu0 0.0
        %2823 = vmatpush1.msra.mxu0 0.0
        %2824 = vmatprep.subr.mxu0 0.0
        %2825 = vmatpush1.msra.mxu0 0.0
        %2826 = vmatprep.subr.mxu0 0.0
        %2827 = vmatpush1.msra.mxu0 0.0
        %2828 = vmatprep.subr.mxu0 0.0
        %2829 = vmatpush1.msra.mxu0 0.0
        %2830 = vmatprep.subr.mxu0 0.0
        %2831 = vmatpush1.msra.mxu0 0.0
        %2832 = vmatprep.subr.mxu0 0.0
        %2833 = vmatpush1.msra.mxu0 0.0
        %2834 = vmatprep.subr.mxu0 0.0
        %2835 = vmatpush1.msra.mxu0 0.0
        %2836 = vmatprep.subr.mxu0 0.0
        %2837 = vmatpush1.msra.mxu0 0.0
        %2838 = vmatprep.subr.mxu0 0.0
        %2839 = vmatpush1.msra.mxu0 0.0
        %2840 = vmatprep.subr.mxu0 0.0
        %2841 = vmatpush1.msra.mxu0 0.0
        %2842 = vmatprep.subr.mxu0 0.0
        %2843 = vmatpush1.msra.mxu0 0.0
        %2844 = vmatprep.subr.mxu0 0.0
        %2845 = vmatpush1.msra.mxu0 0.0
        %2846 = vmatprep.subr.mxu0 0.0
        %2847 = vmatpush1.msra.mxu0 0.0
        %2848 = vmatprep.subr.mxu0 0.0
        %2849 = vmatpush1.msra.mxu0 0.0
        %2850 = vmatprep.subr.mxu0 0.0
        %2851 = vmatpush1.msra.mxu0 0.0
        %2852 = vmatprep.subr.mxu0 0.0
        %2853 = vmatpush1.msra.mxu0 0.0
        %2854 = vmatprep.subr.mxu0 0.0
        %2855 = vmatpush1.msra.mxu0 0.0
        %2856 = vmatprep.subr.mxu0 0.0
        %2857 = vmatpush1.msra.mxu0 0.0
        %2858 = vmatprep.subr.mxu0 0.0
        %2859 = vmatpush1.msra.mxu0 0.0
        %2860 = vmatprep.subr.mxu0 0.0
        %2861 = vmatpush1.msra.mxu0 0.0
        %2862 = vmatprep.subr.mxu0 0.0
        %2863 = vmatpush1.msra.mxu0 0.0
        %2864 = vmatprep.mubr.f32.mxu0 0.0
        %2865 = vmatmul.mubr.f32.gmra.mrb[0].mxu0 %v2798
        %v2866 = vpop.f32.mrb[0].mxu0
        %v2867 = vadd.f32 %v2795, %v2866
        %v2868 = vpop.f32.mrb[0].mxu0
        %2869 = vdwg.mxu0
        %s2870 = sld [smem:[#allocation2 + $0x8]]
        %v2871 = vmax.f32 %v2867, 0.0
        %v2872 = vmin.f32 %v2867, 0.0
        %v2873 = vstv %s2870
        %v2874 = vmul.f32 %v2873, %v2872
        %v2875 = vadd.f32 %v2871, %v2874
        %v2876 = vld [vmem:[#allocation19] sm:$0xff]
        %v2877 = vld [vmem:[#allocation19 + $0x8] sm:$0xff]
        %v2878 = vld [vmem:[#allocation19 + $0x10] sm:$0xff]
        %v2879 = vld [vmem:[#allocation19 + $0x18] sm:$0xff]
        %v2880 = vld [vmem:[%s51] sm:$0x1]
        %v2882 = vlaneseq
        %v2883 = vshrl.u32 %v2882, 7
        %v2884 = vsub.s32 0, %v2883
        %v2885 = vrot.slane %v2880, %v2884
        %v2888 = vsel %vm1455, %v2875, 0
        %2890 = vmatprep.subr.mxu0 0.0
        %2891 = vmatpush1.msra.mxu0 %v2876
        %2892 = vmatprep.subr.mxu0 0.0
        %2893 = vmatpush1.msra.mxu0 %v2877
        %2894 = vmatprep.subr.mxu0 0.0
        %2895 = vmatpush1.msra.mxu0 %v2878
        %2896 = vmatprep.subr.mxu0 0.0
        %2897 = vmatpush1.msra.mxu0 %v2879
        %2898 = vmatprep.subr.mxu0 0.0
        %2899 = vmatpush1.msra.mxu0 0.0
        %2900 = vmatprep.subr.mxu0 0.0
        %2901 = vmatpush1.msra.mxu0 0.0
        %2902 = vmatprep.subr.mxu0 0.0
        %2903 = vmatpush1.msra.mxu0 0.0
        %2904 = vmatprep.subr.mxu0 0.0
        %2905 = vmatpush1.msra.mxu0 0.0
        %2906 = vmatprep.subr.mxu0 0.0
        %2907 = vmatpush1.msra.mxu0 0.0
        %2908 = vmatprep.subr.mxu0 0.0
        %2909 = vmatpush1.msra.mxu0 0.0
        %2910 = vmatprep.subr.mxu0 0.0
        %2911 = vmatpush1.msra.mxu0 0.0
        %2912 = vmatprep.subr.mxu0 0.0
        %2913 = vmatpush1.msra.mxu0 0.0
        %2914 = vmatprep.subr.mxu0 0.0
        %2915 = vmatpush1.msra.mxu0 0.0
        %2916 = vmatprep.subr.mxu0 0.0
        %2917 = vmatpush1.msra.mxu0 0.0
        %2918 = vmatprep.subr.mxu0 0.0
        %2919 = vmatpush1.msra.mxu0 0.0
        %2920 = vmatprep.subr.mxu0 0.0
        %2921 = vmatpush1.msra.mxu0 0.0
        %2922 = vmatprep.subr.mxu0 0.0
        %2923 = vmatpush1.msra.mxu0 0.0
        %2924 = vmatprep.subr.mxu0 0.0
        %2925 = vmatpush1.msra.mxu0 0.0
        %2926 = vmatprep.subr.mxu0 0.0
        %2927 = vmatpush1.msra.mxu0 0.0
        %2928 = vmatprep.subr.mxu0 0.0
        %2929 = vmatpush1.msra.mxu0 0.0
        %2930 = vmatprep.subr.mxu0 0.0
        %2931 = vmatpush1.msra.mxu0 0.0
        %2932 = vmatprep.subr.mxu0 0.0
        %2933 = vmatpush1.msra.mxu0 0.0
        %2934 = vmatprep.subr.mxu0 0.0
        %2935 = vmatpush1.msra.mxu0 0.0
        %2936 = vmatprep.subr.mxu0 0.0
        %2937 = vmatpush1.msra.mxu0 0.0
        %2938 = vmatprep.subr.mxu0 0.0
        %2939 = vmatpush1.msra.mxu0 0.0
        %2940 = vmatprep.subr.mxu0 0.0
        %2941 = vmatpush1.msra.mxu0 0.0
        %2942 = vmatprep.subr.mxu0 0.0
        %2943 = vmatpush1.msra.mxu0 0.0
        %2944 = vmatprep.subr.mxu0 0.0
        %2945 = vmatpush1.msra.mxu0 0.0
        %2946 = vmatprep.subr.mxu0 0.0
        %2947 = vmatpush1.msra.mxu0 0.0
        %2948 = vmatprep.subr.mxu0 0.0
        %2949 = vmatpush1.msra.mxu0 0.0
        %2950 = vmatprep.subr.mxu0 0.0
        %2951 = vmatpush1.msra.mxu0 0.0
        %2952 = vmatprep.subr.mxu0 0.0
        %2953 = vmatpush1.msra.mxu0 0.0
        %2954 = vmatprep.mubr.f32.mxu0 0.0
        %2955 = vmatmul.mubr.f32.gmra.mrb[0].mxu0 %v2888
        %v2956 = vpop.f32.mrb[0].mxu0
        %v2957 = vadd.f32 %v2885, %v2956
        %v2958 = vpop.f32.mrb[0].mxu0
        %2959 = vdwg.mxu0
        %s2960 = sld [smem:[#allocation2 + $0x9]]
        %v2961 = vmax.f32 %v2957, 0.0
        %v2962 = vmin.f32 %v2957, 0.0
        %v2963 = vstv %s2960
        %v2964 = vmul.f32 %v2963, %v2962
        %v2965 = vadd.f32 %v2961, %v2964
        %v2966 = vld [vmem:[%s53] sm:$0xff]
        %v2967 = vld [vmem:[%s53 + $0x8] sm:$0xff]
        %v2968 = vld [vmem:[%s53 + $0x10] sm:$0xff]
        %v2969 = vld [vmem:[%s53 + $0x18] sm:$0xff]
        %v2970 = vld [vmem:[%s53 + $0x20] sm:$0xff]
        %v2971 = vld [vmem:[%s53 + $0x28] sm:$0xff]
        %v2972 = vld [vmem:[%s53 + $0x30] sm:$0xff]
        %v2973 = vld [vmem:[%s53 + $0x38] sm:$0xff]
        %2974 = vmatprep.subr.mxu0 0.0
        %2975 = vmatpush1.msra.mxu0 %v2966
        %2976 = vmatprep.subr.mxu0 0.0
        %2977 = vmatpush1.msra.mxu0 %v2967
        %2978 = vmatprep.subr.mxu0 0.0
        %2979 = vmatpush1.msra.mxu0 %v2968
        %2980 = vmatprep.subr.mxu0 0.0
        %2981 = vmatpush1.msra.mxu0 %v2969
        %2982 = vmatprep.subr.mxu0 0.0
        %2983 = vmatpush1.msra.mxu0 %v2970
        %2984 = vmatprep.subr.mxu0 0.0
        %2985 = vmatpush1.msra.mxu0 %v2971
        %2986 = vmatprep.subr.mxu0 0.0
        %2987 = vmatpush1.msra.mxu0 %v2972
        %2988 = vmatprep.subr.mxu0 0.0
        %2989 = vmatpush1.msra.mxu0 %v2973
        %2990 = vmatprep.subr.mxu0 0.0
        %2991 = vmatpush1.msra.mxu0 0.0
        %2992 = vmatprep.subr.mxu0 0.0
        %2993 = vmatpush1.msra.mxu0 0.0
        %2994 = vmatprep.subr.mxu0 0.0
        %2995 = vmatpush1.msra.mxu0 0.0
        %2996 = vmatprep.subr.mxu0 0.0
        %2997 = vmatpush1.msra.mxu0 0.0
        %2998 = vmatprep.subr.mxu0 0.0
        %2999 = vmatpush1.msra.mxu0 0.0
        %3000 = vmatprep.subr.mxu0 0.0
        %3001 = vmatpush1.msra.mxu0 0.0
        %3002 = vmatprep.subr.mxu0 0.0
        %3003 = vmatpush1.msra.mxu0 0.0
        %3004 = vmatprep.subr.mxu0 0.0
        %3005 = vmatpush1.msra.mxu0 0.0
        %3006 = vmatprep.subr.mxu0 0.0
        %3007 = vmatpush1.msra.mxu0 0.0
        %3008 = vmatprep.subr.mxu0 0.0
        %3009 = vmatpush1.msra.mxu0 0.0
        %3010 = vmatprep.subr.mxu0 0.0
        %3011 = vmatpush1.msra.mxu0 0.0
        %3012 = vmatprep.subr.mxu0 0.0
        %3013 = vmatpush1.msra.mxu0 0.0
        %3014 = vmatprep.subr.mxu0 0.0
        %3015 = vmatpush1.msra.mxu0 0.0
        %3016 = vmatprep.subr.mxu0 0.0
        %3017 = vmatpush1.msra.mxu0 0.0
        %3018 = vmatprep.subr.mxu0 0.0
        %3019 = vmatpush1.msra.mxu0 0.0
        %3020 = vmatprep.subr.mxu0 0.0
        %3021 = vmatpush1.msra.mxu0 0.0
        %3022 = vmatprep.subr.mxu0 0.0
        %3023 = vmatpush1.msra.mxu0 0.0
        %3024 = vmatprep.subr.mxu0 0.0
        %3025 = vmatpush1.msra.mxu0 0.0
        %3026 = vmatprep.subr.mxu0 0.0
        %3027 = vmatpush1.msra.mxu0 0.0
        %3028 = vmatprep.subr.mxu0 0.0
        %3029 = vmatpush1.msra.mxu0 0.0
        %3030 = vmatprep.subr.mxu0 0.0
        %3031 = vmatpush1.msra.mxu0 0.0
        %3032 = vmatprep.subr.mxu0 0.0
        %3033 = vmatpush1.msra.mxu0 0.0
        %3034 = vmatprep.subr.mxu0 0.0
        %3035 = vmatpush1.msra.mxu0 0.0
        %3036 = vmatprep.subr.mxu0 0.0
        %3037 = vmatpush1.msra.mxu0 0.0
        %3038 = vmatprep.mubr.f32.mxu0 0.0
        %3039 = vmatmul.mubr.f32.gmra.mrb[0].mxu0 %v2708
        %v3040 = vpop.f32.mrb[0].mxu0
        %v3041 = vadd.f32 0.0, %v3040
        %v3042 = vpop.f32.mrb[0].mxu0
        %3043 = vdwg.mxu0
        %v3044 = vadd.f32 %v2965, %v3041
        %v3045 = vld [vmem:[%s55] sm:$0x1]
        %v3047 = vlaneseq
        %v3048 = vshrl.u32 %v3047, 7
        %v3049 = vsub.s32 0, %v3048
        %v3050 = vrot.slane %v3045, %v3049
        %v3052 = vadd.f32 %v3044, %v3050
        %3053 = vst.msk [vmem:[%s1158] sm:$0xff] %vm1455, %v2682
        %3054 = vst.msk [vmem:[%s1158 + $0x8] sm:$0xff] %vm1455, %v2683
        %3055 = vst.msk [vmem:[%s1171] sm:$0xff] %vm1455, %v2684
        %3056 = vst.msk [vmem:[%s1171 + $0x8] sm:$0xff] %vm1455, %v2685
        %vm3057 = vcmask 253952
        %3058 = vst.msk [vmem:[%s1164] sm:$0x1] %vm3057, %v3052
        %vm3059 = vcmask 254977
        %3060 = vst.msk [vmem:[%s1177 - $0x1] sm:$0x2] %vm3059, %v3052
        %s3061 = sand.u32 %s704, 1
        %s3062 = scalar_lea.sflag [#allocation4], %s3061
        %s3063 = sand.u32 %s704, 1
        %s3064 = smul.addr %s3063, 16
        %s3065 = scalar_lea.vmem [#allocation21], %s3064
        %s3066 = sand.u32 %s93, 1
        %s3067 = scalar_lea.sflag [#allocation23], %s3066
        %s3068 = sand.u32 %s730, 1
        %s3069 = scalar_lea.vmem [#allocation22], %s3068
        %s3070 = sand.u32 %s93, 1
        %s3071 = scalar_lea.sflag [#allocation23], %s3070
        %s3072 = sand.u32 %s756, 1
        %s3073 = smul.addr %s3072, 16
        %s3074 = scalar_lea.vmem [#allocation24], %s3073
        %s3075 = sand.u32 %s782, 1
        %s3076 = scalar_lea.sflag [#allocation26], %s3075
        %s3077 = sand.u32 %s782, 1
        %s3078 = scalar_lea.vmem [#allocation25], %s3077
        // Predicated region
        $region177: #{model_forward.1} parent=131 // pred_check
          %p3079 = pneg %p714
        $region178: #{model_forward.1} parent=131 // pred_check_branch
          %3081 = sbr.rel (%p3079) target = $region180
        $region179: #{model_forward.1} parent=131 // pred_region
          %s3083 = ssub.s32 256, 256
          %3084 = vsyncadd %s3062, %s3083
          %s3085 = smul.addr %s93, 2
          %s3086 = smul.addr %s3085, 128
          %s3087 = scalar_lea.hbm %s57, %s3086
          %s3088 = sshll.u32 %s3065, 4
          %s3089 = int_to_ptr.vmem [resolvable:$true] %s3088
          %3094 = dma.vmem_to_hbm [thread:$0]  %s3089, 256, %s3087, %s3062, 128, 128, 8
        $region180: #{model_forward.1} parent=131 // pred_fallthru
          _
        // Predicated region
        $region181: #{model_forward.1} parent=131 // pred_check
          %p3095 = pneg %p740
        $region182: #{model_forward.1} parent=131 // pred_check_branch
          %3097 = sbr.rel (%p3095) target = $region184
        $region183: #{model_forward.1} parent=131 // pred_region
          %s3099 = ssub.s32 16, 16
          %3100 = vsyncadd %s3067, %s3099
          %s3101 = smul.addr %s93, 16
          %s3102 = scalar_lea.hbm %s59, %s3101
          %s3104 = sshll.u32 %s3069, 4
          %s3105 = int_to_ptr.vmem [resolvable:$true] %s3104
          %3107 = dma.vmem_to_hbm [thread:$0]  %s3105, 16, %s3102, %s3067
        $region184: #{model_forward.1} parent=131 // pred_fallthru
          _
        // Predicated region
        $region185: #{model_forward.1} parent=131 // pred_check
          %p3108 = pneg %p766
        $region186: #{model_forward.1} parent=131 // pred_check_branch
          %3110 = sbr.rel (%p3108) target = $region188
        $region187: #{model_forward.1} parent=131 // pred_region
          %s3112 = ssub.s32 256, 256
          %3113 = vsyncadd %s3071, %s3112
          %s3114 = smul.addr %s93, 2
          %s3115 = smul.addr %s3114, 128
          %s3116 = scalar_lea.hbm %s61, %s3115
          %s3117 = sshll.u32 %s3074, 4
          %s3118 = int_to_ptr.vmem [resolvable:$true] %s3117
          %3123 = dma.vmem_to_hbm [thread:$0]  %s3118, 256, %s3116, %s3071, 128, 128, 8
        $region188: #{model_forward.1} parent=131 // pred_fallthru
          _
        // Predicated region
        $region189: #{model_forward.1} parent=131 // pred_check
          %p3124 = pneg %p792
        $region190: #{model_forward.1} parent=131 // pred_check_branch
          %3126 = sbr.rel (%p3124) target = $region192
        $region191: #{model_forward.1} parent=131 // pred_region
          %s3128 = ssub.s32 16, 16
          %3129 = vsyncadd %s3076, %s3128
          %s3130 = smul.addr %s93, 16
          %s3131 = scalar_lea.hbm %s63, %s3130
          %s3133 = sshll.u32 %s3078, 4
          %s3134 = int_to_ptr.vmem [resolvable:$true] %s3133
          %3136 = dma.vmem_to_hbm [thread:$0]  %s3134, 16, %s3131, %s3076
        $region192: #{model_forward.1} parent=131 // pred_fallthru
          _
      $region132: #{model_forward.1} parent=5 // pred_fallthru
        _
      %p3137 = scmp.le.s32.totalorder 2, %s88
      // Predicated region
      $region193: #{model_forward.1} parent=5 // pred_check
        %p3138 = pneg %p3137
      $region194: #{model_forward.1} parent=5 // pred_check_branch
        %3140 = sbr.rel (%p3138) target = $region196
      $region195: #{model_forward.1} parent=5 // pred_region
        %s3141 = ssub.s32 %s88, 2
        // Predicated region
        $region197: #{model_forward.1} parent=195 // pred_check
          %p3142 = pneg %p720
        $region198: #{model_forward.1} parent=195 // pred_check_branch
          %3144 = sbr.rel (%p3142) target = $region200
        $region199: #{model_forward.1} parent=195 // pred_region
          %s3145 = sand.u32 %s705, 1
          %s3146 = scalar_lea.sflag [#allocation4], %s3145
          %s3147 = sand.u32 %s705, 1
          %s3148 = smul.addr %s3147, 16
          %s3149 = scalar_lea.vmem [#allocation21], %s3148
          %3150 = dma.done %s3146, 256
        $region200: #{model_forward.1} parent=195 // pred_fallthru
          _
        // Predicated region
        $region201: #{model_forward.1} parent=195 // pred_check
          %p3151 = pneg %p746
        $region202: #{model_forward.1} parent=195 // pred_check_branch
          %3153 = sbr.rel (%p3151) target = $region204
        $region203: #{model_forward.1} parent=195 // pred_region
          %s3154 = sand.u32 %s94, 1
          %s3155 = scalar_lea.sflag [#allocation23], %s3154
          %s3156 = sand.u32 %s731, 1
          %s3157 = scalar_lea.vmem [#allocation22], %s3156
          %3158 = dma.done %s3155, 16
        $region204: #{model_forward.1} parent=195 // pred_fallthru
          _
        // Predicated region
        $region205: #{model_forward.1} parent=195 // pred_check
          %p3159 = pneg %p772
        $region206: #{model_forward.1} parent=195 // pred_check_branch
          %3161 = sbr.rel (%p3159) target = $region208
        $region207: #{model_forward.1} parent=195 // pred_region
          %s3162 = sand.u32 %s94, 1
          %s3163 = scalar_lea.sflag [#allocation23], %s3162
          %s3164 = sand.u32 %s757, 1
          %s3165 = smul.addr %s3164, 16
          %s3166 = scalar_lea.vmem [#allocation24], %s3165
          %3167 = dma.done %s3163, 256
        $region208: #{model_forward.1} parent=195 // pred_fallthru
          _
        // Predicated region
        $region209: #{model_forward.1} parent=195 // pred_check
          %p3168 = pneg %p798
        $region210: #{model_forward.1} parent=195 // pred_check_branch
          %3170 = sbr.rel (%p3168) target = $region212
        $region211: #{model_forward.1} parent=195 // pred_region
          %s3171 = sand.u32 %s783, 1
          %s3172 = scalar_lea.sflag [#allocation26], %s3171
          %s3173 = sand.u32 %s783, 1
          %s3174 = scalar_lea.vmem [#allocation25], %s3173
          %3175 = dma.done %s3172, 16
        $region212: #{model_forward.1} parent=195 // pred_fallthru
          _
      $region196: #{model_forward.1} parent=5 // pred_fallthru
        _
    $region6: #{model_forward.1} parent=1 // loop_footer
      %s92 = sadd.s32 1, %s88
    $region7: #{model_forward.1} parent=1 // loop_footer_branch
      %87 = sbr.rel target = $region3
    $region8: #{model_forward.1} parent=1 // loop_exit
      _
    %3176 = vsyncpa [#allocation3], 1
    %s3177 = scalar_lea.sflag [#allocation3], 1
    %3178 = vsyncpa %s3177, 1
    %3179 = vsyncpa [#allocation8], 1
    %3180 = vsyncpa [#allocation11], 1
    %3181 = vsyncpa [#allocation14], 1
    %3182 = vsyncpa [#allocation17], 1
    %3183 = vsyncpa [#allocation20], 1
    %3184 = vsyncpa [#allocation4], 1
    %s3185 = scalar_lea.sflag [#allocation4], 1
    %3186 = vsyncpa %s3185, 1
    %3187 = vsyncpa [#allocation23], 1
    %s3188 = scalar_lea.sflag [#allocation23], 1
    %3189 = vsyncpa %s3188, 1
    %3190 = vsyncpa [#allocation26], 1
    %s3191 = scalar_lea.sflag [#allocation26], 1
    %3192 = vsyncpa %s3191, 1
    %3193 = vsyncpa [#allocation5], 1
    %s3194 = scalar_lea.sflag [#allocation5], 1
    %3195 = vsyncpa %s3194, 1

</llo_original>
